<compile_context>
chip_gen: v7x
topology: tpu7x:2x2x1
jax: 0.10.0
libtpu: 0.0.40
codegen_flags: <defaults>
</compile_context>

<pallas_src>
import functools

import jax
import jax.numpy as jnp
from jax.experimental import pallas as pl
from jax.experimental.pallas import tpu as pltpu

EPS = 1e-5        # PyTorch LayerNorm default eps
OUT_PAD = 128     # lane-dense padded head output width


def _layernorm(x, gamma, beta):
    mu = jnp.mean(x, axis=-1, keepdims=True)
    var = jnp.mean((x - mu) ** 2, axis=-1, keepdims=True)
    return (x - mu) * jax.lax.rsqrt(var + EPS) * gamma + beta


# ----------------------------------------------------------------------------
# Fused kernel: all encoder layers + head, one batch block per grid step.
#
# Flat weight layouts (host-prepared, x @ W orientation, bf16):
#   wqkv_ref : (L*3*H, E, dh)   index (l*3 + j)*H + h,  j in {q,k,v}; Q pre-scaled
#   bqkv_ref : (L*3*H, 1, dh)   f32 biases (Q bias pre-scaled)
#   wo_ref   : (L*H,  dh, E)
#   wff1/wff2: (L, E, E)
#   lnv_ref  : (L, 8, E) f32 rows [b_out, g1, bt1, b_ff1, b_ff2, g2, bt2, pad]
#   hv_ref   : (8, E)    f32 rows [b_h1, g_h, bt_h, pad...]
# ----------------------------------------------------------------------------
def fused_transformer_kernel(x_ref, wqkv_ref, bqkv_ref, wo_ref, wff1_ref,
                             wff2_ref, lnv_ref, wh1_ref, hv_ref, wh2_ref,
                             bh2_ref, o_ref, *, num_heads, num_layers):
    BB, S, E = x_ref.shape
    H = num_heads
    dh = E // H

    # Flatten tokens: token-wise matmuls run on one (BB*S, E) slab.
    xt = x_ref[...].reshape(BB * S, E)                       # f32

    for l in range(num_layers):                              # static unroll (small L)
        ln_l = lnv_ref[l]                                    # (8, E) f32
        xt_b = xt.astype(jnp.bfloat16)

        # --- multi-head self attention (post-norm, eval-mode dropout) ---
        base = l * 3 * H
        attn = jnp.zeros((BB * S, E), jnp.float32)
        for h in range(H):                                   # static unroll (small H)
            q = jnp.dot(xt_b, wqkv_ref[base + h],
                        preferred_element_type=jnp.float32) + bqkv_ref[base + h]
            k = jnp.dot(xt_b, wqkv_ref[base + H + h],
                        preferred_element_type=jnp.float32) + bqkv_ref[base + H + h]
            v = jnp.dot(xt_b, wqkv_ref[base + 2 * H + h],
                        preferred_element_type=jnp.float32) + bqkv_ref[base + 2 * H + h]
            q = q.reshape(BB, S, dh)
            k = k.reshape(BB, S, dh)
            v = v.reshape(BB, S, dh)

            # scale already folded into Q weights/bias on the host
            s = jnp.einsum('bsd,btd->bst', q.astype(jnp.bfloat16),
                           k.astype(jnp.bfloat16),
                           preferred_element_type=jnp.float32)       # (BB, S, S) f32
            s = s - jnp.max(s, axis=-1, keepdims=True)
            p = jnp.exp(s)
            denom = jnp.sum(p, axis=-1, keepdims=True)
            inv = pl.reciprocal(denom, approx=True)          # EUP slot
            inv = inv * (2.0 - denom * inv)                  # Newton step -> ~f32 exact
            p = p * inv

            ctx = jnp.einsum('bst,btd->bsd', p.astype(jnp.bfloat16),
                             v.astype(jnp.bfloat16),
                             preferred_element_type=jnp.float32)     # (BB, S, dh)
            attn = attn + jnp.dot(
                ctx.reshape(BB * S, dh).astype(jnp.bfloat16),
                wo_ref[l * H + h],
                preferred_element_type=jnp.float32)                  # (BB*S, E)

        attn = attn + ln_l[0]
        x1 = _layernorm(xt + attn, ln_l[1], ln_l[2])

        # --- feed-forward (dim_feedforward == embed_dim, relu) ---
        hmid = jnp.dot(x1.astype(jnp.bfloat16), wff1_ref[l],
                       preferred_element_type=jnp.float32) + ln_l[3]
        hmid = jnp.maximum(hmid, 0.0)
        ff = jnp.dot(hmid.astype(jnp.bfloat16), wff2_ref[l],
                     preferred_element_type=jnp.float32) + ln_l[4]
        xt = _layernorm(x1 + ff, ln_l[5], ln_l[6])

    # --- sum-pool over sequence, then MLP head (Lin, ReLU, LN, Lin) ---
    pooled = xt.reshape(BB, S, E).sum(axis=1)                # (BB, E) f32
    hv = hv_ref[...]
    hh = jnp.dot(pooled.astype(jnp.bfloat16), wh1_ref[...],
                 preferred_element_type=jnp.float32) + hv[0]
    hh = jnp.maximum(hh, 0.0)
    hh = _layernorm(hh, hv[1], hv[2])
    out = jnp.dot(hh.astype(jnp.bfloat16), wh2_ref[...],
                  preferred_element_type=jnp.float32) + bh2_ref[...]  # (BB, OUT_PAD)
    o_ref[...] = out


# ----------------------------------------------------------------------------
# Wrapper: one pallas_call over the batch axis.
# ----------------------------------------------------------------------------
def transformer_forward(x, params, num_heads, num_out, batch_block=None):
    (wqkv, bqkv, wo, wff1, wff2, lnv, wh1, hv, wh2, bh2) = params
    B, S, E = x.shape
    L, _, H, _, dh = wqkv.shape
    assert H == num_heads and E == H * dh

    if batch_block is None:
        batch_block = B                       # whole batch per step (toy case)
    assert B % batch_block == 0
    grid = (B // batch_block,)

    # Flatten leading axes so the kernel only ever indexes one leading axis.
    flat_params = (wqkv.reshape(L * 3 * H, E, dh),
                   bqkv.reshape(L * 3 * H, 1, dh),
                   wo.reshape(L * H, dh, E),
                   wff1, wff2, lnv, wh1, hv, wh2, bh2)

    def const_spec(a):
        return pl.BlockSpec(a.shape, lambda i, _n=a.ndim: (0,) * _n)

    in_specs = [pl.BlockSpec((batch_block, S, E), lambda i: (i, 0, 0))]
    in_specs += [const_spec(a) for a in flat_params]

    kernel = functools.partial(fused_transformer_kernel,
                               num_heads=H, num_layers=L)
    out = pl.pallas_call(
        kernel,
        out_shape=jax.ShapeDtypeStruct((B, OUT_PAD), jnp.float32),
        grid=grid,
        in_specs=in_specs,
        out_specs=pl.BlockSpec((batch_block, OUT_PAD), lambda i: (i, 0)),
        compiler_params=pltpu.CompilerParams(
            dimension_semantics=("parallel",),
            vmem_limit_bytes=32 * 1024 * 1024),
    )(x, *flat_params)
    return out[:, :num_out]


# ----------------------------------------------------------------------------
# Parameters: per-head, pre-transposed (x @ W orientation), Q scale folded in,
# matmul weights in bf16 (f32 accumulation in-kernel), vectors in f32.
# ----------------------------------------------------------------------------
def init_params(key, num_layers, embed_dim, num_heads, num_out):
    E, L, H = embed_dim, num_layers, num_heads
    dh = E // H
    scale = 1.0 / float(dh) ** 0.5
    keys = jax.random.split(key, 8)

    wqkv = 0.05 * jax.random.normal(keys[0], (L, 3, H, E, dh), jnp.float32)
    bqkv = 0.05 * jax.random.normal(keys[1], (L, 3, H, 1, dh), jnp.float32)
    # fold the 1/sqrt(dh) softmax scale into the Q projection on the host
    wqkv = wqkv.at[:, 0].multiply(scale)
    bqkv = bqkv.at[:, 0].multiply(scale)

    wo = 0.05 * jax.random.normal(keys[2], (L, H, dh, E), jnp.float32)
    wff1 = 0.05 * jax.random.normal(keys[3], (L, E, E), jnp.float32)
    wff2 = 0.05 * jax.random.normal(keys[4], (L, E, E), jnp.float32)

    ones = jnp.ones((L, 1, E), jnp.float32)
    zeros = jnp.zeros((L, 1, E), jnp.float32)
    # rows: b_out, g1, bt1, b_ff1, b_ff2, g2, bt2, pad
    lnv = jnp.concatenate(
        [zeros, ones, zeros, zeros, zeros, ones, zeros, zeros], axis=1)

    wh1 = 0.05 * jax.random.normal(keys[5], (E, E), jnp.float32)
    # rows: b_h1, g_h, bt_h, pad...
    hv = jnp.concatenate(
        [jnp.zeros((1, E), jnp.float32), jnp.ones((1, E), jnp.float32),
         jnp.zeros((6, E), jnp.float32)], axis=0)
    wh2 = jnp.zeros((E, OUT_PAD), jnp.float32).at[:, :num_out].set(
        0.05 * jax.random.normal(keys[6], (E, num_out), jnp.float32))
    bh2 = jnp.zeros((1, OUT_PAD), jnp.float32)

    bf16 = lambda a: a.astype(jnp.bfloat16)
    return (bf16(wqkv), bqkv, bf16(wo), bf16(wff1), bf16(wff2),
            lnv, bf16(wh1), hv, bf16(wh2), bh2)


# ----------------------------------------------------------------------------
# Pure-JAX f32 reference (same math as nn.TransformerEncoderLayer post-norm,
# eval mode, unmasked), using the same (bf16-rounded) weight values.
# ----------------------------------------------------------------------------
def reference_forward(x, params, num_heads, num_out):
    (wqkv, bqkv, wo, wff1, wff2, lnv, wh1, hv, wh2, bh2) = [
        p.astype(jnp.float32) for p in params]

    def ln(v, g, b):
        mu = jnp.mean(v, axis=-1, keepdims=True)
        var = jnp.mean((v - mu) ** 2, axis=-1, keepdims=True)
        return (v - mu) * jax.lax.rsqrt(var + EPS) * g + b

    B, S, E = x.shape
    L, _, H, _, dh = wqkv.shape
    tok = x
    for l in range(L):
        attn = jnp.zeros((B, S, E), jnp.float32)
        for h in range(H):
            q = jnp.einsum('bse,ed->bsd', tok, wqkv[l, 0, h]) + bqkv[l, 0, h]
            k = jnp.einsum('bse,ed->bsd', tok, wqkv[l, 1, h]) + bqkv[l, 1, h]
            v = jnp.einsum('bse,ed->bsd', tok, wqkv[l, 2, h]) + bqkv[l, 2, h]
            s = jnp.einsum('bsd,btd->bst', q, k)      # scale folded into q
            p = jax.nn.softmax(s, axis=-1)
            ctx = jnp.einsum('bst,btd->bsd', p, v)
            attn = attn + jnp.einsum('bsd,de->bse', ctx, wo[l, h])
        attn = attn + lnv[l, 0]
        x1 = ln(tok + attn, lnv[l, 1], lnv[l, 2])
        ff = jnp.maximum(jnp.einsum('bse,ef->bsf', x1, wff1[l]) + lnv[l, 3], 0.0)
        ff = jnp.einsum('bse,ef->bsf', ff, wff2[l]) + lnv[l, 4]
        tok = ln(x1 + ff, lnv[l, 5], lnv[l, 6])
    pooled = tok.sum(1)
    hh = jnp.maximum(pooled @ wh1 + hv[0], 0.0)
    hh = ln(hh, hv[1], hv[2])
    return (hh @ wh2 + bh2)[:, :num_out]


if __name__ == "__main__":
    num_layers = 2
    embed_dim = 32
    num_heads = 4
    num_out = 8
    B, S = 2, 8

    key = jax.random.PRNGKey(0)
    k_in, k_par = jax.random.split(key)
    x = jax.random.normal(k_in, (B, S, embed_dim), jnp.float32)

    params = init_params(k_par, num_layers, embed_dim, num_heads, num_out)

    out = transformer_forward(x, params, num_heads, num_out)   # whole batch, grid=(1,)
    out = jax.block_until_ready(out)

    ref = reference_forward(x, params, num_heads, num_out)
    assert out.shape == (B, num_out)
    # kernel uses bf16 matmul operands with f32 accumulation -> tolerance ~1e-2
    assert jnp.allclose(out, ref, atol=3e-2, rtol=3e-2), "mismatch vs JAX reference"

    print("KERNEL_OK")
</pallas_src>

<mosaic_0001>
module attributes {stable_mosaic.version = 11 : i64} {
  func.func @fused_transformer_kernel(%arg0: i32, %arg1: memref<2x8x32xf32, #tpu.memory_space<vmem>>, %arg2: memref<24x32x8xbf16, #tpu.memory_space<vmem>>, %arg3: memref<24x1x8xf32, #tpu.memory_space<vmem>>, %arg4: memref<8x8x32xbf16, #tpu.memory_space<vmem>>, %arg5: memref<2x32x32xbf16, #tpu.memory_space<vmem>>, %arg6: memref<2x32x32xbf16, #tpu.memory_space<vmem>>, %arg7: memref<2x8x32xf32, #tpu.memory_space<vmem>>, %arg8: memref<32x32xbf16, #tpu.memory_space<vmem>>, %arg9: memref<8x32xf32, #tpu.memory_space<vmem>>, %arg10: memref<32x128xbf16, #tpu.memory_space<vmem>>, %arg11: memref<1x128xf32, #tpu.memory_space<vmem>>, %arg12: memref<2x128xf32, #tpu.memory_space<vmem>>) attributes {dimension_semantics = [#tpu.dimension_semantics<parallel>], iteration_bounds = array<i64: 1>, scalar_prefetch = 0 : i64, scratch_operands = 0 : i64, tpu.core_type = #tpu.core_type<tc>, window_params = [{transform_indices = @transform_0, window_bounds = array<i64: 2, 8, 32>}, {pipeline_mode = #tpu.pipeline_mode<synchronous>, transform_indices = @transform_1, window_bounds = array<i64: 24, 32, 8>}, {pipeline_mode = #tpu.pipeline_mode<synchronous>, transform_indices = @transform_2, window_bounds = array<i64: 24, 1, 8>}, {pipeline_mode = #tpu.pipeline_mode<synchronous>, transform_indices = @transform_3, window_bounds = array<i64: 8, 8, 32>}, {pipeline_mode = #tpu.pipeline_mode<synchronous>, transform_indices = @transform_4, window_bounds = array<i64: 2, 32, 32>}, {pipeline_mode = #tpu.pipeline_mode<synchronous>, transform_indices = @transform_5, window_bounds = array<i64: 2, 32, 32>}, {pipeline_mode = #tpu.pipeline_mode<synchronous>, transform_indices = @transform_6, window_bounds = array<i64: 2, 8, 32>}, {pipeline_mode = #tpu.pipeline_mode<synchronous>, transform_indices = @transform_7, window_bounds = array<i64: 32, 32>}, {pipeline_mode = #tpu.pipeline_mode<synchronous>, transform_indices = @transform_8, window_bounds = array<i64: 8, 32>}, {pipeline_mode = #tpu.pipeline_mode<synchronous>, transform_indices = @transform_9, window_bounds = array<i64: 32, 128>}, {pipeline_mode = #tpu.pipeline_mode<synchronous>, transform_indices = @transform_10, window_bounds = array<i64: 1, 128>}, {transform_indices = @transform_11, window_bounds = array<i64: 2, 128>}]} {
    %c0 = arith.constant 0 : index
    %c0_0 = arith.constant 0 : index
    %c0_1 = arith.constant 0 : index
    %0 = vector.load %arg1[%c0, %c0_0, %c0_1] : memref<2x8x32xf32, #tpu.memory_space<vmem>>, vector<2x8x32xf32>
    %1 = vector.shape_cast %0 : vector<2x8x32xf32> to vector<16x32xf32>
    %c0_2 = arith.constant 0 : index
    %c0_3 = arith.constant 0 : index
    %c0_4 = arith.constant 0 : index
    %2 = vector.load %arg7[%c0_2, %c0_3, %c0_4] : memref<2x8x32xf32, #tpu.memory_space<vmem>>, vector<1x8x32xf32>
    %3 = vector.shape_cast %2 : vector<1x8x32xf32> to vector<8x32xf32>
    %4 = arith.truncf %1 : vector<16x32xf32> to vector<16x32xbf16>
    %cst = arith.constant 0.000000e+00 : f32
    %5 = vector.broadcast %cst : f32 to vector<16x32xf32>
    %c0_5 = arith.constant 0 : index
    %c0_6 = arith.constant 0 : index
    %c0_7 = arith.constant 0 : index
    %6 = vector.load %arg2[%c0_5, %c0_6, %c0_7] : memref<24x32x8xbf16, #tpu.memory_space<vmem>>, vector<1x32x8xbf16>
    %7 = vector.shape_cast %6 : vector<1x32x8xbf16> to vector<32x8xbf16>
    %cst_8 = arith.constant dense<0.000000e+00> : vector<16x8xf32>
    %8 = tpu.matmul %4, %7, %cst_8 {dimension_numbers = #tpu.dot_dimension_numbers<[1], [0], [0], [1], [0, 0, 1, 1], [], []>} : vector<16x32xbf16>, vector<32x8xbf16>, vector<16x8xf32> -> vector<16x8xf32>
    %c0_9 = arith.constant 0 : index
    %c0_10 = arith.constant 0 : index
    %c0_11 = arith.constant 0 : index
    %9 = vector.load %arg3[%c0_9, %c0_10, %c0_11] : memref<24x1x8xf32, #tpu.memory_space<vmem>>, vector<1x1x8xf32>
    %10 = vector.shape_cast %9 : vector<1x1x8xf32> to vector<1x8xf32>
    %11 = vector.broadcast %10 : vector<1x8xf32> to vector<16x8xf32>
    %12 = arith.addf %8, %11 : vector<16x8xf32>
    %c4 = arith.constant 4 : index
    %c0_12 = arith.constant 0 : index
    %c0_13 = arith.constant 0 : index
    %13 = vector.load %arg2[%c4, %c0_12, %c0_13] : memref<24x32x8xbf16, #tpu.memory_space<vmem>>, vector<1x32x8xbf16>
    %14 = vector.shape_cast %13 : vector<1x32x8xbf16> to vector<32x8xbf16>
    %cst_14 = arith.constant dense<0.000000e+00> : vector<16x8xf32>
    %15 = tpu.matmul %4, %14, %cst_14 {dimension_numbers = #tpu.dot_dimension_numbers<[1], [0], [0], [1], [0, 0, 1, 1], [], []>} : vector<16x32xbf16>, vector<32x8xbf16>, vector<16x8xf32> -> vector<16x8xf32>
    %c4_15 = arith.constant 4 : index
    %c0_16 = arith.constant 0 : index
    %c0_17 = arith.constant 0 : index
    %16 = vector.load %arg3[%c4_15, %c0_16, %c0_17] : memref<24x1x8xf32, #tpu.memory_space<vmem>>, vector<1x1x8xf32>
    %17 = vector.shape_cast %16 : vector<1x1x8xf32> to vector<1x8xf32>
    %18 = vector.broadcast %17 : vector<1x8xf32> to vector<16x8xf32>
    %19 = arith.addf %15, %18 : vector<16x8xf32>
    %c8 = arith.constant 8 : index
    %c0_18 = arith.constant 0 : index
    %c0_19 = arith.constant 0 : index
    %20 = vector.load %arg2[%c8, %c0_18, %c0_19] : memref<24x32x8xbf16, #tpu.memory_space<vmem>>, vector<1x32x8xbf16>
    %21 = vector.shape_cast %20 : vector<1x32x8xbf16> to vector<32x8xbf16>
    %cst_20 = arith.constant dense<0.000000e+00> : vector<16x8xf32>
    %22 = tpu.matmul %4, %21, %cst_20 {dimension_numbers = #tpu.dot_dimension_numbers<[1], [0], [0], [1], [0, 0, 1, 1], [], []>} : vector<16x32xbf16>, vector<32x8xbf16>, vector<16x8xf32> -> vector<16x8xf32>
    %c8_21 = arith.constant 8 : index
    %c0_22 = arith.constant 0 : index
    %c0_23 = arith.constant 0 : index
    %23 = vector.load %arg3[%c8_21, %c0_22, %c0_23] : memref<24x1x8xf32, #tpu.memory_space<vmem>>, vector<1x1x8xf32>
    %24 = vector.shape_cast %23 : vector<1x1x8xf32> to vector<1x8xf32>
    %25 = vector.broadcast %24 : vector<1x8xf32> to vector<16x8xf32>
    %26 = arith.addf %22, %25 : vector<16x8xf32>
    %27 = vector.shape_cast %12 : vector<16x8xf32> to vector<2x8x8xf32>
    %28 = vector.shape_cast %19 : vector<16x8xf32> to vector<2x8x8xf32>
    %29 = vector.shape_cast %26 : vector<16x8xf32> to vector<2x8x8xf32>
    %30 = arith.truncf %27 : vector<2x8x8xf32> to vector<2x8x8xbf16>
    %31 = arith.truncf %28 : vector<2x8x8xf32> to vector<2x8x8xbf16>
    "tpu.trace_start"() <{level = 10 : i32, message = "bsd,btd->bst"}> : () -> ()
    %cst_24 = arith.constant dense<0.000000e+00> : vector<2x8x8xf32>
    %32 = tpu.matmul %30, %31, %cst_24 {dimension_numbers = #tpu.dot_dimension_numbers<[2], [2], [1], [1], [0, 0, 0, 1, 1, 1], [0], [0]>} : vector<2x8x8xbf16>, vector<2x8x8xbf16>, vector<2x8x8xf32> -> vector<2x8x8xf32>
    "tpu.trace_stop"() : () -> ()
    %cst_25 = arith.constant dense<0xFF800000> : vector<2x8xf32>
    %33 = vector.multi_reduction <maximumf>, %32, %cst_25 [2] : vector<2x8x8xf32> to vector<2x8xf32>
    %34 = vector.shape_cast %33 : vector<2x8xf32> to vector<2x8x1xf32>
    %35 = vector.broadcast %34 : vector<2x8x1xf32> to vector<2x8x8xf32>
    %36 = arith.subf %32, %35 : vector<2x8x8xf32>
    %37 = math.exp %36 : vector<2x8x8xf32>
    %cst_26 = arith.constant dense<0.000000e+00> : vector<2x8xf32>
    %38 = vector.multi_reduction <add>, %37, %cst_26 [2] : vector<2x8x8xf32> to vector<2x8xf32>
    %39 = vector.shape_cast %38 : vector<2x8xf32> to vector<2x8x1xf32>
    %40 = tpu.reciprocal %39 {approx = true} : vector<2x8x1xf32> -> vector<2x8x1xf32>
    %41 = arith.mulf %39, %40 : vector<2x8x1xf32>
    %cst_27 = arith.constant 2.000000e+00 : f32
    %42 = vector.broadcast %cst_27 : f32 to vector<2x8x1xf32>
    %43 = arith.subf %42, %41 : vector<2x8x1xf32>
    %44 = arith.mulf %40, %43 : vector<2x8x1xf32>
    %45 = vector.broadcast %44 : vector<2x8x1xf32> to vector<2x8x8xf32>
    %46 = arith.mulf %37, %45 : vector<2x8x8xf32>
    %47 = arith.truncf %46 : vector<2x8x8xf32> to vector<2x8x8xbf16>
    %48 = arith.truncf %29 : vector<2x8x8xf32> to vector<2x8x8xbf16>
    "tpu.trace_start"() <{level = 10 : i32, message = "bst,btd->bsd"}> : () -> ()
    %cst_28 = arith.constant dense<0.000000e+00> : vector<2x8x8xf32>
    %49 = tpu.matmul %47, %48, %cst_28 {dimension_numbers = #tpu.dot_dimension_numbers<[2], [1], [1], [2], [0, 0, 0, 1, 1, 2], [0], [0]>} : vector<2x8x8xbf16>, vector<2x8x8xbf16>, vector<2x8x8xf32> -> vector<2x8x8xf32>
    "tpu.trace_stop"() : () -> ()
    %50 = vector.shape_cast %49 : vector<2x8x8xf32> to vector<16x8xf32>
    %51 = arith.truncf %50 : vector<16x8xf32> to vector<16x8xbf16>
    %c0_29 = arith.constant 0 : index
    %c0_30 = arith.constant 0 : index
    %c0_31 = arith.constant 0 : index
    %52 = vector.load %arg4[%c0_29, %c0_30, %c0_31] : memref<8x8x32xbf16, #tpu.memory_space<vmem>>, vector<1x8x32xbf16>
    %53 = vector.shape_cast %52 : vector<1x8x32xbf16> to vector<8x32xbf16>
    %cst_32 = arith.constant dense<0.000000e+00> : vector<16x32xf32>
    %54 = tpu.matmul %51, %53, %cst_32 {dimension_numbers = #tpu.dot_dimension_numbers<[1], [0], [0], [1], [0, 0, 1, 1], [], []>} : vector<16x8xbf16>, vector<8x32xbf16>, vector<16x32xf32> -> vector<16x32xf32>
    %55 = arith.addf %5, %54 : vector<16x32xf32>
    %c1 = arith.constant 1 : index
    %c0_33 = arith.constant 0 : index
    %c0_34 = arith.constant 0 : index
    %56 = vector.load %arg2[%c1, %c0_33, %c0_34] : memref<24x32x8xbf16, #tpu.memory_space<vmem>>, vector<1x32x8xbf16>
    %57 = vector.shape_cast %56 : vector<1x32x8xbf16> to vector<32x8xbf16>
    %cst_35 = arith.constant dense<0.000000e+00> : vector<16x8xf32>
    %58 = tpu.matmul %4, %57, %cst_35 {dimension_numbers = #tpu.dot_dimension_numbers<[1], [0], [0], [1], [0, 0, 1, 1], [], []>} : vector<16x32xbf16>, vector<32x8xbf16>, vector<16x8xf32> -> vector<16x8xf32>
    %c1_36 = arith.constant 1 : index
    %c0_37 = arith.constant 0 : index
    %c0_38 = arith.constant 0 : index
    %59 = vector.load %arg3[%c1_36, %c0_37, %c0_38] : memref<24x1x8xf32, #tpu.memory_space<vmem>>, vector<1x1x8xf32>
    %60 = vector.shape_cast %59 : vector<1x1x8xf32> to vector<1x8xf32>
    %61 = vector.broadcast %60 : vector<1x8xf32> to vector<16x8xf32>
    %62 = arith.addf %58, %61 : vector<16x8xf32>
    %c5 = arith.constant 5 : index
    %c0_39 = arith.constant 0 : index
    %c0_40 = arith.constant 0 : index
    %63 = vector.load %arg2[%c5, %c0_39, %c0_40] : memref<24x32x8xbf16, #tpu.memory_space<vmem>>, vector<1x32x8xbf16>
    %64 = vector.shape_cast %63 : vector<1x32x8xbf16> to vector<32x8xbf16>
    %cst_41 = arith.constant dense<0.000000e+00> : vector<16x8xf32>
    %65 = tpu.matmul %4, %64, %cst_41 {dimension_numbers = #tpu.dot_dimension_numbers<[1], [0], [0], [1], [0, 0, 1, 1], [], []>} : vector<16x32xbf16>, vector<32x8xbf16>, vector<16x8xf32> -> vector<16x8xf32>
    %c5_42 = arith.constant 5 : index
    %c0_43 = arith.constant 0 : index
    %c0_44 = arith.constant 0 : index
    %66 = vector.load %arg3[%c5_42, %c0_43, %c0_44] : memref<24x1x8xf32, #tpu.memory_space<vmem>>, vector<1x1x8xf32>
    %67 = vector.shape_cast %66 : vector<1x1x8xf32> to vector<1x8xf32>
    %68 = vector.broadcast %67 : vector<1x8xf32> to vector<16x8xf32>
    %69 = arith.addf %65, %68 : vector<16x8xf32>
    %c9 = arith.constant 9 : index
    %c0_45 = arith.constant 0 : index
    %c0_46 = arith.constant 0 : index
    %70 = vector.load %arg2[%c9, %c0_45, %c0_46] : memref<24x32x8xbf16, #tpu.memory_space<vmem>>, vector<1x32x8xbf16>
    %71 = vector.shape_cast %70 : vector<1x32x8xbf16> to vector<32x8xbf16>
    %cst_47 = arith.constant dense<0.000000e+00> : vector<16x8xf32>
    %72 = tpu.matmul %4, %71, %cst_47 {dimension_numbers = #tpu.dot_dimension_numbers<[1], [0], [0], [1], [0, 0, 1, 1], [], []>} : vector<16x32xbf16>, vector<32x8xbf16>, vector<16x8xf32> -> vector<16x8xf32>
    %c9_48 = arith.constant 9 : index
    %c0_49 = arith.constant 0 : index
    %c0_50 = arith.constant 0 : index
    %73 = vector.load %arg3[%c9_48, %c0_49, %c0_50] : memref<24x1x8xf32, #tpu.memory_space<vmem>>, vector<1x1x8xf32>
    %74 = vector.shape_cast %73 : vector<1x1x8xf32> to vector<1x8xf32>
    %75 = vector.broadcast %74 : vector<1x8xf32> to vector<16x8xf32>
    %76 = arith.addf %72, %75 : vector<16x8xf32>
    %77 = vector.shape_cast %62 : vector<16x8xf32> to vector<2x8x8xf32>
    %78 = vector.shape_cast %69 : vector<16x8xf32> to vector<2x8x8xf32>
    %79 = vector.shape_cast %76 : vector<16x8xf32> to vector<2x8x8xf32>
    %80 = arith.truncf %77 : vector<2x8x8xf32> to vector<2x8x8xbf16>
    %81 = arith.truncf %78 : vector<2x8x8xf32> to vector<2x8x8xbf16>
    "tpu.trace_start"() <{level = 10 : i32, message = "bsd,btd->bst"}> : () -> ()
    %cst_51 = arith.constant dense<0.000000e+00> : vector<2x8x8xf32>
    %82 = tpu.matmul %80, %81, %cst_51 {dimension_numbers = #tpu.dot_dimension_numbers<[2], [2], [1], [1], [0, 0, 0, 1, 1, 1], [0], [0]>} : vector<2x8x8xbf16>, vector<2x8x8xbf16>, vector<2x8x8xf32> -> vector<2x8x8xf32>
    "tpu.trace_stop"() : () -> ()
    %cst_52 = arith.constant dense<0xFF800000> : vector<2x8xf32>
    %83 = vector.multi_reduction <maximumf>, %82, %cst_52 [2] : vector<2x8x8xf32> to vector<2x8xf32>
    %84 = vector.shape_cast %83 : vector<2x8xf32> to vector<2x8x1xf32>
    %85 = vector.broadcast %84 : vector<2x8x1xf32> to vector<2x8x8xf32>
    %86 = arith.subf %82, %85 : vector<2x8x8xf32>
    %87 = math.exp %86 : vector<2x8x8xf32>
    %cst_53 = arith.constant dense<0.000000e+00> : vector<2x8xf32>
    %88 = vector.multi_reduction <add>, %87, %cst_53 [2] : vector<2x8x8xf32> to vector<2x8xf32>
    %89 = vector.shape_cast %88 : vector<2x8xf32> to vector<2x8x1xf32>
    %90 = tpu.reciprocal %89 {approx = true} : vector<2x8x1xf32> -> vector<2x8x1xf32>
    %91 = arith.mulf %89, %90 : vector<2x8x1xf32>
    %cst_54 = arith.constant 2.000000e+00 : f32
    %92 = vector.broadcast %cst_54 : f32 to vector<2x8x1xf32>
    %93 = arith.subf %92, %91 : vector<2x8x1xf32>
    %94 = arith.mulf %90, %93 : vector<2x8x1xf32>
    %95 = vector.broadcast %94 : vector<2x8x1xf32> to vector<2x8x8xf32>
    %96 = arith.mulf %87, %95 : vector<2x8x8xf32>
    %97 = arith.truncf %96 : vector<2x8x8xf32> to vector<2x8x8xbf16>
    %98 = arith.truncf %79 : vector<2x8x8xf32> to vector<2x8x8xbf16>
    "tpu.trace_start"() <{level = 10 : i32, message = "bst,btd->bsd"}> : () -> ()
    %cst_55 = arith.constant dense<0.000000e+00> : vector<2x8x8xf32>
    %99 = tpu.matmul %97, %98, %cst_55 {dimension_numbers = #tpu.dot_dimension_numbers<[2], [1], [1], [2], [0, 0, 0, 1, 1, 2], [0], [0]>} : vector<2x8x8xbf16>, vector<2x8x8xbf16>, vector<2x8x8xf32> -> vector<2x8x8xf32>
    "tpu.trace_stop"() : () -> ()
    %100 = vector.shape_cast %99 : vector<2x8x8xf32> to vector<16x8xf32>
    %101 = arith.truncf %100 : vector<16x8xf32> to vector<16x8xbf16>
    %c1_56 = arith.constant 1 : index
    %c0_57 = arith.constant 0 : index
    %c0_58 = arith.constant 0 : index
    %102 = vector.load %arg4[%c1_56, %c0_57, %c0_58] : memref<8x8x32xbf16, #tpu.memory_space<vmem>>, vector<1x8x32xbf16>
    %103 = vector.shape_cast %102 : vector<1x8x32xbf16> to vector<8x32xbf16>
    %cst_59 = arith.constant dense<0.000000e+00> : vector<16x32xf32>
    %104 = tpu.matmul %101, %103, %cst_59 {dimension_numbers = #tpu.dot_dimension_numbers<[1], [0], [0], [1], [0, 0, 1, 1], [], []>} : vector<16x8xbf16>, vector<8x32xbf16>, vector<16x32xf32> -> vector<16x32xf32>
    %105 = arith.addf %55, %104 : vector<16x32xf32>
    %c2 = arith.constant 2 : index
    %c0_60 = arith.constant 0 : index
    %c0_61 = arith.constant 0 : index
    %106 = vector.load %arg2[%c2, %c0_60, %c0_61] : memref<24x32x8xbf16, #tpu.memory_space<vmem>>, vector<1x32x8xbf16>
    %107 = vector.shape_cast %106 : vector<1x32x8xbf16> to vector<32x8xbf16>
    %cst_62 = arith.constant dense<0.000000e+00> : vector<16x8xf32>
    %108 = tpu.matmul %4, %107, %cst_62 {dimension_numbers = #tpu.dot_dimension_numbers<[1], [0], [0], [1], [0, 0, 1, 1], [], []>} : vector<16x32xbf16>, vector<32x8xbf16>, vector<16x8xf32> -> vector<16x8xf32>
    %c2_63 = arith.constant 2 : index
    %c0_64 = arith.constant 0 : index
    %c0_65 = arith.constant 0 : index
    %109 = vector.load %arg3[%c2_63, %c0_64, %c0_65] : memref<24x1x8xf32, #tpu.memory_space<vmem>>, vector<1x1x8xf32>
    %110 = vector.shape_cast %109 : vector<1x1x8xf32> to vector<1x8xf32>
    %111 = vector.broadcast %110 : vector<1x8xf32> to vector<16x8xf32>
    %112 = arith.addf %108, %111 : vector<16x8xf32>
    %c6 = arith.constant 6 : index
    %c0_66 = arith.constant 0 : index
    %c0_67 = arith.constant 0 : index
    %113 = vector.load %arg2[%c6, %c0_66, %c0_67] : memref<24x32x8xbf16, #tpu.memory_space<vmem>>, vector<1x32x8xbf16>
    %114 = vector.shape_cast %113 : vector<1x32x8xbf16> to vector<32x8xbf16>
    %cst_68 = arith.constant dense<0.000000e+00> : vector<16x8xf32>
    %115 = tpu.matmul %4, %114, %cst_68 {dimension_numbers = #tpu.dot_dimension_numbers<[1], [0], [0], [1], [0, 0, 1, 1], [], []>} : vector<16x32xbf16>, vector<32x8xbf16>, vector<16x8xf32> -> vector<16x8xf32>
    %c6_69 = arith.constant 6 : index
    %c0_70 = arith.constant 0 : index
    %c0_71 = arith.constant 0 : index
    %116 = vector.load %arg3[%c6_69, %c0_70, %c0_71] : memref<24x1x8xf32, #tpu.memory_space<vmem>>, vector<1x1x8xf32>
    %117 = vector.shape_cast %116 : vector<1x1x8xf32> to vector<1x8xf32>
    %118 = vector.broadcast %117 : vector<1x8xf32> to vector<16x8xf32>
    %119 = arith.addf %115, %118 : vector<16x8xf32>
    %c10 = arith.constant 10 : index
    %c0_72 = arith.constant 0 : index
    %c0_73 = arith.constant 0 : index
    %120 = vector.load %arg2[%c10, %c0_72, %c0_73] : memref<24x32x8xbf16, #tpu.memory_space<vmem>>, vector<1x32x8xbf16>
    %121 = vector.shape_cast %120 : vector<1x32x8xbf16> to vector<32x8xbf16>
    %cst_74 = arith.constant dense<0.000000e+00> : vector<16x8xf32>
    %122 = tpu.matmul %4, %121, %cst_74 {dimension_numbers = #tpu.dot_dimension_numbers<[1], [0], [0], [1], [0, 0, 1, 1], [], []>} : vector<16x32xbf16>, vector<32x8xbf16>, vector<16x8xf32> -> vector<16x8xf32>
    %c10_75 = arith.constant 10 : index
    %c0_76 = arith.constant 0 : index
    %c0_77 = arith.constant 0 : index
    %123 = vector.load %arg3[%c10_75, %c0_76, %c0_77] : memref<24x1x8xf32, #tpu.memory_space<vmem>>, vector<1x1x8xf32>
    %124 = vector.shape_cast %123 : vector<1x1x8xf32> to vector<1x8xf32>
    %125 = vector.broadcast %124 : vector<1x8xf32> to vector<16x8xf32>
    %126 = arith.addf %122, %125 : vector<16x8xf32>
    %127 = vector.shape_cast %112 : vector<16x8xf32> to vector<2x8x8xf32>
    %128 = vector.shape_cast %119 : vector<16x8xf32> to vector<2x8x8xf32>
    %129 = vector.shape_cast %126 : vector<16x8xf32> to vector<2x8x8xf32>
    %130 = arith.truncf %127 : vector<2x8x8xf32> to vector<2x8x8xbf16>
    %131 = arith.truncf %128 : vector<2x8x8xf32> to vector<2x8x8xbf16>
    "tpu.trace_start"() <{level = 10 : i32, message = "bsd,btd->bst"}> : () -> ()
    %cst_78 = arith.constant dense<0.000000e+00> : vector<2x8x8xf32>
    %132 = tpu.matmul %130, %131, %cst_78 {dimension_numbers = #tpu.dot_dimension_numbers<[2], [2], [1], [1], [0, 0, 0, 1, 1, 1], [0], [0]>} : vector<2x8x8xbf16>, vector<2x8x8xbf16>, vector<2x8x8xf32> -> vector<2x8x8xf32>
    "tpu.trace_stop"() : () -> ()
    %cst_79 = arith.constant dense<0xFF800000> : vector<2x8xf32>
    %133 = vector.multi_reduction <maximumf>, %132, %cst_79 [2] : vector<2x8x8xf32> to vector<2x8xf32>
    %134 = vector.shape_cast %133 : vector<2x8xf32> to vector<2x8x1xf32>
    %135 = vector.broadcast %134 : vector<2x8x1xf32> to vector<2x8x8xf32>
    %136 = arith.subf %132, %135 : vector<2x8x8xf32>
    %137 = math.exp %136 : vector<2x8x8xf32>
    %cst_80 = arith.constant dense<0.000000e+00> : vector<2x8xf32>
    %138 = vector.multi_reduction <add>, %137, %cst_80 [2] : vector<2x8x8xf32> to vector<2x8xf32>
    %139 = vector.shape_cast %138 : vector<2x8xf32> to vector<2x8x1xf32>
    %140 = tpu.reciprocal %139 {approx = true} : vector<2x8x1xf32> -> vector<2x8x1xf32>
    %141 = arith.mulf %139, %140 : vector<2x8x1xf32>
    %cst_81 = arith.constant 2.000000e+00 : f32
    %142 = vector.broadcast %cst_81 : f32 to vector<2x8x1xf32>
    %143 = arith.subf %142, %141 : vector<2x8x1xf32>
    %144 = arith.mulf %140, %143 : vector<2x8x1xf32>
    %145 = vector.broadcast %144 : vector<2x8x1xf32> to vector<2x8x8xf32>
    %146 = arith.mulf %137, %145 : vector<2x8x8xf32>
    %147 = arith.truncf %146 : vector<2x8x8xf32> to vector<2x8x8xbf16>
    %148 = arith.truncf %129 : vector<2x8x8xf32> to vector<2x8x8xbf16>
    "tpu.trace_start"() <{level = 10 : i32, message = "bst,btd->bsd"}> : () -> ()
    %cst_82 = arith.constant dense<0.000000e+00> : vector<2x8x8xf32>
    %149 = tpu.matmul %147, %148, %cst_82 {dimension_numbers = #tpu.dot_dimension_numbers<[2], [1], [1], [2], [0, 0, 0, 1, 1, 2], [0], [0]>} : vector<2x8x8xbf16>, vector<2x8x8xbf16>, vector<2x8x8xf32> -> vector<2x8x8xf32>
    "tpu.trace_stop"() : () -> ()
    %150 = vector.shape_cast %149 : vector<2x8x8xf32> to vector<16x8xf32>
    %151 = arith.truncf %150 : vector<16x8xf32> to vector<16x8xbf16>
    %c2_83 = arith.constant 2 : index
    %c0_84 = arith.constant 0 : index
    %c0_85 = arith.constant 0 : index
    %152 = vector.load %arg4[%c2_83, %c0_84, %c0_85] : memref<8x8x32xbf16, #tpu.memory_space<vmem>>, vector<1x8x32xbf16>
    %153 = vector.shape_cast %152 : vector<1x8x32xbf16> to vector<8x32xbf16>
    %cst_86 = arith.constant dense<0.000000e+00> : vector<16x32xf32>
    %154 = tpu.matmul %151, %153, %cst_86 {dimension_numbers = #tpu.dot_dimension_numbers<[1], [0], [0], [1], [0, 0, 1, 1], [], []>} : vector<16x8xbf16>, vector<8x32xbf16>, vector<16x32xf32> -> vector<16x32xf32>
    %155 = arith.addf %105, %154 : vector<16x32xf32>
    %c3 = arith.constant 3 : index
    %c0_87 = arith.constant 0 : index
    %c0_88 = arith.constant 0 : index
    %156 = vector.load %arg2[%c3, %c0_87, %c0_88] : memref<24x32x8xbf16, #tpu.memory_space<vmem>>, vector<1x32x8xbf16>
    %157 = vector.shape_cast %156 : vector<1x32x8xbf16> to vector<32x8xbf16>
    %cst_89 = arith.constant dense<0.000000e+00> : vector<16x8xf32>
    %158 = tpu.matmul %4, %157, %cst_89 {dimension_numbers = #tpu.dot_dimension_numbers<[1], [0], [0], [1], [0, 0, 1, 1], [], []>} : vector<16x32xbf16>, vector<32x8xbf16>, vector<16x8xf32> -> vector<16x8xf32>
    %c3_90 = arith.constant 3 : index
    %c0_91 = arith.constant 0 : index
    %c0_92 = arith.constant 0 : index
    %159 = vector.load %arg3[%c3_90, %c0_91, %c0_92] : memref<24x1x8xf32, #tpu.memory_space<vmem>>, vector<1x1x8xf32>
    %160 = vector.shape_cast %159 : vector<1x1x8xf32> to vector<1x8xf32>
    %161 = vector.broadcast %160 : vector<1x8xf32> to vector<16x8xf32>
    %162 = arith.addf %158, %161 : vector<16x8xf32>
    %c7 = arith.constant 7 : index
    %c0_93 = arith.constant 0 : index
    %c0_94 = arith.constant 0 : index
    %163 = vector.load %arg2[%c7, %c0_93, %c0_94] : memref<24x32x8xbf16, #tpu.memory_space<vmem>>, vector<1x32x8xbf16>
    %164 = vector.shape_cast %163 : vector<1x32x8xbf16> to vector<32x8xbf16>
    %cst_95 = arith.constant dense<0.000000e+00> : vector<16x8xf32>
    %165 = tpu.matmul %4, %164, %cst_95 {dimension_numbers = #tpu.dot_dimension_numbers<[1], [0], [0], [1], [0, 0, 1, 1], [], []>} : vector<16x32xbf16>, vector<32x8xbf16>, vector<16x8xf32> -> vector<16x8xf32>
    %c7_96 = arith.constant 7 : index
    %c0_97 = arith.constant 0 : index
    %c0_98 = arith.constant 0 : index
    %166 = vector.load %arg3[%c7_96, %c0_97, %c0_98] : memref<24x1x8xf32, #tpu.memory_space<vmem>>, vector<1x1x8xf32>
    %167 = vector.shape_cast %166 : vector<1x1x8xf32> to vector<1x8xf32>
    %168 = vector.broadcast %167 : vector<1x8xf32> to vector<16x8xf32>
    %169 = arith.addf %165, %168 : vector<16x8xf32>
    %c11 = arith.constant 11 : index
    %c0_99 = arith.constant 0 : index
    %c0_100 = arith.constant 0 : index
    %170 = vector.load %arg2[%c11, %c0_99, %c0_100] : memref<24x32x8xbf16, #tpu.memory_space<vmem>>, vector<1x32x8xbf16>
    %171 = vector.shape_cast %170 : vector<1x32x8xbf16> to vector<32x8xbf16>
    %cst_101 = arith.constant dense<0.000000e+00> : vector<16x8xf32>
    %172 = tpu.matmul %4, %171, %cst_101 {dimension_numbers = #tpu.dot_dimension_numbers<[1], [0], [0], [1], [0, 0, 1, 1], [], []>} : vector<16x32xbf16>, vector<32x8xbf16>, vector<16x8xf32> -> vector<16x8xf32>
    %c11_102 = arith.constant 11 : index
    %c0_103 = arith.constant 0 : index
    %c0_104 = arith.constant 0 : index
    %173 = vector.load %arg3[%c11_102, %c0_103, %c0_104] : memref<24x1x8xf32, #tpu.memory_space<vmem>>, vector<1x1x8xf32>
    %174 = vector.shape_cast %173 : vector<1x1x8xf32> to vector<1x8xf32>
    %175 = vector.broadcast %174 : vector<1x8xf32> to vector<16x8xf32>
    %176 = arith.addf %172, %175 : vector<16x8xf32>
    %177 = vector.shape_cast %162 : vector<16x8xf32> to vector<2x8x8xf32>
    %178 = vector.shape_cast %169 : vector<16x8xf32> to vector<2x8x8xf32>
    %179 = vector.shape_cast %176 : vector<16x8xf32> to vector<2x8x8xf32>
    %180 = arith.truncf %177 : vector<2x8x8xf32> to vector<2x8x8xbf16>
    %181 = arith.truncf %178 : vector<2x8x8xf32> to vector<2x8x8xbf16>
    "tpu.trace_start"() <{level = 10 : i32, message = "bsd,btd->bst"}> : () -> ()
    %cst_105 = arith.constant dense<0.000000e+00> : vector<2x8x8xf32>
    %182 = tpu.matmul %180, %181, %cst_105 {dimension_numbers = #tpu.dot_dimension_numbers<[2], [2], [1], [1], [0, 0, 0, 1, 1, 1], [0], [0]>} : vector<2x8x8xbf16>, vector<2x8x8xbf16>, vector<2x8x8xf32> -> vector<2x8x8xf32>
    "tpu.trace_stop"() : () -> ()
    %cst_106 = arith.constant dense<0xFF800000> : vector<2x8xf32>
    %183 = vector.multi_reduction <maximumf>, %182, %cst_106 [2] : vector<2x8x8xf32> to vector<2x8xf32>
    %184 = vector.shape_cast %183 : vector<2x8xf32> to vector<2x8x1xf32>
    %185 = vector.broadcast %184 : vector<2x8x1xf32> to vector<2x8x8xf32>
    %186 = arith.subf %182, %185 : vector<2x8x8xf32>
    %187 = math.exp %186 : vector<2x8x8xf32>
    %cst_107 = arith.constant dense<0.000000e+00> : vector<2x8xf32>
    %188 = vector.multi_reduction <add>, %187, %cst_107 [2] : vector<2x8x8xf32> to vector<2x8xf32>
    %189 = vector.shape_cast %188 : vector<2x8xf32> to vector<2x8x1xf32>
    %190 = tpu.reciprocal %189 {approx = true} : vector<2x8x1xf32> -> vector<2x8x1xf32>
    %191 = arith.mulf %189, %190 : vector<2x8x1xf32>
    %cst_108 = arith.constant 2.000000e+00 : f32
    %192 = vector.broadcast %cst_108 : f32 to vector<2x8x1xf32>
    %193 = arith.subf %192, %191 : vector<2x8x1xf32>
    %194 = arith.mulf %190, %193 : vector<2x8x1xf32>
    %195 = vector.broadcast %194 : vector<2x8x1xf32> to vector<2x8x8xf32>
    %196 = arith.mulf %187, %195 : vector<2x8x8xf32>
    %197 = arith.truncf %196 : vector<2x8x8xf32> to vector<2x8x8xbf16>
    %198 = arith.truncf %179 : vector<2x8x8xf32> to vector<2x8x8xbf16>
    "tpu.trace_start"() <{level = 10 : i32, message = "bst,btd->bsd"}> : () -> ()
    %cst_109 = arith.constant dense<0.000000e+00> : vector<2x8x8xf32>
    %199 = tpu.matmul %197, %198, %cst_109 {dimension_numbers = #tpu.dot_dimension_numbers<[2], [1], [1], [2], [0, 0, 0, 1, 1, 2], [0], [0]>} : vector<2x8x8xbf16>, vector<2x8x8xbf16>, vector<2x8x8xf32> -> vector<2x8x8xf32>
    "tpu.trace_stop"() : () -> ()
    %200 = vector.shape_cast %199 : vector<2x8x8xf32> to vector<16x8xf32>
    %201 = arith.truncf %200 : vector<16x8xf32> to vector<16x8xbf16>
    %c3_110 = arith.constant 3 : index
    %c0_111 = arith.constant 0 : index
    %c0_112 = arith.constant 0 : index
    %202 = vector.load %arg4[%c3_110, %c0_111, %c0_112] : memref<8x8x32xbf16, #tpu.memory_space<vmem>>, vector<1x8x32xbf16>
    %203 = vector.shape_cast %202 : vector<1x8x32xbf16> to vector<8x32xbf16>
    %cst_113 = arith.constant dense<0.000000e+00> : vector<16x32xf32>
    %204 = tpu.matmul %201, %203, %cst_113 {dimension_numbers = #tpu.dot_dimension_numbers<[1], [0], [0], [1], [0, 0, 1, 1], [], []>} : vector<16x8xbf16>, vector<8x32xbf16>, vector<16x32xf32> -> vector<16x32xf32>
    %205 = arith.addf %155, %204 : vector<16x32xf32>
    %206 = vector.extract_strided_slice %3 {offsets = [0, 0], sizes = [1, 32], strides = [1, 1]} : vector<8x32xf32> to vector<1x32xf32>
    %207 = vector.shape_cast %206 : vector<1x32xf32> to vector<32xf32>
    %208 = vector.shape_cast %207 : vector<32xf32> to vector<1x32xf32>
    %209 = vector.broadcast %208 : vector<1x32xf32> to vector<16x32xf32>
    %210 = arith.addf %205, %209 : vector<16x32xf32>
    %211 = arith.addf %1, %210 : vector<16x32xf32>
    %212 = vector.extract_strided_slice %3 {offsets = [1, 0], sizes = [1, 32], strides = [1, 1]} : vector<8x32xf32> to vector<1x32xf32>
    %213 = vector.shape_cast %212 : vector<1x32xf32> to vector<32xf32>
    %214 = vector.extract_strided_slice %3 {offsets = [2, 0], sizes = [1, 32], strides = [1, 1]} : vector<8x32xf32> to vector<1x32xf32>
    %215 = vector.shape_cast %214 : vector<1x32xf32> to vector<32xf32>
    %cst_114 = arith.constant dense<0.000000e+00> : vector<16xf32>
    %216 = vector.multi_reduction <add>, %211, %cst_114 [1] : vector<16x32xf32> to vector<16xf32>
    %217 = vector.shape_cast %216 : vector<16xf32> to vector<16x1xf32>
    %cst_115 = arith.constant 3.200000e+01 : f32
    %218 = vector.broadcast %cst_115 : f32 to vector<16x1xf32>
    %219 = arith.divf %217, %218 : vector<16x1xf32>
    %220 = vector.broadcast %219 : vector<16x1xf32> to vector<16x32xf32>
    %221 = arith.subf %211, %220 : vector<16x32xf32>
    %222 = arith.mulf %221, %221 : vector<16x32xf32>
    %cst_116 = arith.constant dense<0.000000e+00> : vector<16xf32>
    %223 = vector.multi_reduction <add>, %222, %cst_116 [1] : vector<16x32xf32> to vector<16xf32>
    %224 = vector.shape_cast %223 : vector<16xf32> to vector<16x1xf32>
    %cst_117 = arith.constant 3.200000e+01 : f32
    %225 = vector.broadcast %cst_117 : f32 to vector<16x1xf32>
    %226 = arith.divf %224, %225 : vector<16x1xf32>
    %227 = vector.broadcast %219 : vector<16x1xf32> to vector<16x32xf32>
    %228 = arith.subf %211, %227 : vector<16x32xf32>
    %cst_118 = arith.constant 9.99999974E-6 : f32
    %229 = vector.broadcast %cst_118 : f32 to vector<16x1xf32>
    %230 = arith.addf %226, %229 : vector<16x1xf32>
    %231 = math.rsqrt %230 : vector<16x1xf32>
    %232 = vector.broadcast %231 : vector<16x1xf32> to vector<16x32xf32>
    %233 = arith.mulf %228, %232 : vector<16x32xf32>
    %234 = vector.shape_cast %213 : vector<32xf32> to vector<1x32xf32>
    %235 = vector.broadcast %234 : vector<1x32xf32> to vector<16x32xf32>
    %236 = arith.mulf %233, %235 : vector<16x32xf32>
    %237 = vector.shape_cast %215 : vector<32xf32> to vector<1x32xf32>
    %238 = vector.broadcast %237 : vector<1x32xf32> to vector<16x32xf32>
    %239 = arith.addf %236, %238 : vector<16x32xf32>
    %240 = arith.truncf %239 : vector<16x32xf32> to vector<16x32xbf16>
    %c0_119 = arith.constant 0 : index
    %c0_120 = arith.constant 0 : index
    %c0_121 = arith.constant 0 : index
    %241 = vector.load %arg5[%c0_119, %c0_120, %c0_121] : memref<2x32x32xbf16, #tpu.memory_space<vmem>>, vector<1x32x32xbf16>
    %242 = vector.shape_cast %241 : vector<1x32x32xbf16> to vector<32x32xbf16>
    %cst_122 = arith.constant dense<0.000000e+00> : vector<16x32xf32>
    %243 = tpu.matmul %240, %242, %cst_122 {dimension_numbers = #tpu.dot_dimension_numbers<[1], [0], [0], [1], [0, 0, 1, 1], [], []>} : vector<16x32xbf16>, vector<32x32xbf16>, vector<16x32xf32> -> vector<16x32xf32>
    %244 = vector.extract_strided_slice %3 {offsets = [3, 0], sizes = [1, 32], strides = [1, 1]} : vector<8x32xf32> to vector<1x32xf32>
    %245 = vector.shape_cast %244 : vector<1x32xf32> to vector<32xf32>
    %246 = vector.shape_cast %245 : vector<32xf32> to vector<1x32xf32>
    %247 = vector.broadcast %246 : vector<1x32xf32> to vector<16x32xf32>
    %248 = arith.addf %243, %247 : vector<16x32xf32>
    %cst_123 = arith.constant 0.000000e+00 : f32
    %249 = vector.broadcast %cst_123 : f32 to vector<16x32xf32>
    %250 = arith.maximumf %248, %249 : vector<16x32xf32>
    %251 = arith.truncf %250 : vector<16x32xf32> to vector<16x32xbf16>
    %c0_124 = arith.constant 0 : index
    %c0_125 = arith.constant 0 : index
    %c0_126 = arith.constant 0 : index
    %252 = vector.load %arg6[%c0_124, %c0_125, %c0_126] : memref<2x32x32xbf16, #tpu.memory_space<vmem>>, vector<1x32x32xbf16>
    %253 = vector.shape_cast %252 : vector<1x32x32xbf16> to vector<32x32xbf16>
    %cst_127 = arith.constant dense<0.000000e+00> : vector<16x32xf32>
    %254 = tpu.matmul %251, %253, %cst_127 {dimension_numbers = #tpu.dot_dimension_numbers<[1], [0], [0], [1], [0, 0, 1, 1], [], []>} : vector<16x32xbf16>, vector<32x32xbf16>, vector<16x32xf32> -> vector<16x32xf32>
    %255 = vector.extract_strided_slice %3 {offsets = [4, 0], sizes = [1, 32], strides = [1, 1]} : vector<8x32xf32> to vector<1x32xf32>
    %256 = vector.shape_cast %255 : vector<1x32xf32> to vector<32xf32>
    %257 = vector.shape_cast %256 : vector<32xf32> to vector<1x32xf32>
    %258 = vector.broadcast %257 : vector<1x32xf32> to vector<16x32xf32>
    %259 = arith.addf %254, %258 : vector<16x32xf32>
    %260 = arith.addf %239, %259 : vector<16x32xf32>
    %261 = vector.extract_strided_slice %3 {offsets = [5, 0], sizes = [1, 32], strides = [1, 1]} : vector<8x32xf32> to vector<1x32xf32>
    %262 = vector.shape_cast %261 : vector<1x32xf32> to vector<32xf32>
    %263 = vector.extract_strided_slice %3 {offsets = [6, 0], sizes = [1, 32], strides = [1, 1]} : vector<8x32xf32> to vector<1x32xf32>
    %264 = vector.shape_cast %263 : vector<1x32xf32> to vector<32xf32>
    %cst_128 = arith.constant dense<0.000000e+00> : vector<16xf32>
    %265 = vector.multi_reduction <add>, %260, %cst_128 [1] : vector<16x32xf32> to vector<16xf32>
    %266 = vector.shape_cast %265 : vector<16xf32> to vector<16x1xf32>
    %cst_129 = arith.constant 3.200000e+01 : f32
    %267 = vector.broadcast %cst_129 : f32 to vector<16x1xf32>
    %268 = arith.divf %266, %267 : vector<16x1xf32>
    %269 = vector.broadcast %268 : vector<16x1xf32> to vector<16x32xf32>
    %270 = arith.subf %260, %269 : vector<16x32xf32>
    %271 = arith.mulf %270, %270 : vector<16x32xf32>
    %cst_130 = arith.constant dense<0.000000e+00> : vector<16xf32>
    %272 = vector.multi_reduction <add>, %271, %cst_130 [1] : vector<16x32xf32> to vector<16xf32>
    %273 = vector.shape_cast %272 : vector<16xf32> to vector<16x1xf32>
    %cst_131 = arith.constant 3.200000e+01 : f32
    %274 = vector.broadcast %cst_131 : f32 to vector<16x1xf32>
    %275 = arith.divf %273, %274 : vector<16x1xf32>
    %276 = vector.broadcast %268 : vector<16x1xf32> to vector<16x32xf32>
    %277 = arith.subf %260, %276 : vector<16x32xf32>
    %cst_132 = arith.constant 9.99999974E-6 : f32
    %278 = vector.broadcast %cst_132 : f32 to vector<16x1xf32>
    %279 = arith.addf %275, %278 : vector<16x1xf32>
    %280 = math.rsqrt %279 : vector<16x1xf32>
    %281 = vector.broadcast %280 : vector<16x1xf32> to vector<16x32xf32>
    %282 = arith.mulf %277, %281 : vector<16x32xf32>
    %283 = vector.shape_cast %262 : vector<32xf32> to vector<1x32xf32>
    %284 = vector.broadcast %283 : vector<1x32xf32> to vector<16x32xf32>
    %285 = arith.mulf %282, %284 : vector<16x32xf32>
    %286 = vector.shape_cast %264 : vector<32xf32> to vector<1x32xf32>
    %287 = vector.broadcast %286 : vector<1x32xf32> to vector<16x32xf32>
    %288 = arith.addf %285, %287 : vector<16x32xf32>
    %c1_133 = arith.constant 1 : index
    %c0_134 = arith.constant 0 : index
    %c0_135 = arith.constant 0 : index
    %289 = vector.load %arg7[%c1_133, %c0_134, %c0_135] : memref<2x8x32xf32, #tpu.memory_space<vmem>>, vector<1x8x32xf32>
    %290 = vector.shape_cast %289 : vector<1x8x32xf32> to vector<8x32xf32>
    %291 = arith.truncf %288 : vector<16x32xf32> to vector<16x32xbf16>
    %cst_136 = arith.constant 0.000000e+00 : f32
    %292 = vector.broadcast %cst_136 : f32 to vector<16x32xf32>
    %c12 = arith.constant 12 : index
    %c0_137 = arith.constant 0 : index
    %c0_138 = arith.constant 0 : index
    %293 = vector.load %arg2[%c12, %c0_137, %c0_138] : memref<24x32x8xbf16, #tpu.memory_space<vmem>>, vector<1x32x8xbf16>
    %294 = vector.shape_cast %293 : vector<1x32x8xbf16> to vector<32x8xbf16>
    %cst_139 = arith.constant dense<0.000000e+00> : vector<16x8xf32>
    %295 = tpu.matmul %291, %294, %cst_139 {dimension_numbers = #tpu.dot_dimension_numbers<[1], [0], [0], [1], [0, 0, 1, 1], [], []>} : vector<16x32xbf16>, vector<32x8xbf16>, vector<16x8xf32> -> vector<16x8xf32>
    %c12_140 = arith.constant 12 : index
    %c0_141 = arith.constant 0 : index
    %c0_142 = arith.constant 0 : index
    %296 = vector.load %arg3[%c12_140, %c0_141, %c0_142] : memref<24x1x8xf32, #tpu.memory_space<vmem>>, vector<1x1x8xf32>
    %297 = vector.shape_cast %296 : vector<1x1x8xf32> to vector<1x8xf32>
    %298 = vector.broadcast %297 : vector<1x8xf32> to vector<16x8xf32>
    %299 = arith.addf %295, %298 : vector<16x8xf32>
    %c16 = arith.constant 16 : index
    %c0_143 = arith.constant 0 : index
    %c0_144 = arith.constant 0 : index
    %300 = vector.load %arg2[%c16, %c0_143, %c0_144] : memref<24x32x8xbf16, #tpu.memory_space<vmem>>, vector<1x32x8xbf16>
    %301 = vector.shape_cast %300 : vector<1x32x8xbf16> to vector<32x8xbf16>
    %cst_145 = arith.constant dense<0.000000e+00> : vector<16x8xf32>
    %302 = tpu.matmul %291, %301, %cst_145 {dimension_numbers = #tpu.dot_dimension_numbers<[1], [0], [0], [1], [0, 0, 1, 1], [], []>} : vector<16x32xbf16>, vector<32x8xbf16>, vector<16x8xf32> -> vector<16x8xf32>
    %c16_146 = arith.constant 16 : index
    %c0_147 = arith.constant 0 : index
    %c0_148 = arith.constant 0 : index
    %303 = vector.load %arg3[%c16_146, %c0_147, %c0_148] : memref<24x1x8xf32, #tpu.memory_space<vmem>>, vector<1x1x8xf32>
    %304 = vector.shape_cast %303 : vector<1x1x8xf32> to vector<1x8xf32>
    %305 = vector.broadcast %304 : vector<1x8xf32> to vector<16x8xf32>
    %306 = arith.addf %302, %305 : vector<16x8xf32>
    %c20 = arith.constant 20 : index
    %c0_149 = arith.constant 0 : index
    %c0_150 = arith.constant 0 : index
    %307 = vector.load %arg2[%c20, %c0_149, %c0_150] : memref<24x32x8xbf16, #tpu.memory_space<vmem>>, vector<1x32x8xbf16>
    %308 = vector.shape_cast %307 : vector<1x32x8xbf16> to vector<32x8xbf16>
    %cst_151 = arith.constant dense<0.000000e+00> : vector<16x8xf32>
    %309 = tpu.matmul %291, %308, %cst_151 {dimension_numbers = #tpu.dot_dimension_numbers<[1], [0], [0], [1], [0, 0, 1, 1], [], []>} : vector<16x32xbf16>, vector<32x8xbf16>, vector<16x8xf32> -> vector<16x8xf32>
    %c20_152 = arith.constant 20 : index
    %c0_153 = arith.constant 0 : index
    %c0_154 = arith.constant 0 : index
    %310 = vector.load %arg3[%c20_152, %c0_153, %c0_154] : memref<24x1x8xf32, #tpu.memory_space<vmem>>, vector<1x1x8xf32>
    %311 = vector.shape_cast %310 : vector<1x1x8xf32> to vector<1x8xf32>
    %312 = vector.broadcast %311 : vector<1x8xf32> to vector<16x8xf32>
    %313 = arith.addf %309, %312 : vector<16x8xf32>
    %314 = vector.shape_cast %299 : vector<16x8xf32> to vector<2x8x8xf32>
    %315 = vector.shape_cast %306 : vector<16x8xf32> to vector<2x8x8xf32>
    %316 = vector.shape_cast %313 : vector<16x8xf32> to vector<2x8x8xf32>
    %317 = arith.truncf %314 : vector<2x8x8xf32> to vector<2x8x8xbf16>
    %318 = arith.truncf %315 : vector<2x8x8xf32> to vector<2x8x8xbf16>
    "tpu.trace_start"() <{level = 10 : i32, message = "bsd,btd->bst"}> : () -> ()
    %cst_155 = arith.constant dense<0.000000e+00> : vector<2x8x8xf32>
    %319 = tpu.matmul %317, %318, %cst_155 {dimension_numbers = #tpu.dot_dimension_numbers<[2], [2], [1], [1], [0, 0, 0, 1, 1, 1], [0], [0]>} : vector<2x8x8xbf16>, vector<2x8x8xbf16>, vector<2x8x8xf32> -> vector<2x8x8xf32>
    "tpu.trace_stop"() : () -> ()
    %cst_156 = arith.constant dense<0xFF800000> : vector<2x8xf32>
    %320 = vector.multi_reduction <maximumf>, %319, %cst_156 [2] : vector<2x8x8xf32> to vector<2x8xf32>
    %321 = vector.shape_cast %320 : vector<2x8xf32> to vector<2x8x1xf32>
    %322 = vector.broadcast %321 : vector<2x8x1xf32> to vector<2x8x8xf32>
    %323 = arith.subf %319, %322 : vector<2x8x8xf32>
    %324 = math.exp %323 : vector<2x8x8xf32>
    %cst_157 = arith.constant dense<0.000000e+00> : vector<2x8xf32>
    %325 = vector.multi_reduction <add>, %324, %cst_157 [2] : vector<2x8x8xf32> to vector<2x8xf32>
    %326 = vector.shape_cast %325 : vector<2x8xf32> to vector<2x8x1xf32>
    %327 = tpu.reciprocal %326 {approx = true} : vector<2x8x1xf32> -> vector<2x8x1xf32>
    %328 = arith.mulf %326, %327 : vector<2x8x1xf32>
    %cst_158 = arith.constant 2.000000e+00 : f32
    %329 = vector.broadcast %cst_158 : f32 to vector<2x8x1xf32>
    %330 = arith.subf %329, %328 : vector<2x8x1xf32>
    %331 = arith.mulf %327, %330 : vector<2x8x1xf32>
    %332 = vector.broadcast %331 : vector<2x8x1xf32> to vector<2x8x8xf32>
    %333 = arith.mulf %324, %332 : vector<2x8x8xf32>
    %334 = arith.truncf %333 : vector<2x8x8xf32> to vector<2x8x8xbf16>
    %335 = arith.truncf %316 : vector<2x8x8xf32> to vector<2x8x8xbf16>
    "tpu.trace_start"() <{level = 10 : i32, message = "bst,btd->bsd"}> : () -> ()
    %cst_159 = arith.constant dense<0.000000e+00> : vector<2x8x8xf32>
    %336 = tpu.matmul %334, %335, %cst_159 {dimension_numbers = #tpu.dot_dimension_numbers<[2], [1], [1], [2], [0, 0, 0, 1, 1, 2], [0], [0]>} : vector<2x8x8xbf16>, vector<2x8x8xbf16>, vector<2x8x8xf32> -> vector<2x8x8xf32>
    "tpu.trace_stop"() : () -> ()
    %337 = vector.shape_cast %336 : vector<2x8x8xf32> to vector<16x8xf32>
    %338 = arith.truncf %337 : vector<16x8xf32> to vector<16x8xbf16>
    %c4_160 = arith.constant 4 : index
    %c0_161 = arith.constant 0 : index
    %c0_162 = arith.constant 0 : index
    %339 = vector.load %arg4[%c4_160, %c0_161, %c0_162] : memref<8x8x32xbf16, #tpu.memory_space<vmem>>, vector<1x8x32xbf16>
    %340 = vector.shape_cast %339 : vector<1x8x32xbf16> to vector<8x32xbf16>
    %cst_163 = arith.constant dense<0.000000e+00> : vector<16x32xf32>
    %341 = tpu.matmul %338, %340, %cst_163 {dimension_numbers = #tpu.dot_dimension_numbers<[1], [0], [0], [1], [0, 0, 1, 1], [], []>} : vector<16x8xbf16>, vector<8x32xbf16>, vector<16x32xf32> -> vector<16x32xf32>
    %342 = arith.addf %292, %341 : vector<16x32xf32>
    %c13 = arith.constant 13 : index
    %c0_164 = arith.constant 0 : index
    %c0_165 = arith.constant 0 : index
    %343 = vector.load %arg2[%c13, %c0_164, %c0_165] : memref<24x32x8xbf16, #tpu.memory_space<vmem>>, vector<1x32x8xbf16>
    %344 = vector.shape_cast %343 : vector<1x32x8xbf16> to vector<32x8xbf16>
    %cst_166 = arith.constant dense<0.000000e+00> : vector<16x8xf32>
    %345 = tpu.matmul %291, %344, %cst_166 {dimension_numbers = #tpu.dot_dimension_numbers<[1], [0], [0], [1], [0, 0, 1, 1], [], []>} : vector<16x32xbf16>, vector<32x8xbf16>, vector<16x8xf32> -> vector<16x8xf32>
    %c13_167 = arith.constant 13 : index
    %c0_168 = arith.constant 0 : index
    %c0_169 = arith.constant 0 : index
    %346 = vector.load %arg3[%c13_167, %c0_168, %c0_169] : memref<24x1x8xf32, #tpu.memory_space<vmem>>, vector<1x1x8xf32>
    %347 = vector.shape_cast %346 : vector<1x1x8xf32> to vector<1x8xf32>
    %348 = vector.broadcast %347 : vector<1x8xf32> to vector<16x8xf32>
    %349 = arith.addf %345, %348 : vector<16x8xf32>
    %c17 = arith.constant 17 : index
    %c0_170 = arith.constant 0 : index
    %c0_171 = arith.constant 0 : index
    %350 = vector.load %arg2[%c17, %c0_170, %c0_171] : memref<24x32x8xbf16, #tpu.memory_space<vmem>>, vector<1x32x8xbf16>
    %351 = vector.shape_cast %350 : vector<1x32x8xbf16> to vector<32x8xbf16>
    %cst_172 = arith.constant dense<0.000000e+00> : vector<16x8xf32>
    %352 = tpu.matmul %291, %351, %cst_172 {dimension_numbers = #tpu.dot_dimension_numbers<[1], [0], [0], [1], [0, 0, 1, 1], [], []>} : vector<16x32xbf16>, vector<32x8xbf16>, vector<16x8xf32> -> vector<16x8xf32>
    %c17_173 = arith.constant 17 : index
    %c0_174 = arith.constant 0 : index
    %c0_175 = arith.constant 0 : index
    %353 = vector.load %arg3[%c17_173, %c0_174, %c0_175] : memref<24x1x8xf32, #tpu.memory_space<vmem>>, vector<1x1x8xf32>
    %354 = vector.shape_cast %353 : vector<1x1x8xf32> to vector<1x8xf32>
    %355 = vector.broadcast %354 : vector<1x8xf32> to vector<16x8xf32>
    %356 = arith.addf %352, %355 : vector<16x8xf32>
    %c21 = arith.constant 21 : index
    %c0_176 = arith.constant 0 : index
    %c0_177 = arith.constant 0 : index
    %357 = vector.load %arg2[%c21, %c0_176, %c0_177] : memref<24x32x8xbf16, #tpu.memory_space<vmem>>, vector<1x32x8xbf16>
    %358 = vector.shape_cast %357 : vector<1x32x8xbf16> to vector<32x8xbf16>
    %cst_178 = arith.constant dense<0.000000e+00> : vector<16x8xf32>
    %359 = tpu.matmul %291, %358, %cst_178 {dimension_numbers = #tpu.dot_dimension_numbers<[1], [0], [0], [1], [0, 0, 1, 1], [], []>} : vector<16x32xbf16>, vector<32x8xbf16>, vector<16x8xf32> -> vector<16x8xf32>
    %c21_179 = arith.constant 21 : index
    %c0_180 = arith.constant 0 : index
    %c0_181 = arith.constant 0 : index
    %360 = vector.load %arg3[%c21_179, %c0_180, %c0_181] : memref<24x1x8xf32, #tpu.memory_space<vmem>>, vector<1x1x8xf32>
    %361 = vector.shape_cast %360 : vector<1x1x8xf32> to vector<1x8xf32>
    %362 = vector.broadcast %361 : vector<1x8xf32> to vector<16x8xf32>
    %363 = arith.addf %359, %362 : vector<16x8xf32>
    %364 = vector.shape_cast %349 : vector<16x8xf32> to vector<2x8x8xf32>
    %365 = vector.shape_cast %356 : vector<16x8xf32> to vector<2x8x8xf32>
    %366 = vector.shape_cast %363 : vector<16x8xf32> to vector<2x8x8xf32>
    %367 = arith.truncf %364 : vector<2x8x8xf32> to vector<2x8x8xbf16>
    %368 = arith.truncf %365 : vector<2x8x8xf32> to vector<2x8x8xbf16>
    "tpu.trace_start"() <{level = 10 : i32, message = "bsd,btd->bst"}> : () -> ()
    %cst_182 = arith.constant dense<0.000000e+00> : vector<2x8x8xf32>
    %369 = tpu.matmul %367, %368, %cst_182 {dimension_numbers = #tpu.dot_dimension_numbers<[2], [2], [1], [1], [0, 0, 0, 1, 1, 1], [0], [0]>} : vector<2x8x8xbf16>, vector<2x8x8xbf16>, vector<2x8x8xf32> -> vector<2x8x8xf32>
    "tpu.trace_stop"() : () -> ()
    %cst_183 = arith.constant dense<0xFF800000> : vector<2x8xf32>
    %370 = vector.multi_reduction <maximumf>, %369, %cst_183 [2] : vector<2x8x8xf32> to vector<2x8xf32>
    %371 = vector.shape_cast %370 : vector<2x8xf32> to vector<2x8x1xf32>
    %372 = vector.broadcast %371 : vector<2x8x1xf32> to vector<2x8x8xf32>
    %373 = arith.subf %369, %372 : vector<2x8x8xf32>
    %374 = math.exp %373 : vector<2x8x8xf32>
    %cst_184 = arith.constant dense<0.000000e+00> : vector<2x8xf32>
    %375 = vector.multi_reduction <add>, %374, %cst_184 [2] : vector<2x8x8xf32> to vector<2x8xf32>
    %376 = vector.shape_cast %375 : vector<2x8xf32> to vector<2x8x1xf32>
    %377 = tpu.reciprocal %376 {approx = true} : vector<2x8x1xf32> -> vector<2x8x1xf32>
    %378 = arith.mulf %376, %377 : vector<2x8x1xf32>
    %cst_185 = arith.constant 2.000000e+00 : f32
    %379 = vector.broadcast %cst_185 : f32 to vector<2x8x1xf32>
    %380 = arith.subf %379, %378 : vector<2x8x1xf32>
    %381 = arith.mulf %377, %380 : vector<2x8x1xf32>
    %382 = vector.broadcast %381 : vector<2x8x1xf32> to vector<2x8x8xf32>
    %383 = arith.mulf %374, %382 : vector<2x8x8xf32>
    %384 = arith.truncf %383 : vector<2x8x8xf32> to vector<2x8x8xbf16>
    %385 = arith.truncf %366 : vector<2x8x8xf32> to vector<2x8x8xbf16>
    "tpu.trace_start"() <{level = 10 : i32, message = "bst,btd->bsd"}> : () -> ()
    %cst_186 = arith.constant dense<0.000000e+00> : vector<2x8x8xf32>
    %386 = tpu.matmul %384, %385, %cst_186 {dimension_numbers = #tpu.dot_dimension_numbers<[2], [1], [1], [2], [0, 0, 0, 1, 1, 2], [0], [0]>} : vector<2x8x8xbf16>, vector<2x8x8xbf16>, vector<2x8x8xf32> -> vector<2x8x8xf32>
    "tpu.trace_stop"() : () -> ()
    %387 = vector.shape_cast %386 : vector<2x8x8xf32> to vector<16x8xf32>
    %388 = arith.truncf %387 : vector<16x8xf32> to vector<16x8xbf16>
    %c5_187 = arith.constant 5 : index
    %c0_188 = arith.constant 0 : index
    %c0_189 = arith.constant 0 : index
    %389 = vector.load %arg4[%c5_187, %c0_188, %c0_189] : memref<8x8x32xbf16, #tpu.memory_space<vmem>>, vector<1x8x32xbf16>
    %390 = vector.shape_cast %389 : vector<1x8x32xbf16> to vector<8x32xbf16>
    %cst_190 = arith.constant dense<0.000000e+00> : vector<16x32xf32>
    %391 = tpu.matmul %388, %390, %cst_190 {dimension_numbers = #tpu.dot_dimension_numbers<[1], [0], [0], [1], [0, 0, 1, 1], [], []>} : vector<16x8xbf16>, vector<8x32xbf16>, vector<16x32xf32> -> vector<16x32xf32>
    %392 = arith.addf %342, %391 : vector<16x32xf32>
    %c14 = arith.constant 14 : index
    %c0_191 = arith.constant 0 : index
    %c0_192 = arith.constant 0 : index
    %393 = vector.load %arg2[%c14, %c0_191, %c0_192] : memref<24x32x8xbf16, #tpu.memory_space<vmem>>, vector<1x32x8xbf16>
    %394 = vector.shape_cast %393 : vector<1x32x8xbf16> to vector<32x8xbf16>
    %cst_193 = arith.constant dense<0.000000e+00> : vector<16x8xf32>
    %395 = tpu.matmul %291, %394, %cst_193 {dimension_numbers = #tpu.dot_dimension_numbers<[1], [0], [0], [1], [0, 0, 1, 1], [], []>} : vector<16x32xbf16>, vector<32x8xbf16>, vector<16x8xf32> -> vector<16x8xf32>
    %c14_194 = arith.constant 14 : index
    %c0_195 = arith.constant 0 : index
    %c0_196 = arith.constant 0 : index
    %396 = vector.load %arg3[%c14_194, %c0_195, %c0_196] : memref<24x1x8xf32, #tpu.memory_space<vmem>>, vector<1x1x8xf32>
    %397 = vector.shape_cast %396 : vector<1x1x8xf32> to vector<1x8xf32>
    %398 = vector.broadcast %397 : vector<1x8xf32> to vector<16x8xf32>
    %399 = arith.addf %395, %398 : vector<16x8xf32>
    %c18 = arith.constant 18 : index
    %c0_197 = arith.constant 0 : index
    %c0_198 = arith.constant 0 : index
    %400 = vector.load %arg2[%c18, %c0_197, %c0_198] : memref<24x32x8xbf16, #tpu.memory_space<vmem>>, vector<1x32x8xbf16>
    %401 = vector.shape_cast %400 : vector<1x32x8xbf16> to vector<32x8xbf16>
    %cst_199 = arith.constant dense<0.000000e+00> : vector<16x8xf32>
    %402 = tpu.matmul %291, %401, %cst_199 {dimension_numbers = #tpu.dot_dimension_numbers<[1], [0], [0], [1], [0, 0, 1, 1], [], []>} : vector<16x32xbf16>, vector<32x8xbf16>, vector<16x8xf32> -> vector<16x8xf32>
    %c18_200 = arith.constant 18 : index
    %c0_201 = arith.constant 0 : index
    %c0_202 = arith.constant 0 : index
    %403 = vector.load %arg3[%c18_200, %c0_201, %c0_202] : memref<24x1x8xf32, #tpu.memory_space<vmem>>, vector<1x1x8xf32>
    %404 = vector.shape_cast %403 : vector<1x1x8xf32> to vector<1x8xf32>
    %405 = vector.broadcast %404 : vector<1x8xf32> to vector<16x8xf32>
    %406 = arith.addf %402, %405 : vector<16x8xf32>
    %c22 = arith.constant 22 : index
    %c0_203 = arith.constant 0 : index
    %c0_204 = arith.constant 0 : index
    %407 = vector.load %arg2[%c22, %c0_203, %c0_204] : memref<24x32x8xbf16, #tpu.memory_space<vmem>>, vector<1x32x8xbf16>
    %408 = vector.shape_cast %407 : vector<1x32x8xbf16> to vector<32x8xbf16>
    %cst_205 = arith.constant dense<0.000000e+00> : vector<16x8xf32>
    %409 = tpu.matmul %291, %408, %cst_205 {dimension_numbers = #tpu.dot_dimension_numbers<[1], [0], [0], [1], [0, 0, 1, 1], [], []>} : vector<16x32xbf16>, vector<32x8xbf16>, vector<16x8xf32> -> vector<16x8xf32>
    %c22_206 = arith.constant 22 : index
    %c0_207 = arith.constant 0 : index
    %c0_208 = arith.constant 0 : index
    %410 = vector.load %arg3[%c22_206, %c0_207, %c0_208] : memref<24x1x8xf32, #tpu.memory_space<vmem>>, vector<1x1x8xf32>
    %411 = vector.shape_cast %410 : vector<1x1x8xf32> to vector<1x8xf32>
    %412 = vector.broadcast %411 : vector<1x8xf32> to vector<16x8xf32>
    %413 = arith.addf %409, %412 : vector<16x8xf32>
    %414 = vector.shape_cast %399 : vector<16x8xf32> to vector<2x8x8xf32>
    %415 = vector.shape_cast %406 : vector<16x8xf32> to vector<2x8x8xf32>
    %416 = vector.shape_cast %413 : vector<16x8xf32> to vector<2x8x8xf32>
    %417 = arith.truncf %414 : vector<2x8x8xf32> to vector<2x8x8xbf16>
    %418 = arith.truncf %415 : vector<2x8x8xf32> to vector<2x8x8xbf16>
    "tpu.trace_start"() <{level = 10 : i32, message = "bsd,btd->bst"}> : () -> ()
    %cst_209 = arith.constant dense<0.000000e+00> : vector<2x8x8xf32>
    %419 = tpu.matmul %417, %418, %cst_209 {dimension_numbers = #tpu.dot_dimension_numbers<[2], [2], [1], [1], [0, 0, 0, 1, 1, 1], [0], [0]>} : vector<2x8x8xbf16>, vector<2x8x8xbf16>, vector<2x8x8xf32> -> vector<2x8x8xf32>
    "tpu.trace_stop"() : () -> ()
    %cst_210 = arith.constant dense<0xFF800000> : vector<2x8xf32>
    %420 = vector.multi_reduction <maximumf>, %419, %cst_210 [2] : vector<2x8x8xf32> to vector<2x8xf32>
    %421 = vector.shape_cast %420 : vector<2x8xf32> to vector<2x8x1xf32>
    %422 = vector.broadcast %421 : vector<2x8x1xf32> to vector<2x8x8xf32>
    %423 = arith.subf %419, %422 : vector<2x8x8xf32>
    %424 = math.exp %423 : vector<2x8x8xf32>
    %cst_211 = arith.constant dense<0.000000e+00> : vector<2x8xf32>
    %425 = vector.multi_reduction <add>, %424, %cst_211 [2] : vector<2x8x8xf32> to vector<2x8xf32>
    %426 = vector.shape_cast %425 : vector<2x8xf32> to vector<2x8x1xf32>
    %427 = tpu.reciprocal %426 {approx = true} : vector<2x8x1xf32> -> vector<2x8x1xf32>
    %428 = arith.mulf %426, %427 : vector<2x8x1xf32>
    %cst_212 = arith.constant 2.000000e+00 : f32
    %429 = vector.broadcast %cst_212 : f32 to vector<2x8x1xf32>
    %430 = arith.subf %429, %428 : vector<2x8x1xf32>
    %431 = arith.mulf %427, %430 : vector<2x8x1xf32>
    %432 = vector.broadcast %431 : vector<2x8x1xf32> to vector<2x8x8xf32>
    %433 = arith.mulf %424, %432 : vector<2x8x8xf32>
    %434 = arith.truncf %433 : vector<2x8x8xf32> to vector<2x8x8xbf16>
    %435 = arith.truncf %416 : vector<2x8x8xf32> to vector<2x8x8xbf16>
    "tpu.trace_start"() <{level = 10 : i32, message = "bst,btd->bsd"}> : () -> ()
    %cst_213 = arith.constant dense<0.000000e+00> : vector<2x8x8xf32>
    %436 = tpu.matmul %434, %435, %cst_213 {dimension_numbers = #tpu.dot_dimension_numbers<[2], [1], [1], [2], [0, 0, 0, 1, 1, 2], [0], [0]>} : vector<2x8x8xbf16>, vector<2x8x8xbf16>, vector<2x8x8xf32> -> vector<2x8x8xf32>
    "tpu.trace_stop"() : () -> ()
    %437 = vector.shape_cast %436 : vector<2x8x8xf32> to vector<16x8xf32>
    %438 = arith.truncf %437 : vector<16x8xf32> to vector<16x8xbf16>
    %c6_214 = arith.constant 6 : index
    %c0_215 = arith.constant 0 : index
    %c0_216 = arith.constant 0 : index
    %439 = vector.load %arg4[%c6_214, %c0_215, %c0_216] : memref<8x8x32xbf16, #tpu.memory_space<vmem>>, vector<1x8x32xbf16>
    %440 = vector.shape_cast %439 : vector<1x8x32xbf16> to vector<8x32xbf16>
    %cst_217 = arith.constant dense<0.000000e+00> : vector<16x32xf32>
    %441 = tpu.matmul %438, %440, %cst_217 {dimension_numbers = #tpu.dot_dimension_numbers<[1], [0], [0], [1], [0, 0, 1, 1], [], []>} : vector<16x8xbf16>, vector<8x32xbf16>, vector<16x32xf32> -> vector<16x32xf32>
    %442 = arith.addf %392, %441 : vector<16x32xf32>
    %c15 = arith.constant 15 : index
    %c0_218 = arith.constant 0 : index
    %c0_219 = arith.constant 0 : index
    %443 = vector.load %arg2[%c15, %c0_218, %c0_219] : memref<24x32x8xbf16, #tpu.memory_space<vmem>>, vector<1x32x8xbf16>
    %444 = vector.shape_cast %443 : vector<1x32x8xbf16> to vector<32x8xbf16>
    %cst_220 = arith.constant dense<0.000000e+00> : vector<16x8xf32>
    %445 = tpu.matmul %291, %444, %cst_220 {dimension_numbers = #tpu.dot_dimension_numbers<[1], [0], [0], [1], [0, 0, 1, 1], [], []>} : vector<16x32xbf16>, vector<32x8xbf16>, vector<16x8xf32> -> vector<16x8xf32>
    %c15_221 = arith.constant 15 : index
    %c0_222 = arith.constant 0 : index
    %c0_223 = arith.constant 0 : index
    %446 = vector.load %arg3[%c15_221, %c0_222, %c0_223] : memref<24x1x8xf32, #tpu.memory_space<vmem>>, vector<1x1x8xf32>
    %447 = vector.shape_cast %446 : vector<1x1x8xf32> to vector<1x8xf32>
    %448 = vector.broadcast %447 : vector<1x8xf32> to vector<16x8xf32>
    %449 = arith.addf %445, %448 : vector<16x8xf32>
    %c19 = arith.constant 19 : index
    %c0_224 = arith.constant 0 : index
    %c0_225 = arith.constant 0 : index
    %450 = vector.load %arg2[%c19, %c0_224, %c0_225] : memref<24x32x8xbf16, #tpu.memory_space<vmem>>, vector<1x32x8xbf16>
    %451 = vector.shape_cast %450 : vector<1x32x8xbf16> to vector<32x8xbf16>
    %cst_226 = arith.constant dense<0.000000e+00> : vector<16x8xf32>
    %452 = tpu.matmul %291, %451, %cst_226 {dimension_numbers = #tpu.dot_dimension_numbers<[1], [0], [0], [1], [0, 0, 1, 1], [], []>} : vector<16x32xbf16>, vector<32x8xbf16>, vector<16x8xf32> -> vector<16x8xf32>
    %c19_227 = arith.constant 19 : index
    %c0_228 = arith.constant 0 : index
    %c0_229 = arith.constant 0 : index
    %453 = vector.load %arg3[%c19_227, %c0_228, %c0_229] : memref<24x1x8xf32, #tpu.memory_space<vmem>>, vector<1x1x8xf32>
    %454 = vector.shape_cast %453 : vector<1x1x8xf32> to vector<1x8xf32>
    %455 = vector.broadcast %454 : vector<1x8xf32> to vector<16x8xf32>
    %456 = arith.addf %452, %455 : vector<16x8xf32>
    %c23 = arith.constant 23 : index
    %c0_230 = arith.constant 0 : index
    %c0_231 = arith.constant 0 : index
    %457 = vector.load %arg2[%c23, %c0_230, %c0_231] : memref<24x32x8xbf16, #tpu.memory_space<vmem>>, vector<1x32x8xbf16>
    %458 = vector.shape_cast %457 : vector<1x32x8xbf16> to vector<32x8xbf16>
    %cst_232 = arith.constant dense<0.000000e+00> : vector<16x8xf32>
    %459 = tpu.matmul %291, %458, %cst_232 {dimension_numbers = #tpu.dot_dimension_numbers<[1], [0], [0], [1], [0, 0, 1, 1], [], []>} : vector<16x32xbf16>, vector<32x8xbf16>, vector<16x8xf32> -> vector<16x8xf32>
    %c23_233 = arith.constant 23 : index
    %c0_234 = arith.constant 0 : index
    %c0_235 = arith.constant 0 : index
    %460 = vector.load %arg3[%c23_233, %c0_234, %c0_235] : memref<24x1x8xf32, #tpu.memory_space<vmem>>, vector<1x1x8xf32>
    %461 = vector.shape_cast %460 : vector<1x1x8xf32> to vector<1x8xf32>
    %462 = vector.broadcast %461 : vector<1x8xf32> to vector<16x8xf32>
    %463 = arith.addf %459, %462 : vector<16x8xf32>
    %464 = vector.shape_cast %449 : vector<16x8xf32> to vector<2x8x8xf32>
    %465 = vector.shape_cast %456 : vector<16x8xf32> to vector<2x8x8xf32>
    %466 = vector.shape_cast %463 : vector<16x8xf32> to vector<2x8x8xf32>
    %467 = arith.truncf %464 : vector<2x8x8xf32> to vector<2x8x8xbf16>
    %468 = arith.truncf %465 : vector<2x8x8xf32> to vector<2x8x8xbf16>
    "tpu.trace_start"() <{level = 10 : i32, message = "bsd,btd->bst"}> : () -> ()
    %cst_236 = arith.constant dense<0.000000e+00> : vector<2x8x8xf32>
    %469 = tpu.matmul %467, %468, %cst_236 {dimension_numbers = #tpu.dot_dimension_numbers<[2], [2], [1], [1], [0, 0, 0, 1, 1, 1], [0], [0]>} : vector<2x8x8xbf16>, vector<2x8x8xbf16>, vector<2x8x8xf32> -> vector<2x8x8xf32>
    "tpu.trace_stop"() : () -> ()
    %cst_237 = arith.constant dense<0xFF800000> : vector<2x8xf32>
    %470 = vector.multi_reduction <maximumf>, %469, %cst_237 [2] : vector<2x8x8xf32> to vector<2x8xf32>
    %471 = vector.shape_cast %470 : vector<2x8xf32> to vector<2x8x1xf32>
    %472 = vector.broadcast %471 : vector<2x8x1xf32> to vector<2x8x8xf32>
    %473 = arith.subf %469, %472 : vector<2x8x8xf32>
    %474 = math.exp %473 : vector<2x8x8xf32>
    %cst_238 = arith.constant dense<0.000000e+00> : vector<2x8xf32>
    %475 = vector.multi_reduction <add>, %474, %cst_238 [2] : vector<2x8x8xf32> to vector<2x8xf32>
    %476 = vector.shape_cast %475 : vector<2x8xf32> to vector<2x8x1xf32>
    %477 = tpu.reciprocal %476 {approx = true} : vector<2x8x1xf32> -> vector<2x8x1xf32>
    %478 = arith.mulf %476, %477 : vector<2x8x1xf32>
    %cst_239 = arith.constant 2.000000e+00 : f32
    %479 = vector.broadcast %cst_239 : f32 to vector<2x8x1xf32>
    %480 = arith.subf %479, %478 : vector<2x8x1xf32>
    %481 = arith.mulf %477, %480 : vector<2x8x1xf32>
    %482 = vector.broadcast %481 : vector<2x8x1xf32> to vector<2x8x8xf32>
    %483 = arith.mulf %474, %482 : vector<2x8x8xf32>
    %484 = arith.truncf %483 : vector<2x8x8xf32> to vector<2x8x8xbf16>
    %485 = arith.truncf %466 : vector<2x8x8xf32> to vector<2x8x8xbf16>
    "tpu.trace_start"() <{level = 10 : i32, message = "bst,btd->bsd"}> : () -> ()
    %cst_240 = arith.constant dense<0.000000e+00> : vector<2x8x8xf32>
    %486 = tpu.matmul %484, %485, %cst_240 {dimension_numbers = #tpu.dot_dimension_numbers<[2], [1], [1], [2], [0, 0, 0, 1, 1, 2], [0], [0]>} : vector<2x8x8xbf16>, vector<2x8x8xbf16>, vector<2x8x8xf32> -> vector<2x8x8xf32>
    "tpu.trace_stop"() : () -> ()
    %487 = vector.shape_cast %486 : vector<2x8x8xf32> to vector<16x8xf32>
    %488 = arith.truncf %487 : vector<16x8xf32> to vector<16x8xbf16>
    %c7_241 = arith.constant 7 : index
    %c0_242 = arith.constant 0 : index
    %c0_243 = arith.constant 0 : index
    %489 = vector.load %arg4[%c7_241, %c0_242, %c0_243] : memref<8x8x32xbf16, #tpu.memory_space<vmem>>, vector<1x8x32xbf16>
    %490 = vector.shape_cast %489 : vector<1x8x32xbf16> to vector<8x32xbf16>
    %cst_244 = arith.constant dense<0.000000e+00> : vector<16x32xf32>
    %491 = tpu.matmul %488, %490, %cst_244 {dimension_numbers = #tpu.dot_dimension_numbers<[1], [0], [0], [1], [0, 0, 1, 1], [], []>} : vector<16x8xbf16>, vector<8x32xbf16>, vector<16x32xf32> -> vector<16x32xf32>
    %492 = arith.addf %442, %491 : vector<16x32xf32>
    %493 = vector.extract_strided_slice %290 {offsets = [0, 0], sizes = [1, 32], strides = [1, 1]} : vector<8x32xf32> to vector<1x32xf32>
    %494 = vector.shape_cast %493 : vector<1x32xf32> to vector<32xf32>
    %495 = vector.shape_cast %494 : vector<32xf32> to vector<1x32xf32>
    %496 = vector.broadcast %495 : vector<1x32xf32> to vector<16x32xf32>
    %497 = arith.addf %492, %496 : vector<16x32xf32>
    %498 = arith.addf %288, %497 : vector<16x32xf32>
    %499 = vector.extract_strided_slice %290 {offsets = [1, 0], sizes = [1, 32], strides = [1, 1]} : vector<8x32xf32> to vector<1x32xf32>
    %500 = vector.shape_cast %499 : vector<1x32xf32> to vector<32xf32>
    %501 = vector.extract_strided_slice %290 {offsets = [2, 0], sizes = [1, 32], strides = [1, 1]} : vector<8x32xf32> to vector<1x32xf32>
    %502 = vector.shape_cast %501 : vector<1x32xf32> to vector<32xf32>
    %cst_245 = arith.constant dense<0.000000e+00> : vector<16xf32>
    %503 = vector.multi_reduction <add>, %498, %cst_245 [1] : vector<16x32xf32> to vector<16xf32>
    %504 = vector.shape_cast %503 : vector<16xf32> to vector<16x1xf32>
    %cst_246 = arith.constant 3.200000e+01 : f32
    %505 = vector.broadcast %cst_246 : f32 to vector<16x1xf32>
    %506 = arith.divf %504, %505 : vector<16x1xf32>
    %507 = vector.broadcast %506 : vector<16x1xf32> to vector<16x32xf32>
    %508 = arith.subf %498, %507 : vector<16x32xf32>
    %509 = arith.mulf %508, %508 : vector<16x32xf32>
    %cst_247 = arith.constant dense<0.000000e+00> : vector<16xf32>
    %510 = vector.multi_reduction <add>, %509, %cst_247 [1] : vector<16x32xf32> to vector<16xf32>
    %511 = vector.shape_cast %510 : vector<16xf32> to vector<16x1xf32>
    %cst_248 = arith.constant 3.200000e+01 : f32
    %512 = vector.broadcast %cst_248 : f32 to vector<16x1xf32>
    %513 = arith.divf %511, %512 : vector<16x1xf32>
    %514 = vector.broadcast %506 : vector<16x1xf32> to vector<16x32xf32>
    %515 = arith.subf %498, %514 : vector<16x32xf32>
    %cst_249 = arith.constant 9.99999974E-6 : f32
    %516 = vector.broadcast %cst_249 : f32 to vector<16x1xf32>
    %517 = arith.addf %513, %516 : vector<16x1xf32>
    %518 = math.rsqrt %517 : vector<16x1xf32>
    %519 = vector.broadcast %518 : vector<16x1xf32> to vector<16x32xf32>
    %520 = arith.mulf %515, %519 : vector<16x32xf32>
    %521 = vector.shape_cast %500 : vector<32xf32> to vector<1x32xf32>
    %522 = vector.broadcast %521 : vector<1x32xf32> to vector<16x32xf32>
    %523 = arith.mulf %520, %522 : vector<16x32xf32>
    %524 = vector.shape_cast %502 : vector<32xf32> to vector<1x32xf32>
    %525 = vector.broadcast %524 : vector<1x32xf32> to vector<16x32xf32>
    %526 = arith.addf %523, %525 : vector<16x32xf32>
    %527 = arith.truncf %526 : vector<16x32xf32> to vector<16x32xbf16>
    %c1_250 = arith.constant 1 : index
    %c0_251 = arith.constant 0 : index
    %c0_252 = arith.constant 0 : index
    %528 = vector.load %arg5[%c1_250, %c0_251, %c0_252] : memref<2x32x32xbf16, #tpu.memory_space<vmem>>, vector<1x32x32xbf16>
    %529 = vector.shape_cast %528 : vector<1x32x32xbf16> to vector<32x32xbf16>
    %cst_253 = arith.constant dense<0.000000e+00> : vector<16x32xf32>
    %530 = tpu.matmul %527, %529, %cst_253 {dimension_numbers = #tpu.dot_dimension_numbers<[1], [0], [0], [1], [0, 0, 1, 1], [], []>} : vector<16x32xbf16>, vector<32x32xbf16>, vector<16x32xf32> -> vector<16x32xf32>
    %531 = vector.extract_strided_slice %290 {offsets = [3, 0], sizes = [1, 32], strides = [1, 1]} : vector<8x32xf32> to vector<1x32xf32>
    %532 = vector.shape_cast %531 : vector<1x32xf32> to vector<32xf32>
    %533 = vector.shape_cast %532 : vector<32xf32> to vector<1x32xf32>
    %534 = vector.broadcast %533 : vector<1x32xf32> to vector<16x32xf32>
    %535 = arith.addf %530, %534 : vector<16x32xf32>
    %cst_254 = arith.constant 0.000000e+00 : f32
    %536 = vector.broadcast %cst_254 : f32 to vector<16x32xf32>
    %537 = arith.maximumf %535, %536 : vector<16x32xf32>
    %538 = arith.truncf %537 : vector<16x32xf32> to vector<16x32xbf16>
    %c1_255 = arith.constant 1 : index
    %c0_256 = arith.constant 0 : index
    %c0_257 = arith.constant 0 : index
    %539 = vector.load %arg6[%c1_255, %c0_256, %c0_257] : memref<2x32x32xbf16, #tpu.memory_space<vmem>>, vector<1x32x32xbf16>
    %540 = vector.shape_cast %539 : vector<1x32x32xbf16> to vector<32x32xbf16>
    %cst_258 = arith.constant dense<0.000000e+00> : vector<16x32xf32>
    %541 = tpu.matmul %538, %540, %cst_258 {dimension_numbers = #tpu.dot_dimension_numbers<[1], [0], [0], [1], [0, 0, 1, 1], [], []>} : vector<16x32xbf16>, vector<32x32xbf16>, vector<16x32xf32> -> vector<16x32xf32>
    %542 = vector.extract_strided_slice %290 {offsets = [4, 0], sizes = [1, 32], strides = [1, 1]} : vector<8x32xf32> to vector<1x32xf32>
    %543 = vector.shape_cast %542 : vector<1x32xf32> to vector<32xf32>
    %544 = vector.shape_cast %543 : vector<32xf32> to vector<1x32xf32>
    %545 = vector.broadcast %544 : vector<1x32xf32> to vector<16x32xf32>
    %546 = arith.addf %541, %545 : vector<16x32xf32>
    %547 = arith.addf %526, %546 : vector<16x32xf32>
    %548 = vector.extract_strided_slice %290 {offsets = [5, 0], sizes = [1, 32], strides = [1, 1]} : vector<8x32xf32> to vector<1x32xf32>
    %549 = vector.shape_cast %548 : vector<1x32xf32> to vector<32xf32>
    %550 = vector.extract_strided_slice %290 {offsets = [6, 0], sizes = [1, 32], strides = [1, 1]} : vector<8x32xf32> to vector<1x32xf32>
    %551 = vector.shape_cast %550 : vector<1x32xf32> to vector<32xf32>
    %cst_259 = arith.constant dense<0.000000e+00> : vector<16xf32>
    %552 = vector.multi_reduction <add>, %547, %cst_259 [1] : vector<16x32xf32> to vector<16xf32>
    %553 = vector.shape_cast %552 : vector<16xf32> to vector<16x1xf32>
    %cst_260 = arith.constant 3.200000e+01 : f32
    %554 = vector.broadcast %cst_260 : f32 to vector<16x1xf32>
    %555 = arith.divf %553, %554 : vector<16x1xf32>
    %556 = vector.broadcast %555 : vector<16x1xf32> to vector<16x32xf32>
    %557 = arith.subf %547, %556 : vector<16x32xf32>
    %558 = arith.mulf %557, %557 : vector<16x32xf32>
    %cst_261 = arith.constant dense<0.000000e+00> : vector<16xf32>
    %559 = vector.multi_reduction <add>, %558, %cst_261 [1] : vector<16x32xf32> to vector<16xf32>
    %560 = vector.shape_cast %559 : vector<16xf32> to vector<16x1xf32>
    %cst_262 = arith.constant 3.200000e+01 : f32
    %561 = vector.broadcast %cst_262 : f32 to vector<16x1xf32>
    %562 = arith.divf %560, %561 : vector<16x1xf32>
    %563 = vector.broadcast %555 : vector<16x1xf32> to vector<16x32xf32>
    %564 = arith.subf %547, %563 : vector<16x32xf32>
    %cst_263 = arith.constant 9.99999974E-6 : f32
    %565 = vector.broadcast %cst_263 : f32 to vector<16x1xf32>
    %566 = arith.addf %562, %565 : vector<16x1xf32>
    %567 = math.rsqrt %566 : vector<16x1xf32>
    %568 = vector.broadcast %567 : vector<16x1xf32> to vector<16x32xf32>
    %569 = arith.mulf %564, %568 : vector<16x32xf32>
    %570 = vector.shape_cast %549 : vector<32xf32> to vector<1x32xf32>
    %571 = vector.broadcast %570 : vector<1x32xf32> to vector<16x32xf32>
    %572 = arith.mulf %569, %571 : vector<16x32xf32>
    %573 = vector.shape_cast %551 : vector<32xf32> to vector<1x32xf32>
    %574 = vector.broadcast %573 : vector<1x32xf32> to vector<16x32xf32>
    %575 = arith.addf %572, %574 : vector<16x32xf32>
    %576 = vector.shape_cast %575 : vector<16x32xf32> to vector<2x8x32xf32>
    %cst_264 = arith.constant dense<0.000000e+00> : vector<2x32xf32>
    %577 = vector.multi_reduction <add>, %576, %cst_264 [1] : vector<2x8x32xf32> to vector<2x32xf32>
    %c0_265 = arith.constant 0 : index
    %c0_266 = arith.constant 0 : index
    %578 = vector.load %arg9[%c0_265, %c0_266] : memref<8x32xf32, #tpu.memory_space<vmem>>, vector<8x32xf32>
    %579 = arith.truncf %577 : vector<2x32xf32> to vector<2x32xbf16>
    %c0_267 = arith.constant 0 : index
    %c0_268 = arith.constant 0 : index
    %580 = vector.load %arg8[%c0_267, %c0_268] : memref<32x32xbf16, #tpu.memory_space<vmem>>, vector<32x32xbf16>
    %cst_269 = arith.constant dense<0.000000e+00> : vector<2x32xf32>
    %581 = tpu.matmul %579, %580, %cst_269 {dimension_numbers = #tpu.dot_dimension_numbers<[1], [0], [0], [1], [0, 0, 1, 1], [], []>} : vector<2x32xbf16>, vector<32x32xbf16>, vector<2x32xf32> -> vector<2x32xf32>
    %582 = vector.extract_strided_slice %578 {offsets = [0, 0], sizes = [1, 32], strides = [1, 1]} : vector<8x32xf32> to vector<1x32xf32>
    %583 = vector.shape_cast %582 : vector<1x32xf32> to vector<32xf32>
    %584 = vector.shape_cast %583 : vector<32xf32> to vector<1x32xf32>
    %585 = vector.broadcast %584 : vector<1x32xf32> to vector<2x32xf32>
    %586 = arith.addf %581, %585 : vector<2x32xf32>
    %cst_270 = arith.constant 0.000000e+00 : f32
    %587 = vector.broadcast %cst_270 : f32 to vector<2x32xf32>
    %588 = arith.maximumf %586, %587 : vector<2x32xf32>
    %589 = vector.extract_strided_slice %578 {offsets = [1, 0], sizes = [1, 32], strides = [1, 1]} : vector<8x32xf32> to vector<1x32xf32>
    %590 = vector.shape_cast %589 : vector<1x32xf32> to vector<32xf32>
    %591 = vector.extract_strided_slice %578 {offsets = [2, 0], sizes = [1, 32], strides = [1, 1]} : vector<8x32xf32> to vector<1x32xf32>
    %592 = vector.shape_cast %591 : vector<1x32xf32> to vector<32xf32>
    %cst_271 = arith.constant dense<0.000000e+00> : vector<2xf32>
    %593 = vector.multi_reduction <add>, %588, %cst_271 [1] : vector<2x32xf32> to vector<2xf32>
    %594 = vector.shape_cast %593 : vector<2xf32> to vector<2x1xf32>
    %cst_272 = arith.constant 3.200000e+01 : f32
    %595 = vector.broadcast %cst_272 : f32 to vector<2x1xf32>
    %596 = arith.divf %594, %595 : vector<2x1xf32>
    %597 = vector.broadcast %596 : vector<2x1xf32> to vector<2x32xf32>
    %598 = arith.subf %588, %597 : vector<2x32xf32>
    %599 = arith.mulf %598, %598 : vector<2x32xf32>
    %cst_273 = arith.constant dense<0.000000e+00> : vector<2xf32>
    %600 = vector.multi_reduction <add>, %599, %cst_273 [1] : vector<2x32xf32> to vector<2xf32>
    %601 = vector.shape_cast %600 : vector<2xf32> to vector<2x1xf32>
    %cst_274 = arith.constant 3.200000e+01 : f32
    %602 = vector.broadcast %cst_274 : f32 to vector<2x1xf32>
    %603 = arith.divf %601, %602 : vector<2x1xf32>
    %604 = vector.broadcast %596 : vector<2x1xf32> to vector<2x32xf32>
    %605 = arith.subf %588, %604 : vector<2x32xf32>
    %cst_275 = arith.constant 9.99999974E-6 : f32
    %606 = vector.broadcast %cst_275 : f32 to vector<2x1xf32>
    %607 = arith.addf %603, %606 : vector<2x1xf32>
    %608 = math.rsqrt %607 : vector<2x1xf32>
    %609 = vector.broadcast %608 : vector<2x1xf32> to vector<2x32xf32>
    %610 = arith.mulf %605, %609 : vector<2x32xf32>
    %611 = vector.shape_cast %590 : vector<32xf32> to vector<1x32xf32>
    %612 = vector.broadcast %611 : vector<1x32xf32> to vector<2x32xf32>
    %613 = arith.mulf %610, %612 : vector<2x32xf32>
    %614 = vector.shape_cast %592 : vector<32xf32> to vector<1x32xf32>
    %615 = vector.broadcast %614 : vector<1x32xf32> to vector<2x32xf32>
    %616 = arith.addf %613, %615 : vector<2x32xf32>
    %617 = arith.truncf %616 : vector<2x32xf32> to vector<2x32xbf16>
    %c0_276 = arith.constant 0 : index
    %c0_277 = arith.constant 0 : index
    %618 = vector.load %arg10[%c0_276, %c0_277] : memref<32x128xbf16, #tpu.memory_space<vmem>>, vector<32x128xbf16>
    %cst_278 = arith.constant dense<0.000000e+00> : vector<2x128xf32>
    %619 = tpu.matmul %617, %618, %cst_278 {dimension_numbers = #tpu.dot_dimension_numbers<[1], [0], [0], [1], [0, 0, 1, 1], [], []>} : vector<2x32xbf16>, vector<32x128xbf16>, vector<2x128xf32> -> vector<2x128xf32>
    %c0_279 = arith.constant 0 : index
    %c0_280 = arith.constant 0 : index
    %620 = vector.load %arg11[%c0_279, %c0_280] : memref<1x128xf32, #tpu.memory_space<vmem>>, vector<1x128xf32>
    %621 = vector.broadcast %620 : vector<1x128xf32> to vector<2x128xf32>
    %622 = arith.addf %619, %621 : vector<2x128xf32>
    %c0_281 = arith.constant 0 : index
    %c0_282 = arith.constant 0 : index
    %623 = vector.load %arg12[%c0_281, %c0_282] : memref<2x128xf32, #tpu.memory_space<vmem>>, vector<2x128xf32>
    tpu.vector_store %arg12[%c0_281, %c0_282], %622 {strides = array<i32>} : memref<2x128xf32, #tpu.memory_space<vmem>>, vector<2x128xf32>,
    return
  }
  func.func @transform_0(%arg0: i32) -> (i32, i32, i32) {
    %c0_i32 = arith.constant 0 : i32
    %c0_i32_0 = arith.constant 0 : i32
    %c0_i32_1 = arith.constant 0 : i32
    return %arg0, %c0_i32, %c0_i32_0 : i32, i32, i32
  }
  func.func @transform_1(%arg0: i32) -> (i32, i32, i32) {
    %c0_i32 = arith.constant 0 : i32
    %c0_i32_0 = arith.constant 0 : i32
    %c0_i32_1 = arith.constant 0 : i32
    %c0_i32_2 = arith.constant 0 : i32
    return %c0_i32, %c0_i32_0, %c0_i32_1 : i32, i32, i32
  }
  func.func @transform_2(%arg0: i32) -> (i32, i32, i32) {
    %c0_i32 = arith.constant 0 : i32
    %c0_i32_0 = arith.constant 0 : i32
    %c0_i32_1 = arith.constant 0 : i32
    %c0_i32_2 = arith.constant 0 : i32
    return %c0_i32, %c0_i32_0, %c0_i32_1 : i32, i32, i32
  }
  func.func @transform_3(%arg0: i32) -> (i32, i32, i32) {
    %c0_i32 = arith.constant 0 : i32
    %c0_i32_0 = arith.constant 0 : i32
    %c0_i32_1 = arith.constant 0 : i32
    %c0_i32_2 = arith.constant 0 : i32
    return %c0_i32, %c0_i32_0, %c0_i32_1 : i32, i32, i32
  }
  func.func @transform_4(%arg0: i32) -> (i32, i32, i32) {
    %c0_i32 = arith.constant 0 : i32
    %c0_i32_0 = arith.constant 0 : i32
    %c0_i32_1 = arith.constant 0 : i32
    %c0_i32_2 = arith.constant 0 : i32
    return %c0_i32, %c0_i32_0, %c0_i32_1 : i32, i32, i32
  }
  func.func @transform_5(%arg0: i32) -> (i32, i32, i32) {
    %c0_i32 = arith.constant 0 : i32
    %c0_i32_0 = arith.constant 0 : i32
    %c0_i32_1 = arith.constant 0 : i32
    %c0_i32_2 = arith.constant 0 : i32
    return %c0_i32, %c0_i32_0, %c0_i32_1 : i32, i32, i32
  }
  func.func @transform_6(%arg0: i32) -> (i32, i32, i32) {
    %c0_i32 = arith.constant 0 : i32
    %c0_i32_0 = arith.constant 0 : i32
    %c0_i32_1 = arith.constant 0 : i32
    %c0_i32_2 = arith.constant 0 : i32
    return %c0_i32, %c0_i32_0, %c0_i32_1 : i32, i32, i32
  }
  func.func @transform_7(%arg0: i32) -> (i32, i32) {
    %c0_i32 = arith.constant 0 : i32
    %c0_i32_0 = arith.constant 0 : i32
    %c0_i32_1 = arith.constant 0 : i32
    return %c0_i32, %c0_i32_0 : i32, i32
  }
  func.func @transform_8(%arg0: i32) -> (i32, i32) {
    %c0_i32 = arith.constant 0 : i32
    %c0_i32_0 = arith.constant 0 : i32
    %c0_i32_1 = arith.constant 0 : i32
    return %c0_i32, %c0_i32_0 : i32, i32
  }
  func.func @transform_9(%arg0: i32) -> (i32, i32) {
    %c0_i32 = arith.constant 0 : i32
    %c0_i32_0 = arith.constant 0 : i32
    %c0_i32_1 = arith.constant 0 : i32
    return %c0_i32, %c0_i32_0 : i32, i32
  }
  func.func @transform_10(%arg0: i32) -> (i32, i32) {
    %c0_i32 = arith.constant 0 : i32
    %c0_i32_0 = arith.constant 0 : i32
    %c0_i32_1 = arith.constant 0 : i32
    return %c0_i32, %c0_i32_0 : i32, i32
  }
  func.func @transform_11(%arg0: i32) -> (i32, i32) {
    %c0_i32 = arith.constant 0 : i32
    %c0_i32_0 = arith.constant 0 : i32
    return %arg0, %c0_i32 : i32, i32
  }
}

</mosaic_0001>

<llo_original>
// kernel: tpu_custom_call.1
$region0: #{tpu_custom_call.1}
  #allocation0 [shape = 'u32[]', space=smem, size = 0x4, offset = 0x4, fixed_abs, tag = 'smem constant byte address 0x4 - core index']
  #allocation1 [shape = 'u32[144,128]{1,0:T(1,128)}', space=vmem, size = 0x12000, scoped, tag = 'internal scratch']
  %s0 = inlined_call_operand.vmem [shape: f32[2,8,32], index: 0, kind: input, shape index: {}]
  %s1 = inlined_call_operand.vmem [shape: bf16[24,32,8], index: 1, kind: input, shape index: {}]
  %s2 = inlined_call_operand.vmem [shape: f32[24,1,8], index: 2, kind: input, shape index: {}]
  %s3 = inlined_call_operand.vmem [shape: bf16[8,8,32], index: 3, kind: input, shape index: {}]
  %s4 = inlined_call_operand.vmem [shape: bf16[2,32,32], index: 4, kind: input, shape index: {}]
  %s5 = inlined_call_operand.vmem [shape: bf16[2,32,32], index: 5, kind: input, shape index: {}]
  %s6 = inlined_call_operand.vmem [shape: f32[2,8,32], index: 6, kind: input, shape index: {}]
  %s7 = inlined_call_operand.vmem [shape: bf16[32,32], index: 7, kind: input, shape index: {}]
  %s8 = inlined_call_operand.vmem [shape: f32[8,32], index: 8, kind: input, shape index: {}]
  %s9 = inlined_call_operand.vmem [shape: bf16[32,128], index: 9, kind: input, shape index: {}]
  %s10 = inlined_call_operand.vmem [shape: f32[1,128], index: 10, kind: input, shape index: {}]
  %s11 = inlined_call_operand.hbm [shape: f32[2,128], index: 11, kind: output, shape index: {}]
  %s12 = sld [smem:[#allocation0]]
  $region54: #{tpu_custom_call.1} parent=0
    _
  %s14 = ssub.s32 1, %s12
  %s15 = scalar_select 0, %s14, %s12
  $region1: #{tpu_custom_call.1} parent=0
    #allocation2 [shape = 'u8[1024]{0}', space=vmem, size = 0x400, scoped, tag = 'output window, operand 0, single buffered']
    #allocation3 [shape = 's32[1]{0}', space=sflag, size = 0x4, scoped, tag = 'scoped memory for tpu_custom_call.1']
    %16 = vsyncpa [#allocation3], 0
    // Predicated region
    $region2: #{tpu_custom_call.1} parent=1 // pred_check
      _
    $region3: #{tpu_custom_call.1} parent=1 // pred_check_branch
      %18 = sbr.rel (0) target = $region5
    $region4: #{tpu_custom_call.1} parent=1 // pred_region
      _
    $region5: #{tpu_custom_call.1} parent=1 // pred_fallthru
      _
    // Predicated region
    $region6: #{tpu_custom_call.1} parent=1 // pred_check
      _
    $region7: #{tpu_custom_call.1} parent=1 // pred_check_branch
      %20 = sbr.rel (0) target = $region9
    $region8: #{tpu_custom_call.1} parent=1 // pred_region
      _
    $region9: #{tpu_custom_call.1} parent=1 // pred_fallthru
      _
    // Predicated region
    $region10: #{tpu_custom_call.1} parent=1 // pred_check
      _
    $region11: #{tpu_custom_call.1} parent=1 // pred_check_branch
      %22 = sbr.rel (0) target = $region13
    $region12: #{tpu_custom_call.1} parent=1 // pred_region
      _
    $region13: #{tpu_custom_call.1} parent=1 // pred_fallthru
      _
    // Predicated region
    $region14: #{tpu_custom_call.1} parent=1 // pred_check
      _
    $region15: #{tpu_custom_call.1} parent=1 // pred_check_branch
      %24 = sbr.rel (0) target = $region17
    $region16: #{tpu_custom_call.1} parent=1 // pred_region
      _
    $region17: #{tpu_custom_call.1} parent=1 // pred_fallthru
      _
    // Predicated region
    $region18: #{tpu_custom_call.1} parent=1 // pred_check
      _
    $region19: #{tpu_custom_call.1} parent=1 // pred_check_branch
      %26 = sbr.rel (0) target = $region21
    $region20: #{tpu_custom_call.1} parent=1 // pred_region
      _
    $region21: #{tpu_custom_call.1} parent=1 // pred_fallthru
      _
    // Predicated region
    $region22: #{tpu_custom_call.1} parent=1 // pred_check
      _
    $region23: #{tpu_custom_call.1} parent=1 // pred_check_branch
      %28 = sbr.rel (0) target = $region25
    $region24: #{tpu_custom_call.1} parent=1 // pred_region
      _
    $region25: #{tpu_custom_call.1} parent=1 // pred_fallthru
      _
    // Predicated region
    $region26: #{tpu_custom_call.1} parent=1 // pred_check
      _
    $region27: #{tpu_custom_call.1} parent=1 // pred_check_branch
      %30 = sbr.rel (0) target = $region29
    $region28: #{tpu_custom_call.1} parent=1 // pred_region
      _
    $region29: #{tpu_custom_call.1} parent=1 // pred_fallthru
      _
    // Predicated region
    $region30: #{tpu_custom_call.1} parent=1 // pred_check
      _
    $region31: #{tpu_custom_call.1} parent=1 // pred_check_branch
      %32 = sbr.rel (0) target = $region33
    $region32: #{tpu_custom_call.1} parent=1 // pred_region
      _
    $region33: #{tpu_custom_call.1} parent=1 // pred_fallthru
      _
    // Predicated region
    $region34: #{tpu_custom_call.1} parent=1 // pred_check
      _
    $region35: #{tpu_custom_call.1} parent=1 // pred_check_branch
      %34 = sbr.rel (0) target = $region37
    $region36: #{tpu_custom_call.1} parent=1 // pred_region
      _
    $region37: #{tpu_custom_call.1} parent=1 // pred_fallthru
      _
    // Predicated region
    $region38: #{tpu_custom_call.1} parent=1 // pred_check
      _
    $region39: #{tpu_custom_call.1} parent=1 // pred_check_branch
      %36 = sbr.rel (0) target = $region41
    $region40: #{tpu_custom_call.1} parent=1 // pred_region
      _
    $region41: #{tpu_custom_call.1} parent=1 // pred_fallthru
      _
    // Predicated region
    $region42: #{tpu_custom_call.1} parent=1 // pred_check
      _
    $region43: #{tpu_custom_call.1} parent=1 // pred_check_branch
      %38 = sbr.rel (0) target = $region45
    $region44: #{tpu_custom_call.1} parent=1 // pred_region
      _
    $region45: #{tpu_custom_call.1} parent=1 // pred_fallthru
      _
    %v40 = vld [vmem:[%s0] sm:$0xff]
    %v41 = vld [vmem:[%s0 + $0x8] sm:$0xff]
    %v42 = vld [vmem:[%s6] sm:$0xff]
    %v43 = vpack.c.bf16 %v41, %v40
    %v44 = vld [vmem:[%s1] sm:$0xf]
    %v45 = vld [vmem:[%s1 + $0x4] sm:$0xf]
    %v46 = vld [vmem:[%s1 + $0x8] sm:$0xf]
    %v47 = vld [vmem:[%s1 + $0xc] sm:$0xf]
    %v48 = vld [vmem:[%s2] sm:$0x1]
    %v50 = vlaneseq
    %v51 = vshrl.u32 %v50, 7
    %v52 = vsub.s32 0, %v51
    %v53 = vrot.slane %v48, %v52
    %v59 = vunpack.c.l.b16 %v44
    %v60 = vunpack.c.l.b16 %v45
    %v61 = vunpack.c.l.b16 %v46
    %v62 = vunpack.c.l.b16 %v47
    %v63 = vpack.c.b16 %v60, %v59
    %v64 = vpack.c.b16 %v62, %v61
    %vm67 = vcmask 261120
    %v69 = vsel %vm67, %v43, 0
    %71 = vmatprep.subr.bf16.mxu0 0
    %72 = vmatpush1.bf16.msra.mxu0 %v63
    %73 = vmatprep.subr.bf16.mxu0 0
    %74 = vmatpush1.bf16.msra.mxu0 %v64
    %75 = vmatprep.subr.bf16.mxu0 0
    %76 = vmatpush1.bf16.msra.mxu0 0
    %77 = vmatprep.subr.bf16.mxu0 0
    %78 = vmatpush1.bf16.msra.mxu0 0
    %79 = vmatprep.subr.bf16.mxu0 0
    %80 = vmatpush1.bf16.msra.mxu0 0
    %81 = vmatprep.subr.bf16.mxu0 0
    %82 = vmatpush1.bf16.msra.mxu0 0
    %83 = vmatprep.subr.bf16.mxu0 0
    %84 = vmatpush1.bf16.msra.mxu0 0
    %85 = vmatprep.subr.bf16.mxu0 0
    %86 = vmatpush1.bf16.msra.mxu0 0
    %87 = vmatprep.subr.bf16.mxu0 0
    %88 = vmatpush1.bf16.msra.mxu0 0
    %89 = vmatprep.subr.bf16.mxu0 0
    %90 = vmatpush1.bf16.msra.mxu0 0
    %91 = vmatprep.subr.bf16.mxu0 0
    %92 = vmatpush1.bf16.msra.mxu0 0
    %93 = vmatprep.subr.bf16.mxu0 0
    %94 = vmatpush1.bf16.msra.mxu0 0
    %95 = vmatprep.subr.bf16.mxu0 0
    %96 = vmatpush1.bf16.msra.mxu0 0
    %97 = vmatprep.subr.bf16.mxu0 0
    %98 = vmatpush1.bf16.msra.mxu0 0
    %99 = vmatprep.subr.bf16.mxu0 0
    %100 = vmatpush1.bf16.msra.mxu0 0
    %101 = vmatprep.subr.bf16.mxu0 0
    %102 = vmatpush1.bf16.msra.mxu0 0
    %103 = vmatprep.mubr.bf16.mxu0 0
    %104 = vmatmul.mubr.bf16.gmra.mrb[0].mxu0 %v69
    %v105 = vpop.f32.mrb[0].mxu0
    %v106 = vadd.f32 %v53, %v105
    %v107 = vpop.f32.mrb[0].mxu0
    %v108 = vpop.f32.mrb[0].mxu0
    %v109 = vadd.f32 %v53, %v108
    %v110 = vpop.f32.mrb[0].mxu0
    %111 = vdwg.mxu0
    %s112 = scalar_lea.vmem %s1, 64
    %v113 = vld [vmem:[%s112] sm:$0xf]
    %v114 = vld [vmem:[%s112 + $0x4] sm:$0xf]
    %v115 = vld [vmem:[%s112 + $0x8] sm:$0xf]
    %v116 = vld [vmem:[%s112 + $0xc] sm:$0xf]
    %s117 = scalar_lea.vmem %s2, 4
    %v118 = vld [vmem:[%s117] sm:$0x1]
    %v120 = vlaneseq
    %v121 = vshrl.u32 %v120, 7
    %v122 = vsub.s32 0, %v121
    %v123 = vrot.slane %v118, %v122
    %v129 = vunpack.c.l.b16 %v113
    %v130 = vunpack.c.l.b16 %v114
    %v131 = vunpack.c.l.b16 %v115
    %v132 = vunpack.c.l.b16 %v116
    %v133 = vpack.c.b16 %v130, %v129
    %v134 = vpack.c.b16 %v132, %v131
    %137 = vmatprep.subr.bf16.mxu0 0
    %138 = vmatpush1.bf16.msra.mxu0 %v133
    %139 = vmatprep.subr.bf16.mxu0 0
    %140 = vmatpush1.bf16.msra.mxu0 %v134
    %141 = vmatprep.subr.bf16.mxu0 0
    %142 = vmatpush1.bf16.msra.mxu0 0
    %143 = vmatprep.subr.bf16.mxu0 0
    %144 = vmatpush1.bf16.msra.mxu0 0
    %145 = vmatprep.subr.bf16.mxu0 0
    %146 = vmatpush1.bf16.msra.mxu0 0
    %147 = vmatprep.subr.bf16.mxu0 0
    %148 = vmatpush1.bf16.msra.mxu0 0
    %149 = vmatprep.subr.bf16.mxu0 0
    %150 = vmatpush1.bf16.msra.mxu0 0
    %151 = vmatprep.subr.bf16.mxu0 0
    %152 = vmatpush1.bf16.msra.mxu0 0
    %153 = vmatprep.subr.bf16.mxu0 0
    %154 = vmatpush1.bf16.msra.mxu0 0
    %155 = vmatprep.subr.bf16.mxu0 0
    %156 = vmatpush1.bf16.msra.mxu0 0
    %157 = vmatprep.subr.bf16.mxu0 0
    %158 = vmatpush1.bf16.msra.mxu0 0
    %159 = vmatprep.subr.bf16.mxu0 0
    %160 = vmatpush1.bf16.msra.mxu0 0
    %161 = vmatprep.subr.bf16.mxu0 0
    %162 = vmatpush1.bf16.msra.mxu0 0
    %163 = vmatprep.subr.bf16.mxu0 0
    %164 = vmatpush1.bf16.msra.mxu0 0
    %165 = vmatprep.subr.bf16.mxu0 0
    %166 = vmatpush1.bf16.msra.mxu0 0
    %167 = vmatprep.subr.bf16.mxu0 0
    %168 = vmatpush1.bf16.msra.mxu0 0
    %169 = vmatprep.mubr.bf16.mxu0 0
    %170 = vmatmul.mubr.bf16.gmra.mrb[0].mxu0 %v69
    %v171 = vpop.f32.mrb[0].mxu0
    %v172 = vadd.f32 %v123, %v171
    %v173 = vpop.f32.mrb[0].mxu0
    %v174 = vpop.f32.mrb[0].mxu0
    %v175 = vadd.f32 %v123, %v174
    %v176 = vpop.f32.mrb[0].mxu0
    %177 = vdwg.mxu0
    %s178 = scalar_lea.vmem %s1, 128
    %v179 = vld [vmem:[%s178] sm:$0xf]
    %v180 = vld [vmem:[%s178 + $0x4] sm:$0xf]
    %v181 = vld [vmem:[%s178 + $0x8] sm:$0xf]
    %v182 = vld [vmem:[%s178 + $0xc] sm:$0xf]
    %s183 = scalar_lea.vmem %s2, 8
    %v184 = vld [vmem:[%s183] sm:$0x1]
    %v186 = vlaneseq
    %v187 = vshrl.u32 %v186, 7
    %v188 = vsub.s32 0, %v187
    %v189 = vrot.slane %v184, %v188
    %v195 = vunpack.c.l.b16 %v179
    %v196 = vunpack.c.l.b16 %v180
    %v197 = vunpack.c.l.b16 %v181
    %v198 = vunpack.c.l.b16 %v182
    %v199 = vpack.c.b16 %v196, %v195
    %v200 = vpack.c.b16 %v198, %v197
    %203 = vmatprep.subr.bf16.mxu0 0
    %204 = vmatpush1.bf16.msra.mxu0 %v199
    %205 = vmatprep.subr.bf16.mxu0 0
    %206 = vmatpush1.bf16.msra.mxu0 %v200
    %207 = vmatprep.subr.bf16.mxu0 0
    %208 = vmatpush1.bf16.msra.mxu0 0
    %209 = vmatprep.subr.bf16.mxu0 0
    %210 = vmatpush1.bf16.msra.mxu0 0
    %211 = vmatprep.subr.bf16.mxu0 0
    %212 = vmatpush1.bf16.msra.mxu0 0
    %213 = vmatprep.subr.bf16.mxu0 0
    %214 = vmatpush1.bf16.msra.mxu0 0
    %215 = vmatprep.subr.bf16.mxu0 0
    %216 = vmatpush1.bf16.msra.mxu0 0
    %217 = vmatprep.subr.bf16.mxu0 0
    %218 = vmatpush1.bf16.msra.mxu0 0
    %219 = vmatprep.subr.bf16.mxu0 0
    %220 = vmatpush1.bf16.msra.mxu0 0
    %221 = vmatprep.subr.bf16.mxu0 0
    %222 = vmatpush1.bf16.msra.mxu0 0
    %223 = vmatprep.subr.bf16.mxu0 0
    %224 = vmatpush1.bf16.msra.mxu0 0
    %225 = vmatprep.subr.bf16.mxu0 0
    %226 = vmatpush1.bf16.msra.mxu0 0
    %227 = vmatprep.subr.bf16.mxu0 0
    %228 = vmatpush1.bf16.msra.mxu0 0
    %229 = vmatprep.subr.bf16.mxu0 0
    %230 = vmatpush1.bf16.msra.mxu0 0
    %231 = vmatprep.subr.bf16.mxu0 0
    %232 = vmatpush1.bf16.msra.mxu0 0
    %233 = vmatprep.subr.bf16.mxu0 0
    %234 = vmatpush1.bf16.msra.mxu0 0
    %235 = vmatprep.mubr.bf16.mxu0 0
    %236 = vmatmul.mubr.bf16.gmra.mrb[0].mxu0 %v69
    %v237 = vpop.f32.mrb[0].mxu0
    %v238 = vadd.f32 %v189, %v237
    %v239 = vpop.f32.mrb[0].mxu0
    %v240 = vpop.f32.mrb[0].mxu0
    %v241 = vadd.f32 %v189, %v240
    %v242 = vpop.f32.mrb[0].mxu0
    %243 = vdwg.mxu0
    %v244 = vpack.c.bf16 %v106, %v106
    %v245 = vpack.c.bf16 %v109, %v109
    %v246 = vpack.c.bf16 %v172, %v172
    %v247 = vpack.c.bf16 %v175, %v175
    %vm248 = vcmask 64512
    %v250 = vsel %vm248, %v244, 0
    %v253 = vsel %vm248, %v246, 0
    %255 = vmatprep.subr.bf16.mxu0 0
    %256 = vmatpush1.bf16.xpose.msra.mxu0 %v253
    %257 = vmatprep.subr.bf16.mxu0 0
    %258 = vmatpush1.bf16.xpose.msra.mxu0 0
    %259 = vmatprep.subr.bf16.mxu0 0
    %260 = vmatpush1.bf16.xpose.msra.mxu0 0
    %261 = vmatprep.subr.bf16.mxu0 0
    %262 = vmatpush1.bf16.xpose.msra.mxu0 0
    %263 = vmatprep.subr.bf16.mxu0 0
    %264 = vmatpush1.bf16.xpose.msra.mxu0 0
    %265 = vmatprep.subr.bf16.mxu0 0
    %266 = vmatpush1.bf16.xpose.msra.mxu0 0
    %267 = vmatprep.subr.bf16.mxu0 0
    %268 = vmatpush1.bf16.xpose.msra.mxu0 0
    %269 = vmatprep.subr.bf16.mxu0 0
    %270 = vmatpush1.bf16.xpose.msra.mxu0 0
    %271 = vmatprep.subr.bf16.mxu0 0
    %272 = vmatpush1.bf16.xpose.msra.mxu0 0
    %273 = vmatprep.subr.bf16.mxu0 0
    %274 = vmatpush1.bf16.xpose.msra.mxu0 0
    %275 = vmatprep.subr.bf16.mxu0 0
    %276 = vmatpush1.bf16.xpose.msra.mxu0 0
    %277 = vmatprep.subr.bf16.mxu0 0
    %278 = vmatpush1.bf16.xpose.msra.mxu0 0
    %279 = vmatprep.subr.bf16.mxu0 0
    %280 = vmatpush1.bf16.xpose.msra.mxu0 0
    %281 = vmatprep.subr.bf16.mxu0 0
    %282 = vmatpush1.bf16.xpose.msra.mxu0 0
    %283 = vmatprep.subr.bf16.mxu0 0
    %284 = vmatpush1.bf16.xpose.msra.mxu0 0
    %285 = vmatprep.subr.bf16.mxu0 0
    %286 = vmatpush1.bf16.xpose.msra.mxu0 0
    %287 = vmatprep.mubr.bf16.mxu0 0
    %288 = vmatmul.mubr.bf16.gmra.mrb[0].mxu0 %v250
    %v289 = vpop.f32.mrb[0].mxu0
    %v290 = vadd.f32 0.0, %v289
    %v291 = vpop.f32.mrb[0].mxu0
    %v292 = vpop.f32.mrb[0].mxu0
    %v293 = vpop.f32.mrb[0].mxu0
    %294 = vdwg.mxu0
    %v296 = vsel %vm248, %v245, 0
    %v299 = vsel %vm248, %v247, 0
    %301 = vmatprep.subr.bf16.mxu0 0
    %302 = vmatpush1.bf16.xpose.msra.mxu0 %v299
    %303 = vmatprep.subr.bf16.mxu0 0
    %304 = vmatpush1.bf16.xpose.msra.mxu0 0
    %305 = vmatprep.subr.bf16.mxu0 0
    %306 = vmatpush1.bf16.xpose.msra.mxu0 0
    %307 = vmatprep.subr.bf16.mxu0 0
    %308 = vmatpush1.bf16.xpose.msra.mxu0 0
    %309 = vmatprep.subr.bf16.mxu0 0
    %310 = vmatpush1.bf16.xpose.msra.mxu0 0
    %311 = vmatprep.subr.bf16.mxu0 0
    %312 = vmatpush1.bf16.xpose.msra.mxu0 0
    %313 = vmatprep.subr.bf16.mxu0 0
    %314 = vmatpush1.bf16.xpose.msra.mxu0 0
    %315 = vmatprep.subr.bf16.mxu0 0
    %316 = vmatpush1.bf16.xpose.msra.mxu0 0
    %317 = vmatprep.subr.bf16.mxu0 0
    %318 = vmatpush1.bf16.xpose.msra.mxu0 0
    %319 = vmatprep.subr.bf16.mxu0 0
    %320 = vmatpush1.bf16.xpose.msra.mxu0 0
    %321 = vmatprep.subr.bf16.mxu0 0
    %322 = vmatpush1.bf16.xpose.msra.mxu0 0
    %323 = vmatprep.subr.bf16.mxu0 0
    %324 = vmatpush1.bf16.xpose.msra.mxu0 0
    %325 = vmatprep.subr.bf16.mxu0 0
    %326 = vmatpush1.bf16.xpose.msra.mxu0 0
    %327 = vmatprep.subr.bf16.mxu0 0
    %328 = vmatpush1.bf16.xpose.msra.mxu0 0
    %329 = vmatprep.subr.bf16.mxu0 0
    %330 = vmatpush1.bf16.xpose.msra.mxu0 0
    %331 = vmatprep.subr.bf16.mxu0 0
    %332 = vmatpush1.bf16.xpose.msra.mxu0 0
    %333 = vmatprep.mubr.bf16.mxu0 0
    %334 = vmatmul.mubr.bf16.gmra.mrb[0].mxu0 %v296
    %v335 = vpop.f32.mrb[0].mxu0
    %v336 = vadd.f32 0.0, %v335
    %v337 = vpop.f32.mrb[0].mxu0
    %v338 = vpop.f32.mrb[0].mxu0
    %v339 = vpop.f32.mrb[0].mxu0
    %340 = vdwg.mxu0
    %v341 = vsel %vm248, %v290, -inf
    %342 = vmax.xlane.f32.xlu0 %v341
    %v343 = vpop.xlane.xlu0 %342
    %v344 = vsel %vm248, %v336, -inf
    %345 = vmax.xlane.f32.xlu0 %v344
    %v346 = vpop.xlane.xlu0 %345
    %v347 = vsub.f32 %v290, %v343
    %v348 = vsub.f32 %v336, %v346
    %v349 = vmul.f32 %v347, 1.442695
    %v350 = vpow.pop %v349
    %v351 = vmul.f32 %v348, 1.442695
    %v352 = vpow.pop %v351
    %v353 = vsel %vm248, %v350, 0.0
    %354 = vadd.xlane.f32.xlu0 %v353
    %v355 = vpop.xlane.xlu0 %354
    %v356 = vsel %vm248, %v352, 0.0
    %357 = vadd.xlane.f32.xlu0 %v356
    %v358 = vpop.xlane.xlu0 %357
    %v359 = vrcp.pop %v355
    %v360 = vrcp.pop %v358
    %v361 = vmul.f32 %v355, %v359
    %v362 = vmul.f32 %v358, %v360
    %v363 = vsub.f32 2.0, %v361
    %v364 = vsub.f32 2.0, %v362
    %v365 = vmul.f32 %v359, %v363
    %v366 = vmul.f32 %v360, %v364
    %v367 = vmul.f32 %v350, %v365
    %v368 = vmul.f32 %v352, %v366
    %v369 = vpack.c.bf16 %v367, %v367
    %v370 = vpack.c.bf16 %v368, %v368
    %v371 = vpack.c.bf16 %v238, %v238
    %v372 = vpack.c.bf16 %v241, %v241
    %v374 = vsel %vm248, %v369, 0
    %vm376 = vcmask 1043456
    %v378 = vsel %vm376, %v371, 0
    %380 = vmatprep.subr.bf16.mxu0 0
    %381 = vmatpush1.bf16.msra.mxu0 %v378
    %382 = vmatprep.subr.bf16.mxu0 0
    %383 = vmatpush1.bf16.msra.mxu0 0
    %384 = vmatprep.subr.bf16.mxu0 0
    %385 = vmatpush1.bf16.msra.mxu0 0
    %386 = vmatprep.subr.bf16.mxu0 0
    %387 = vmatpush1.bf16.msra.mxu0 0
    %388 = vmatprep.subr.bf16.mxu0 0
    %389 = vmatpush1.bf16.msra.mxu0 0
    %390 = vmatprep.subr.bf16.mxu0 0
    %391 = vmatpush1.bf16.msra.mxu0 0
    %392 = vmatprep.subr.bf16.mxu0 0
    %393 = vmatpush1.bf16.msra.mxu0 0
    %394 = vmatprep.subr.bf16.mxu0 0
    %395 = vmatpush1.bf16.msra.mxu0 0
    %396 = vmatprep.subr.bf16.mxu0 0
    %397 = vmatpush1.bf16.msra.mxu0 0
    %398 = vmatprep.subr.bf16.mxu0 0
    %399 = vmatpush1.bf16.msra.mxu0 0
    %400 = vmatprep.subr.bf16.mxu0 0
    %401 = vmatpush1.bf16.msra.mxu0 0
    %402 = vmatprep.subr.bf16.mxu0 0
    %403 = vmatpush1.bf16.msra.mxu0 0
    %404 = vmatprep.subr.bf16.mxu0 0
    %405 = vmatpush1.bf16.msra.mxu0 0
    %406 = vmatprep.subr.bf16.mxu0 0
    %407 = vmatpush1.bf16.msra.mxu0 0
    %408 = vmatprep.subr.bf16.mxu0 0
    %409 = vmatpush1.bf16.msra.mxu0 0
    %410 = vmatprep.subr.bf16.mxu0 0
    %411 = vmatpush1.bf16.msra.mxu0 0
    %412 = vmatprep.mubr.bf16.mxu0 0
    %413 = vmatmul.mubr.bf16.gmra.mrb[0].mxu0 %v374
    %v414 = vpop.f32.mrb[0].mxu0
    %v415 = vadd.f32 0.0, %v414
    %v416 = vpop.f32.mrb[0].mxu0
    %v417 = vpop.f32.mrb[0].mxu0
    %v418 = vpop.f32.mrb[0].mxu0
    %419 = vdwg.mxu0
    %v421 = vsel %vm248, %v370, 0
    %v424 = vsel %vm376, %v372, 0
    %426 = vmatprep.subr.bf16.mxu0 0
    %427 = vmatpush1.bf16.msra.mxu0 %v424
    %428 = vmatprep.subr.bf16.mxu0 0
    %429 = vmatpush1.bf16.msra.mxu0 0
    %430 = vmatprep.subr.bf16.mxu0 0
    %431 = vmatpush1.bf16.msra.mxu0 0
    %432 = vmatprep.subr.bf16.mxu0 0
    %433 = vmatpush1.bf16.msra.mxu0 0
    %434 = vmatprep.subr.bf16.mxu0 0
    %435 = vmatpush1.bf16.msra.mxu0 0
    %436 = vmatprep.subr.bf16.mxu0 0
    %437 = vmatpush1.bf16.msra.mxu0 0
    %438 = vmatprep.subr.bf16.mxu0 0
    %439 = vmatpush1.bf16.msra.mxu0 0
    %440 = vmatprep.subr.bf16.mxu0 0
    %441 = vmatpush1.bf16.msra.mxu0 0
    %442 = vmatprep.subr.bf16.mxu0 0
    %443 = vmatpush1.bf16.msra.mxu0 0
    %444 = vmatprep.subr.bf16.mxu0 0
    %445 = vmatpush1.bf16.msra.mxu0 0
    %446 = vmatprep.subr.bf16.mxu0 0
    %447 = vmatpush1.bf16.msra.mxu0 0
    %448 = vmatprep.subr.bf16.mxu0 0
    %449 = vmatpush1.bf16.msra.mxu0 0
    %450 = vmatprep.subr.bf16.mxu0 0
    %451 = vmatpush1.bf16.msra.mxu0 0
    %452 = vmatprep.subr.bf16.mxu0 0
    %453 = vmatpush1.bf16.msra.mxu0 0
    %454 = vmatprep.subr.bf16.mxu0 0
    %455 = vmatpush1.bf16.msra.mxu0 0
    %456 = vmatprep.subr.bf16.mxu0 0
    %457 = vmatpush1.bf16.msra.mxu0 0
    %458 = vmatprep.mubr.bf16.mxu0 0
    %459 = vmatmul.mubr.bf16.gmra.mrb[0].mxu0 %v421
    %v460 = vpop.f32.mrb[0].mxu0
    %v461 = vadd.f32 0.0, %v460
    %v462 = vpop.f32.mrb[0].mxu0
    %v463 = vpop.f32.mrb[0].mxu0
    %v464 = vpop.f32.mrb[0].mxu0
    %465 = vdwg.mxu0
    %v466 = vpack.c.bf16 %v461, %v415
    %v467 = vld [vmem:[%s3] sm:$0xf]
    %s468 = scalar_lea.vmem %s1, 16
    %v469 = vld [vmem:[%s468] sm:$0xf]
    %v470 = vld [vmem:[%s468 + $0x4] sm:$0xf]
    %v471 = vld [vmem:[%s468 + $0x8] sm:$0xf]
    %v472 = vld [vmem:[%s468 + $0xc] sm:$0xf]
    %s473 = scalar_lea.vmem %s2, 1
    %v474 = vld [vmem:[%s473] sm:$0x1]
    %v476 = vlaneseq
    %v477 = vshrl.u32 %v476, 7
    %v478 = vsub.s32 0, %v477
    %v479 = vrot.slane %v474, %v478
    %v485 = vunpack.c.l.b16 %v469
    %v486 = vunpack.c.l.b16 %v470
    %v487 = vunpack.c.l.b16 %v471
    %v488 = vunpack.c.l.b16 %v472
    %v489 = vpack.c.b16 %v486, %v485
    %v490 = vpack.c.b16 %v488, %v487
    %493 = vmatprep.subr.bf16.mxu0 0
    %494 = vmatpush1.bf16.msra.mxu0 %v489
    %495 = vmatprep.subr.bf16.mxu0 0
    %496 = vmatpush1.bf16.msra.mxu0 %v490
    %497 = vmatprep.subr.bf16.mxu0 0
    %498 = vmatpush1.bf16.msra.mxu0 0
    %499 = vmatprep.subr.bf16.mxu0 0
    %500 = vmatpush1.bf16.msra.mxu0 0
    %501 = vmatprep.subr.bf16.mxu0 0
    %502 = vmatpush1.bf16.msra.mxu0 0
    %503 = vmatprep.subr.bf16.mxu0 0
    %504 = vmatpush1.bf16.msra.mxu0 0
    %505 = vmatprep.subr.bf16.mxu0 0
    %506 = vmatpush1.bf16.msra.mxu0 0
    %507 = vmatprep.subr.bf16.mxu0 0
    %508 = vmatpush1.bf16.msra.mxu0 0
    %509 = vmatprep.subr.bf16.mxu0 0
    %510 = vmatpush1.bf16.msra.mxu0 0
    %511 = vmatprep.subr.bf16.mxu0 0
    %512 = vmatpush1.bf16.msra.mxu0 0
    %513 = vmatprep.subr.bf16.mxu0 0
    %514 = vmatpush1.bf16.msra.mxu0 0
    %515 = vmatprep.subr.bf16.mxu0 0
    %516 = vmatpush1.bf16.msra.mxu0 0
    %517 = vmatprep.subr.bf16.mxu0 0
    %518 = vmatpush1.bf16.msra.mxu0 0
    %519 = vmatprep.subr.bf16.mxu0 0
    %520 = vmatpush1.bf16.msra.mxu0 0
    %521 = vmatprep.subr.bf16.mxu0 0
    %522 = vmatpush1.bf16.msra.mxu0 0
    %523 = vmatprep.subr.bf16.mxu0 0
    %524 = vmatpush1.bf16.msra.mxu0 0
    %525 = vmatprep.mubr.bf16.mxu0 0
    %526 = vmatmul.mubr.bf16.gmra.mrb[0].mxu0 %v69
    %v527 = vpop.f32.mrb[0].mxu0
    %v528 = vadd.f32 %v479, %v527
    %v529 = vpop.f32.mrb[0].mxu0
    %v530 = vpop.f32.mrb[0].mxu0
    %v531 = vadd.f32 %v479, %v530
    %v532 = vpop.f32.mrb[0].mxu0
    %533 = vdwg.mxu0
    %s534 = scalar_lea.vmem %s1, 80
    %v535 = vld [vmem:[%s534] sm:$0xf]
    %v536 = vld [vmem:[%s534 + $0x4] sm:$0xf]
    %v537 = vld [vmem:[%s534 + $0x8] sm:$0xf]
    %v538 = vld [vmem:[%s534 + $0xc] sm:$0xf]
    %s539 = scalar_lea.vmem %s2, 5
    %v540 = vld [vmem:[%s539] sm:$0x1]
    %v542 = vlaneseq
    %v543 = vshrl.u32 %v542, 7
    %v544 = vsub.s32 0, %v543
    %v545 = vrot.slane %v540, %v544
    %v551 = vunpack.c.l.b16 %v535
    %v552 = vunpack.c.l.b16 %v536
    %v553 = vunpack.c.l.b16 %v537
    %v554 = vunpack.c.l.b16 %v538
    %v555 = vpack.c.b16 %v552, %v551
    %v556 = vpack.c.b16 %v554, %v553
    %559 = vmatprep.subr.bf16.mxu0 0
    %560 = vmatpush1.bf16.msra.mxu0 %v555
    %561 = vmatprep.subr.bf16.mxu0 0
    %562 = vmatpush1.bf16.msra.mxu0 %v556
    %563 = vmatprep.subr.bf16.mxu0 0
    %564 = vmatpush1.bf16.msra.mxu0 0
    %565 = vmatprep.subr.bf16.mxu0 0
    %566 = vmatpush1.bf16.msra.mxu0 0
    %567 = vmatprep.subr.bf16.mxu0 0
    %568 = vmatpush1.bf16.msra.mxu0 0
    %569 = vmatprep.subr.bf16.mxu0 0
    %570 = vmatpush1.bf16.msra.mxu0 0
    %571 = vmatprep.subr.bf16.mxu0 0
    %572 = vmatpush1.bf16.msra.mxu0 0
    %573 = vmatprep.subr.bf16.mxu0 0
    %574 = vmatpush1.bf16.msra.mxu0 0
    %575 = vmatprep.subr.bf16.mxu0 0
    %576 = vmatpush1.bf16.msra.mxu0 0
    %577 = vmatprep.subr.bf16.mxu0 0
    %578 = vmatpush1.bf16.msra.mxu0 0
    %579 = vmatprep.subr.bf16.mxu0 0
    %580 = vmatpush1.bf16.msra.mxu0 0
    %581 = vmatprep.subr.bf16.mxu0 0
    %582 = vmatpush1.bf16.msra.mxu0 0
    %583 = vmatprep.subr.bf16.mxu0 0
    %584 = vmatpush1.bf16.msra.mxu0 0
    %585 = vmatprep.subr.bf16.mxu0 0
    %586 = vmatpush1.bf16.msra.mxu0 0
    %587 = vmatprep.subr.bf16.mxu0 0
    %588 = vmatpush1.bf16.msra.mxu0 0
    %589 = vmatprep.subr.bf16.mxu0 0
    %590 = vmatpush1.bf16.msra.mxu0 0
    %591 = vmatprep.mubr.bf16.mxu0 0
    %592 = vmatmul.mubr.bf16.gmra.mrb[0].mxu0 %v69
    %v593 = vpop.f32.mrb[0].mxu0
    %v594 = vadd.f32 %v545, %v593
    %v595 = vpop.f32.mrb[0].mxu0
    %v596 = vpop.f32.mrb[0].mxu0
    %v597 = vadd.f32 %v545, %v596
    %v598 = vpop.f32.mrb[0].mxu0
    %599 = vdwg.mxu0
    %s600 = scalar_lea.vmem %s1, 144
    %v601 = vld [vmem:[%s600] sm:$0xf]
    %v602 = vld [vmem:[%s600 + $0x4] sm:$0xf]
    %v603 = vld [vmem:[%s600 + $0x8] sm:$0xf]
    %v604 = vld [vmem:[%s600 + $0xc] sm:$0xf]
    %s605 = scalar_lea.vmem %s2, 9
    %v606 = vld [vmem:[%s605] sm:$0x1]
    %v608 = vlaneseq
    %v609 = vshrl.u32 %v608, 7
    %v610 = vsub.s32 0, %v609
    %v611 = vrot.slane %v606, %v610
    %v617 = vunpack.c.l.b16 %v601
    %v618 = vunpack.c.l.b16 %v602
    %v619 = vunpack.c.l.b16 %v603
    %v620 = vunpack.c.l.b16 %v604
    %v621 = vpack.c.b16 %v618, %v617
    %v622 = vpack.c.b16 %v620, %v619
    %625 = vmatprep.subr.bf16.mxu0 0
    %626 = vmatpush1.bf16.msra.mxu0 %v621
    %627 = vmatprep.subr.bf16.mxu0 0
    %628 = vmatpush1.bf16.msra.mxu0 %v622
    %629 = vmatprep.subr.bf16.mxu0 0
    %630 = vmatpush1.bf16.msra.mxu0 0
    %631 = vmatprep.subr.bf16.mxu0 0
    %632 = vmatpush1.bf16.msra.mxu0 0
    %633 = vmatprep.subr.bf16.mxu0 0
    %634 = vmatpush1.bf16.msra.mxu0 0
    %635 = vmatprep.subr.bf16.mxu0 0
    %636 = vmatpush1.bf16.msra.mxu0 0
    %637 = vmatprep.subr.bf16.mxu0 0
    %638 = vmatpush1.bf16.msra.mxu0 0
    %639 = vmatprep.subr.bf16.mxu0 0
    %640 = vmatpush1.bf16.msra.mxu0 0
    %641 = vmatprep.subr.bf16.mxu0 0
    %642 = vmatpush1.bf16.msra.mxu0 0
    %643 = vmatprep.subr.bf16.mxu0 0
    %644 = vmatpush1.bf16.msra.mxu0 0
    %645 = vmatprep.subr.bf16.mxu0 0
    %646 = vmatpush1.bf16.msra.mxu0 0
    %647 = vmatprep.subr.bf16.mxu0 0
    %648 = vmatpush1.bf16.msra.mxu0 0
    %649 = vmatprep.subr.bf16.mxu0 0
    %650 = vmatpush1.bf16.msra.mxu0 0
    %651 = vmatprep.subr.bf16.mxu0 0
    %652 = vmatpush1.bf16.msra.mxu0 0
    %653 = vmatprep.subr.bf16.mxu0 0
    %654 = vmatpush1.bf16.msra.mxu0 0
    %655 = vmatprep.subr.bf16.mxu0 0
    %656 = vmatpush1.bf16.msra.mxu0 0
    %657 = vmatprep.mubr.bf16.mxu0 0
    %658 = vmatmul.mubr.bf16.gmra.mrb[0].mxu0 %v69
    %v659 = vpop.f32.mrb[0].mxu0
    %v660 = vadd.f32 %v611, %v659
    %v661 = vpop.f32.mrb[0].mxu0
    %v662 = vpop.f32.mrb[0].mxu0
    %v663 = vadd.f32 %v611, %v662
    %v664 = vpop.f32.mrb[0].mxu0
    %665 = vdwg.mxu0
    %v666 = vpack.c.bf16 %v528, %v528
    %v667 = vpack.c.bf16 %v531, %v531
    %v668 = vpack.c.bf16 %v594, %v594
    %v669 = vpack.c.bf16 %v597, %v597
    %v671 = vsel %vm248, %v666, 0
    %v674 = vsel %vm248, %v668, 0
    %676 = vmatprep.subr.bf16.mxu0 0
    %677 = vmatpush1.bf16.xpose.msra.mxu0 %v674
    %678 = vmatprep.subr.bf16.mxu0 0
    %679 = vmatpush1.bf16.xpose.msra.mxu0 0
    %680 = vmatprep.subr.bf16.mxu0 0
    %681 = vmatpush1.bf16.xpose.msra.mxu0 0
    %682 = vmatprep.subr.bf16.mxu0 0
    %683 = vmatpush1.bf16.xpose.msra.mxu0 0
    %684 = vmatprep.subr.bf16.mxu0 0
    %685 = vmatpush1.bf16.xpose.msra.mxu0 0
    %686 = vmatprep.subr.bf16.mxu0 0
    %687 = vmatpush1.bf16.xpose.msra.mxu0 0
    %688 = vmatprep.subr.bf16.mxu0 0
    %689 = vmatpush1.bf16.xpose.msra.mxu0 0
    %690 = vmatprep.subr.bf16.mxu0 0
    %691 = vmatpush1.bf16.xpose.msra.mxu0 0
    %692 = vmatprep.subr.bf16.mxu0 0
    %693 = vmatpush1.bf16.xpose.msra.mxu0 0
    %694 = vmatprep.subr.bf16.mxu0 0
    %695 = vmatpush1.bf16.xpose.msra.mxu0 0
    %696 = vmatprep.subr.bf16.mxu0 0
    %697 = vmatpush1.bf16.xpose.msra.mxu0 0
    %698 = vmatprep.subr.bf16.mxu0 0
    %699 = vmatpush1.bf16.xpose.msra.mxu0 0
    %700 = vmatprep.subr.bf16.mxu0 0
    %701 = vmatpush1.bf16.xpose.msra.mxu0 0
    %702 = vmatprep.subr.bf16.mxu0 0
    %703 = vmatpush1.bf16.xpose.msra.mxu0 0
    %704 = vmatprep.subr.bf16.mxu0 0
    %705 = vmatpush1.bf16.xpose.msra.mxu0 0
    %706 = vmatprep.subr.bf16.mxu0 0
    %707 = vmatpush1.bf16.xpose.msra.mxu0 0
    %708 = vmatprep.mubr.bf16.mxu0 0
    %709 = vmatmul.mubr.bf16.gmra.mrb[0].mxu0 %v671
    %v710 = vpop.f32.mrb[0].mxu0
    %v711 = vadd.f32 0.0, %v710
    %v712 = vpop.f32.mrb[0].mxu0
    %v713 = vpop.f32.mrb[0].mxu0
    %v714 = vpop.f32.mrb[0].mxu0
    %715 = vdwg.mxu0
    %v717 = vsel %vm248, %v667, 0
    %v720 = vsel %vm248, %v669, 0
    %722 = vmatprep.subr.bf16.mxu0 0
    %723 = vmatpush1.bf16.xpose.msra.mxu0 %v720
    %724 = vmatprep.subr.bf16.mxu0 0
    %725 = vmatpush1.bf16.xpose.msra.mxu0 0
    %726 = vmatprep.subr.bf16.mxu0 0
    %727 = vmatpush1.bf16.xpose.msra.mxu0 0
    %728 = vmatprep.subr.bf16.mxu0 0
    %729 = vmatpush1.bf16.xpose.msra.mxu0 0
    %730 = vmatprep.subr.bf16.mxu0 0
    %731 = vmatpush1.bf16.xpose.msra.mxu0 0
    %732 = vmatprep.subr.bf16.mxu0 0
    %733 = vmatpush1.bf16.xpose.msra.mxu0 0
    %734 = vmatprep.subr.bf16.mxu0 0
    %735 = vmatpush1.bf16.xpose.msra.mxu0 0
    %736 = vmatprep.subr.bf16.mxu0 0
    %737 = vmatpush1.bf16.xpose.msra.mxu0 0
    %738 = vmatprep.subr.bf16.mxu0 0
    %739 = vmatpush1.bf16.xpose.msra.mxu0 0
    %740 = vmatprep.subr.bf16.mxu0 0
    %741 = vmatpush1.bf16.xpose.msra.mxu0 0
    %742 = vmatprep.subr.bf16.mxu0 0
    %743 = vmatpush1.bf16.xpose.msra.mxu0 0
    %744 = vmatprep.subr.bf16.mxu0 0
    %745 = vmatpush1.bf16.xpose.msra.mxu0 0
    %746 = vmatprep.subr.bf16.mxu0 0
    %747 = vmatpush1.bf16.xpose.msra.mxu0 0
    %748 = vmatprep.subr.bf16.mxu0 0
    %749 = vmatpush1.bf16.xpose.msra.mxu0 0
    %750 = vmatprep.subr.bf16.mxu0 0
    %751 = vmatpush1.bf16.xpose.msra.mxu0 0
    %752 = vmatprep.subr.bf16.mxu0 0
    %753 = vmatpush1.bf16.xpose.msra.mxu0 0
    %754 = vmatprep.mubr.bf16.mxu0 0
    %755 = vmatmul.mubr.bf16.gmra.mrb[0].mxu0 %v717
    %v756 = vpop.f32.mrb[0].mxu0
    %v757 = vadd.f32 0.0, %v756
    %v758 = vpop.f32.mrb[0].mxu0
    %v759 = vpop.f32.mrb[0].mxu0
    %v760 = vpop.f32.mrb[0].mxu0
    %761 = vdwg.mxu0
    %v762 = vsel %vm248, %v711, -inf
    %763 = vmax.xlane.f32.xlu0 %v762
    %v764 = vpop.xlane.xlu0 %763
    %v765 = vsel %vm248, %v757, -inf
    %766 = vmax.xlane.f32.xlu0 %v765
    %v767 = vpop.xlane.xlu0 %766
    %v768 = vsub.f32 %v711, %v764
    %v769 = vsub.f32 %v757, %v767
    %v770 = vmul.f32 %v768, 1.442695
    %v771 = vpow.pop %v770
    %v772 = vmul.f32 %v769, 1.442695
    %v773 = vpow.pop %v772
    %v774 = vsel %vm248, %v771, 0.0
    %775 = vadd.xlane.f32.xlu0 %v774
    %v776 = vpop.xlane.xlu0 %775
    %v777 = vsel %vm248, %v773, 0.0
    %778 = vadd.xlane.f32.xlu0 %v777
    %v779 = vpop.xlane.xlu0 %778
    %v780 = vrcp.pop %v776
    %v781 = vrcp.pop %v779
    %v782 = vmul.f32 %v776, %v780
    %v783 = vmul.f32 %v779, %v781
    %v784 = vsub.f32 2.0, %v782
    %v785 = vsub.f32 2.0, %v783
    %v786 = vmul.f32 %v780, %v784
    %v787 = vmul.f32 %v781, %v785
    %v788 = vmul.f32 %v771, %v786
    %v789 = vmul.f32 %v773, %v787
    %v790 = vpack.c.bf16 %v788, %v788
    %v791 = vpack.c.bf16 %v789, %v789
    %v792 = vpack.c.bf16 %v660, %v660
    %v793 = vpack.c.bf16 %v663, %v663
    %v795 = vsel %vm248, %v790, 0
    %v798 = vsel %vm376, %v792, 0
    %800 = vmatprep.subr.bf16.mxu0 0
    %801 = vmatpush1.bf16.msra.mxu0 %v798
    %802 = vmatprep.subr.bf16.mxu0 0
    %803 = vmatpush1.bf16.msra.mxu0 0
    %804 = vmatprep.subr.bf16.mxu0 0
    %805 = vmatpush1.bf16.msra.mxu0 0
    %806 = vmatprep.subr.bf16.mxu0 0
    %807 = vmatpush1.bf16.msra.mxu0 0
    %808 = vmatprep.subr.bf16.mxu0 0
    %809 = vmatpush1.bf16.msra.mxu0 0
    %810 = vmatprep.subr.bf16.mxu0 0
    %811 = vmatpush1.bf16.msra.mxu0 0
    %812 = vmatprep.subr.bf16.mxu0 0
    %813 = vmatpush1.bf16.msra.mxu0 0
    %814 = vmatprep.subr.bf16.mxu0 0
    %815 = vmatpush1.bf16.msra.mxu0 0
    %816 = vmatprep.subr.bf16.mxu0 0
    %817 = vmatpush1.bf16.msra.mxu0 0
    %818 = vmatprep.subr.bf16.mxu0 0
    %819 = vmatpush1.bf16.msra.mxu0 0
    %820 = vmatprep.subr.bf16.mxu0 0
    %821 = vmatpush1.bf16.msra.mxu0 0
    %822 = vmatprep.subr.bf16.mxu0 0
    %823 = vmatpush1.bf16.msra.mxu0 0
    %824 = vmatprep.subr.bf16.mxu0 0
    %825 = vmatpush1.bf16.msra.mxu0 0
    %826 = vmatprep.subr.bf16.mxu0 0
    %827 = vmatpush1.bf16.msra.mxu0 0
    %828 = vmatprep.subr.bf16.mxu0 0
    %829 = vmatpush1.bf16.msra.mxu0 0
    %830 = vmatprep.subr.bf16.mxu0 0
    %831 = vmatpush1.bf16.msra.mxu0 0
    %832 = vmatprep.mubr.bf16.mxu0 0
    %833 = vmatmul.mubr.bf16.gmra.mrb[0].mxu0 %v795
    %v834 = vpop.f32.mrb[0].mxu0
    %v835 = vadd.f32 0.0, %v834
    %v836 = vpop.f32.mrb[0].mxu0
    %v837 = vpop.f32.mrb[0].mxu0
    %v838 = vpop.f32.mrb[0].mxu0
    %839 = vdwg.mxu0
    %v841 = vsel %vm248, %v791, 0
    %v844 = vsel %vm376, %v793, 0
    %846 = vmatprep.subr.bf16.mxu0 0
    %847 = vmatpush1.bf16.msra.mxu0 %v844
    %848 = vmatprep.subr.bf16.mxu0 0
    %849 = vmatpush1.bf16.msra.mxu0 0
    %850 = vmatprep.subr.bf16.mxu0 0
    %851 = vmatpush1.bf16.msra.mxu0 0
    %852 = vmatprep.subr.bf16.mxu0 0
    %853 = vmatpush1.bf16.msra.mxu0 0
    %854 = vmatprep.subr.bf16.mxu0 0
    %855 = vmatpush1.bf16.msra.mxu0 0
    %856 = vmatprep.subr.bf16.mxu0 0
    %857 = vmatpush1.bf16.msra.mxu0 0
    %858 = vmatprep.subr.bf16.mxu0 0
    %859 = vmatpush1.bf16.msra.mxu0 0
    %860 = vmatprep.subr.bf16.mxu0 0
    %861 = vmatpush1.bf16.msra.mxu0 0
    %862 = vmatprep.subr.bf16.mxu0 0
    %863 = vmatpush1.bf16.msra.mxu0 0
    %864 = vmatprep.subr.bf16.mxu0 0
    %865 = vmatpush1.bf16.msra.mxu0 0
    %866 = vmatprep.subr.bf16.mxu0 0
    %867 = vmatpush1.bf16.msra.mxu0 0
    %868 = vmatprep.subr.bf16.mxu0 0
    %869 = vmatpush1.bf16.msra.mxu0 0
    %870 = vmatprep.subr.bf16.mxu0 0
    %871 = vmatpush1.bf16.msra.mxu0 0
    %872 = vmatprep.subr.bf16.mxu0 0
    %873 = vmatpush1.bf16.msra.mxu0 0
    %874 = vmatprep.subr.bf16.mxu0 0
    %875 = vmatpush1.bf16.msra.mxu0 0
    %876 = vmatprep.subr.bf16.mxu0 0
    %877 = vmatpush1.bf16.msra.mxu0 0
    %878 = vmatprep.mubr.bf16.mxu0 0
    %879 = vmatmul.mubr.bf16.gmra.mrb[0].mxu0 %v841
    %v880 = vpop.f32.mrb[0].mxu0
    %v881 = vadd.f32 0.0, %v880
    %v882 = vpop.f32.mrb[0].mxu0
    %v883 = vpop.f32.mrb[0].mxu0
    %v884 = vpop.f32.mrb[0].mxu0
    %885 = vdwg.mxu0
    %v886 = vpack.c.bf16 %v881, %v835
    %s887 = scalar_lea.vmem %s3, 4
    %v888 = vld [vmem:[%s887] sm:$0xf]
    %v890 = vsel %vm248, %v886, 0
    %v893 = vsel %vm376, %v888, 0
    %895 = vmatprep.subr.bf16.mxu0 0
    %896 = vmatpush1.bf16.msra.mxu0 %v893
    %897 = vmatprep.subr.bf16.mxu0 0
    %898 = vmatpush1.bf16.msra.mxu0 0
    %899 = vmatprep.subr.bf16.mxu0 0
    %900 = vmatpush1.bf16.msra.mxu0 0
    %901 = vmatprep.subr.bf16.mxu0 0
    %902 = vmatpush1.bf16.msra.mxu0 0
    %903 = vmatprep.subr.bf16.mxu0 0
    %904 = vmatpush1.bf16.msra.mxu0 0
    %905 = vmatprep.subr.bf16.mxu0 0
    %906 = vmatpush1.bf16.msra.mxu0 0
    %907 = vmatprep.subr.bf16.mxu0 0
    %908 = vmatpush1.bf16.msra.mxu0 0
    %909 = vmatprep.subr.bf16.mxu0 0
    %910 = vmatpush1.bf16.msra.mxu0 0
    %911 = vmatprep.subr.bf16.mxu0 0
    %912 = vmatpush1.bf16.msra.mxu0 0
    %913 = vmatprep.subr.bf16.mxu0 0
    %914 = vmatpush1.bf16.msra.mxu0 0
    %915 = vmatprep.subr.bf16.mxu0 0
    %916 = vmatpush1.bf16.msra.mxu0 0
    %917 = vmatprep.subr.bf16.mxu0 0
    %918 = vmatpush1.bf16.msra.mxu0 0
    %919 = vmatprep.subr.bf16.mxu0 0
    %920 = vmatpush1.bf16.msra.mxu0 0
    %921 = vmatprep.subr.bf16.mxu0 0
    %922 = vmatpush1.bf16.msra.mxu0 0
    %923 = vmatprep.subr.bf16.mxu0 0
    %924 = vmatpush1.bf16.msra.mxu0 0
    %925 = vmatprep.subr.bf16.mxu0 0
    %926 = vmatpush1.bf16.msra.mxu0 0
    %927 = vmatprep.mubr.bf16.mxu0 0
    %928 = vmatmul.mubr.bf16.gmra.mrb[0].mxu0 %v890
    %v929 = vpop.f32.mrb[0].mxu0
    %v930 = vadd.f32 0.0, %v929
    %v931 = vpop.f32.mrb[0].mxu0
    %v932 = vpop.f32.mrb[0].mxu0
    %v933 = vadd.f32 0.0, %v932
    %v934 = vpop.f32.mrb[0].mxu0
    %935 = vdwg.mxu0
    %v937 = vsel %vm248, %v466, 0
    %v940 = vsel %vm376, %v467, 0
    %942 = vmatprep.subr.bf16.mxu0 0
    %943 = vmatpush1.bf16.msra.mxu0 %v940
    %944 = vmatprep.subr.bf16.mxu0 0
    %945 = vmatpush1.bf16.msra.mxu0 0
    %946 = vmatprep.subr.bf16.mxu0 0
    %947 = vmatpush1.bf16.msra.mxu0 0
    %948 = vmatprep.subr.bf16.mxu0 0
    %949 = vmatpush1.bf16.msra.mxu0 0
    %950 = vmatprep.subr.bf16.mxu0 0
    %951 = vmatpush1.bf16.msra.mxu0 0
    %952 = vmatprep.subr.bf16.mxu0 0
    %953 = vmatpush1.bf16.msra.mxu0 0
    %954 = vmatprep.subr.bf16.mxu0 0
    %955 = vmatpush1.bf16.msra.mxu0 0
    %956 = vmatprep.subr.bf16.mxu0 0
    %957 = vmatpush1.bf16.msra.mxu0 0
    %958 = vmatprep.subr.bf16.mxu0 0
    %959 = vmatpush1.bf16.msra.mxu0 0
    %960 = vmatprep.subr.bf16.mxu0 0
    %961 = vmatpush1.bf16.msra.mxu0 0
    %962 = vmatprep.subr.bf16.mxu0 0
    %963 = vmatpush1.bf16.msra.mxu0 0
    %964 = vmatprep.subr.bf16.mxu0 0
    %965 = vmatpush1.bf16.msra.mxu0 0
    %966 = vmatprep.subr.bf16.mxu0 0
    %967 = vmatpush1.bf16.msra.mxu0 0
    %968 = vmatprep.subr.bf16.mxu0 0
    %969 = vmatpush1.bf16.msra.mxu0 0
    %970 = vmatprep.subr.bf16.mxu0 0
    %971 = vmatpush1.bf16.msra.mxu0 0
    %972 = vmatprep.subr.bf16.mxu0 0
    %973 = vmatpush1.bf16.msra.mxu0 0
    %974 = vmatprep.mubr.bf16.mxu0 0
    %975 = vmatmul.mubr.bf16.gmra.mrb[0].mxu0 %v937
    %v976 = vpop.f32.mrb[0].mxu0
    %v977 = vadd.f32 %v930, %v976
    %v978 = vpop.f32.mrb[0].mxu0
    %v979 = vpop.f32.mrb[0].mxu0
    %v980 = vadd.f32 %v933, %v979
    %v981 = vpop.f32.mrb[0].mxu0
    %982 = vdwg.mxu0
    %s983 = scalar_lea.vmem %s1, 32
    %v984 = vld [vmem:[%s983] sm:$0xf]
    %v985 = vld [vmem:[%s983 + $0x4] sm:$0xf]
    %v986 = vld [vmem:[%s983 + $0x8] sm:$0xf]
    %v987 = vld [vmem:[%s983 + $0xc] sm:$0xf]
    %s988 = scalar_lea.vmem %s2, 2
    %v989 = vld [vmem:[%s988] sm:$0x1]
    %v991 = vlaneseq
    %v992 = vshrl.u32 %v991, 7
    %v993 = vsub.s32 0, %v992
    %v994 = vrot.slane %v989, %v993
    %v1000 = vunpack.c.l.b16 %v984
    %v1001 = vunpack.c.l.b16 %v985
    %v1002 = vunpack.c.l.b16 %v986
    %v1003 = vunpack.c.l.b16 %v987
    %v1004 = vpack.c.b16 %v1001, %v1000
    %v1005 = vpack.c.b16 %v1003, %v1002
    %1008 = vmatprep.subr.bf16.mxu0 0
    %1009 = vmatpush1.bf16.msra.mxu0 %v1004
    %1010 = vmatprep.subr.bf16.mxu0 0
    %1011 = vmatpush1.bf16.msra.mxu0 %v1005
    %1012 = vmatprep.subr.bf16.mxu0 0
    %1013 = vmatpush1.bf16.msra.mxu0 0
    %1014 = vmatprep.subr.bf16.mxu0 0
    %1015 = vmatpush1.bf16.msra.mxu0 0
    %1016 = vmatprep.subr.bf16.mxu0 0
    %1017 = vmatpush1.bf16.msra.mxu0 0
    %1018 = vmatprep.subr.bf16.mxu0 0
    %1019 = vmatpush1.bf16.msra.mxu0 0
    %1020 = vmatprep.subr.bf16.mxu0 0
    %1021 = vmatpush1.bf16.msra.mxu0 0
    %1022 = vmatprep.subr.bf16.mxu0 0
    %1023 = vmatpush1.bf16.msra.mxu0 0
    %1024 = vmatprep.subr.bf16.mxu0 0
    %1025 = vmatpush1.bf16.msra.mxu0 0
    %1026 = vmatprep.subr.bf16.mxu0 0
    %1027 = vmatpush1.bf16.msra.mxu0 0
    %1028 = vmatprep.subr.bf16.mxu0 0
    %1029 = vmatpush1.bf16.msra.mxu0 0
    %1030 = vmatprep.subr.bf16.mxu0 0
    %1031 = vmatpush1.bf16.msra.mxu0 0
    %1032 = vmatprep.subr.bf16.mxu0 0
    %1033 = vmatpush1.bf16.msra.mxu0 0
    %1034 = vmatprep.subr.bf16.mxu0 0
    %1035 = vmatpush1.bf16.msra.mxu0 0
    %1036 = vmatprep.subr.bf16.mxu0 0
    %1037 = vmatpush1.bf16.msra.mxu0 0
    %1038 = vmatprep.subr.bf16.mxu0 0
    %1039 = vmatpush1.bf16.msra.mxu0 0
    %1040 = vmatprep.mubr.bf16.mxu0 0
    %1041 = vmatmul.mubr.bf16.gmra.mrb[0].mxu0 %v69
    %v1042 = vpop.f32.mrb[0].mxu0
    %v1043 = vadd.f32 %v994, %v1042
    %v1044 = vpop.f32.mrb[0].mxu0
    %v1045 = vpop.f32.mrb[0].mxu0
    %v1046 = vadd.f32 %v994, %v1045
    %v1047 = vpop.f32.mrb[0].mxu0
    %1048 = vdwg.mxu0
    %s1049 = scalar_lea.vmem %s1, 96
    %v1050 = vld [vmem:[%s1049] sm:$0xf]
    %v1051 = vld [vmem:[%s1049 + $0x4] sm:$0xf]
    %v1052 = vld [vmem:[%s1049 + $0x8] sm:$0xf]
    %v1053 = vld [vmem:[%s1049 + $0xc] sm:$0xf]
    %s1054 = scalar_lea.vmem %s2, 6
    %v1055 = vld [vmem:[%s1054] sm:$0x1]
    %v1057 = vlaneseq
    %v1058 = vshrl.u32 %v1057, 7
    %v1059 = vsub.s32 0, %v1058
    %v1060 = vrot.slane %v1055, %v1059
    %v1066 = vunpack.c.l.b16 %v1050
    %v1067 = vunpack.c.l.b16 %v1051
    %v1068 = vunpack.c.l.b16 %v1052
    %v1069 = vunpack.c.l.b16 %v1053
    %v1070 = vpack.c.b16 %v1067, %v1066
    %v1071 = vpack.c.b16 %v1069, %v1068
    %1074 = vmatprep.subr.bf16.mxu0 0
    %1075 = vmatpush1.bf16.msra.mxu0 %v1070
    %1076 = vmatprep.subr.bf16.mxu0 0
    %1077 = vmatpush1.bf16.msra.mxu0 %v1071
    %1078 = vmatprep.subr.bf16.mxu0 0
    %1079 = vmatpush1.bf16.msra.mxu0 0
    %1080 = vmatprep.subr.bf16.mxu0 0
    %1081 = vmatpush1.bf16.msra.mxu0 0
    %1082 = vmatprep.subr.bf16.mxu0 0
    %1083 = vmatpush1.bf16.msra.mxu0 0
    %1084 = vmatprep.subr.bf16.mxu0 0
    %1085 = vmatpush1.bf16.msra.mxu0 0
    %1086 = vmatprep.subr.bf16.mxu0 0
    %1087 = vmatpush1.bf16.msra.mxu0 0
    %1088 = vmatprep.subr.bf16.mxu0 0
    %1089 = vmatpush1.bf16.msra.mxu0 0
    %1090 = vmatprep.subr.bf16.mxu0 0
    %1091 = vmatpush1.bf16.msra.mxu0 0
    %1092 = vmatprep.subr.bf16.mxu0 0
    %1093 = vmatpush1.bf16.msra.mxu0 0
    %1094 = vmatprep.subr.bf16.mxu0 0
    %1095 = vmatpush1.bf16.msra.mxu0 0
    %1096 = vmatprep.subr.bf16.mxu0 0
    %1097 = vmatpush1.bf16.msra.mxu0 0
    %1098 = vmatprep.subr.bf16.mxu0 0
    %1099 = vmatpush1.bf16.msra.mxu0 0
    %1100 = vmatprep.subr.bf16.mxu0 0
    %1101 = vmatpush1.bf16.msra.mxu0 0
    %1102 = vmatprep.subr.bf16.mxu0 0
    %1103 = vmatpush1.bf16.msra.mxu0 0
    %1104 = vmatprep.subr.bf16.mxu0 0
    %1105 = vmatpush1.bf16.msra.mxu0 0
    %1106 = vmatprep.mubr.bf16.mxu0 0
    %1107 = vmatmul.mubr.bf16.gmra.mrb[0].mxu0 %v69
    %v1108 = vpop.f32.mrb[0].mxu0
    %v1109 = vadd.f32 %v1060, %v1108
    %v1110 = vpop.f32.mrb[0].mxu0
    %v1111 = vpop.f32.mrb[0].mxu0
    %v1112 = vadd.f32 %v1060, %v1111
    %v1113 = vpop.f32.mrb[0].mxu0
    %1114 = vdwg.mxu0
    %s1115 = scalar_lea.vmem %s1, 160
    %v1116 = vld [vmem:[%s1115] sm:$0xf]
    %v1117 = vld [vmem:[%s1115 + $0x4] sm:$0xf]
    %v1118 = vld [vmem:[%s1115 + $0x8] sm:$0xf]
    %v1119 = vld [vmem:[%s1115 + $0xc] sm:$0xf]
    %s1120 = scalar_lea.vmem %s2, 10
    %v1121 = vld [vmem:[%s1120] sm:$0x1]
    %v1123 = vlaneseq
    %v1124 = vshrl.u32 %v1123, 7
    %v1125 = vsub.s32 0, %v1124
    %v1126 = vrot.slane %v1121, %v1125
    %v1132 = vunpack.c.l.b16 %v1116
    %v1133 = vunpack.c.l.b16 %v1117
    %v1134 = vunpack.c.l.b16 %v1118
    %v1135 = vunpack.c.l.b16 %v1119
    %v1136 = vpack.c.b16 %v1133, %v1132
    %v1137 = vpack.c.b16 %v1135, %v1134
    %1140 = vmatprep.subr.bf16.mxu0 0
    %1141 = vmatpush1.bf16.msra.mxu0 %v1136
    %1142 = vmatprep.subr.bf16.mxu0 0
    %1143 = vmatpush1.bf16.msra.mxu0 %v1137
    %1144 = vmatprep.subr.bf16.mxu0 0
    %1145 = vmatpush1.bf16.msra.mxu0 0
    %1146 = vmatprep.subr.bf16.mxu0 0
    %1147 = vmatpush1.bf16.msra.mxu0 0
    %1148 = vmatprep.subr.bf16.mxu0 0
    %1149 = vmatpush1.bf16.msra.mxu0 0
    %1150 = vmatprep.subr.bf16.mxu0 0
    %1151 = vmatpush1.bf16.msra.mxu0 0
    %1152 = vmatprep.subr.bf16.mxu0 0
    %1153 = vmatpush1.bf16.msra.mxu0 0
    %1154 = vmatprep.subr.bf16.mxu0 0
    %1155 = vmatpush1.bf16.msra.mxu0 0
    %1156 = vmatprep.subr.bf16.mxu0 0
    %1157 = vmatpush1.bf16.msra.mxu0 0
    %1158 = vmatprep.subr.bf16.mxu0 0
    %1159 = vmatpush1.bf16.msra.mxu0 0
    %1160 = vmatprep.subr.bf16.mxu0 0
    %1161 = vmatpush1.bf16.msra.mxu0 0
    %1162 = vmatprep.subr.bf16.mxu0 0
    %1163 = vmatpush1.bf16.msra.mxu0 0
    %1164 = vmatprep.subr.bf16.mxu0 0
    %1165 = vmatpush1.bf16.msra.mxu0 0
    %1166 = vmatprep.subr.bf16.mxu0 0
    %1167 = vmatpush1.bf16.msra.mxu0 0
    %1168 = vmatprep.subr.bf16.mxu0 0
    %1169 = vmatpush1.bf16.msra.mxu0 0
    %1170 = vmatprep.subr.bf16.mxu0 0
    %1171 = vmatpush1.bf16.msra.mxu0 0
    %1172 = vmatprep.mubr.bf16.mxu0 0
    %1173 = vmatmul.mubr.bf16.gmra.mrb[0].mxu0 %v69
    %v1174 = vpop.f32.mrb[0].mxu0
    %v1175 = vadd.f32 %v1126, %v1174
    %v1176 = vpop.f32.mrb[0].mxu0
    %v1177 = vpop.f32.mrb[0].mxu0
    %v1178 = vadd.f32 %v1126, %v1177
    %v1179 = vpop.f32.mrb[0].mxu0
    %1180 = vdwg.mxu0
    %v1181 = vpack.c.bf16 %v1043, %v1043
    %v1182 = vpack.c.bf16 %v1046, %v1046
    %v1183 = vpack.c.bf16 %v1109, %v1109
    %v1184 = vpack.c.bf16 %v1112, %v1112
    %v1186 = vsel %vm248, %v1181, 0
    %v1189 = vsel %vm248, %v1183, 0
    %1191 = vmatprep.subr.bf16.mxu0 0
    %1192 = vmatpush1.bf16.xpose.msra.mxu0 %v1189
    %1193 = vmatprep.subr.bf16.mxu0 0
    %1194 = vmatpush1.bf16.xpose.msra.mxu0 0
    %1195 = vmatprep.subr.bf16.mxu0 0
    %1196 = vmatpush1.bf16.xpose.msra.mxu0 0
    %1197 = vmatprep.subr.bf16.mxu0 0
    %1198 = vmatpush1.bf16.xpose.msra.mxu0 0
    %1199 = vmatprep.subr.bf16.mxu0 0
    %1200 = vmatpush1.bf16.xpose.msra.mxu0 0
    %1201 = vmatprep.subr.bf16.mxu0 0
    %1202 = vmatpush1.bf16.xpose.msra.mxu0 0
    %1203 = vmatprep.subr.bf16.mxu0 0
    %1204 = vmatpush1.bf16.xpose.msra.mxu0 0
    %1205 = vmatprep.subr.bf16.mxu0 0
    %1206 = vmatpush1.bf16.xpose.msra.mxu0 0
    %1207 = vmatprep.subr.bf16.mxu0 0
    %1208 = vmatpush1.bf16.xpose.msra.mxu0 0
    %1209 = vmatprep.subr.bf16.mxu0 0
    %1210 = vmatpush1.bf16.xpose.msra.mxu0 0
    %1211 = vmatprep.subr.bf16.mxu0 0
    %1212 = vmatpush1.bf16.xpose.msra.mxu0 0
    %1213 = vmatprep.subr.bf16.mxu0 0
    %1214 = vmatpush1.bf16.xpose.msra.mxu0 0
    %1215 = vmatprep.subr.bf16.mxu0 0
    %1216 = vmatpush1.bf16.xpose.msra.mxu0 0
    %1217 = vmatprep.subr.bf16.mxu0 0
    %1218 = vmatpush1.bf16.xpose.msra.mxu0 0
    %1219 = vmatprep.subr.bf16.mxu0 0
    %1220 = vmatpush1.bf16.xpose.msra.mxu0 0
    %1221 = vmatprep.subr.bf16.mxu0 0
    %1222 = vmatpush1.bf16.xpose.msra.mxu0 0
    %1223 = vmatprep.mubr.bf16.mxu0 0
    %1224 = vmatmul.mubr.bf16.gmra.mrb[0].mxu0 %v1186
    %v1225 = vpop.f32.mrb[0].mxu0
    %v1226 = vadd.f32 0.0, %v1225
    %v1227 = vpop.f32.mrb[0].mxu0
    %v1228 = vpop.f32.mrb[0].mxu0
    %v1229 = vpop.f32.mrb[0].mxu0
    %1230 = vdwg.mxu0
    %v1232 = vsel %vm248, %v1182, 0
    %v1235 = vsel %vm248, %v1184, 0
    %1237 = vmatprep.subr.bf16.mxu0 0
    %1238 = vmatpush1.bf16.xpose.msra.mxu0 %v1235
    %1239 = vmatprep.subr.bf16.mxu0 0
    %1240 = vmatpush1.bf16.xpose.msra.mxu0 0
    %1241 = vmatprep.subr.bf16.mxu0 0
    %1242 = vmatpush1.bf16.xpose.msra.mxu0 0
    %1243 = vmatprep.subr.bf16.mxu0 0
    %1244 = vmatpush1.bf16.xpose.msra.mxu0 0
    %1245 = vmatprep.subr.bf16.mxu0 0
    %1246 = vmatpush1.bf16.xpose.msra.mxu0 0
    %1247 = vmatprep.subr.bf16.mxu0 0
    %1248 = vmatpush1.bf16.xpose.msra.mxu0 0
    %1249 = vmatprep.subr.bf16.mxu0 0
    %1250 = vmatpush1.bf16.xpose.msra.mxu0 0
    %1251 = vmatprep.subr.bf16.mxu0 0
    %1252 = vmatpush1.bf16.xpose.msra.mxu0 0
    %1253 = vmatprep.subr.bf16.mxu0 0
    %1254 = vmatpush1.bf16.xpose.msra.mxu0 0
    %1255 = vmatprep.subr.bf16.mxu0 0
    %1256 = vmatpush1.bf16.xpose.msra.mxu0 0
    %1257 = vmatprep.subr.bf16.mxu0 0
    %1258 = vmatpush1.bf16.xpose.msra.mxu0 0
    %1259 = vmatprep.subr.bf16.mxu0 0
    %1260 = vmatpush1.bf16.xpose.msra.mxu0 0
    %1261 = vmatprep.subr.bf16.mxu0 0
    %1262 = vmatpush1.bf16.xpose.msra.mxu0 0
    %1263 = vmatprep.subr.bf16.mxu0 0
    %1264 = vmatpush1.bf16.xpose.msra.mxu0 0
    %1265 = vmatprep.subr.bf16.mxu0 0
    %1266 = vmatpush1.bf16.xpose.msra.mxu0 0
    %1267 = vmatprep.subr.bf16.mxu0 0
    %1268 = vmatpush1.bf16.xpose.msra.mxu0 0
    %1269 = vmatprep.mubr.bf16.mxu0 0
    %1270 = vmatmul.mubr.bf16.gmra.mrb[0].mxu0 %v1232
    %v1271 = vpop.f32.mrb[0].mxu0
    %v1272 = vadd.f32 0.0, %v1271
    %v1273 = vpop.f32.mrb[0].mxu0
    %v1274 = vpop.f32.mrb[0].mxu0
    %v1275 = vpop.f32.mrb[0].mxu0
    %1276 = vdwg.mxu0
    %v1277 = vsel %vm248, %v1226, -inf
    %1278 = vmax.xlane.f32.xlu0 %v1277
    %v1279 = vpop.xlane.xlu0 %1278
    %v1280 = vsel %vm248, %v1272, -inf
    %1281 = vmax.xlane.f32.xlu0 %v1280
    %v1282 = vpop.xlane.xlu0 %1281
    %v1283 = vsub.f32 %v1226, %v1279
    %v1284 = vsub.f32 %v1272, %v1282
    %v1285 = vmul.f32 %v1283, 1.442695
    %v1286 = vpow.pop %v1285
    %v1287 = vmul.f32 %v1284, 1.442695
    %v1288 = vpow.pop %v1287
    %v1289 = vsel %vm248, %v1286, 0.0
    %1290 = vadd.xlane.f32.xlu0 %v1289
    %v1291 = vpop.xlane.xlu0 %1290
    %v1292 = vsel %vm248, %v1288, 0.0
    %1293 = vadd.xlane.f32.xlu0 %v1292
    %v1294 = vpop.xlane.xlu0 %1293
    %v1295 = vrcp.pop %v1291
    %v1296 = vrcp.pop %v1294
    %v1297 = vmul.f32 %v1291, %v1295
    %v1298 = vmul.f32 %v1294, %v1296
    %v1299 = vsub.f32 2.0, %v1297
    %v1300 = vsub.f32 2.0, %v1298
    %v1301 = vmul.f32 %v1295, %v1299
    %v1302 = vmul.f32 %v1296, %v1300
    %v1303 = vmul.f32 %v1286, %v1301
    %v1304 = vmul.f32 %v1288, %v1302
    %v1305 = vpack.c.bf16 %v1303, %v1303
    %v1306 = vpack.c.bf16 %v1304, %v1304
    %v1307 = vpack.c.bf16 %v1175, %v1175
    %v1308 = vpack.c.bf16 %v1178, %v1178
    %v1310 = vsel %vm248, %v1305, 0
    %v1313 = vsel %vm376, %v1307, 0
    %1315 = vmatprep.subr.bf16.mxu0 0
    %1316 = vmatpush1.bf16.msra.mxu0 %v1313
    %1317 = vmatprep.subr.bf16.mxu0 0
    %1318 = vmatpush1.bf16.msra.mxu0 0
    %1319 = vmatprep.subr.bf16.mxu0 0
    %1320 = vmatpush1.bf16.msra.mxu0 0
    %1321 = vmatprep.subr.bf16.mxu0 0
    %1322 = vmatpush1.bf16.msra.mxu0 0
    %1323 = vmatprep.subr.bf16.mxu0 0
    %1324 = vmatpush1.bf16.msra.mxu0 0
    %1325 = vmatprep.subr.bf16.mxu0 0
    %1326 = vmatpush1.bf16.msra.mxu0 0
    %1327 = vmatprep.subr.bf16.mxu0 0
    %1328 = vmatpush1.bf16.msra.mxu0 0
    %1329 = vmatprep.subr.bf16.mxu0 0
    %1330 = vmatpush1.bf16.msra.mxu0 0
    %1331 = vmatprep.subr.bf16.mxu0 0
    %1332 = vmatpush1.bf16.msra.mxu0 0
    %1333 = vmatprep.subr.bf16.mxu0 0
    %1334 = vmatpush1.bf16.msra.mxu0 0
    %1335 = vmatprep.subr.bf16.mxu0 0
    %1336 = vmatpush1.bf16.msra.mxu0 0
    %1337 = vmatprep.subr.bf16.mxu0 0
    %1338 = vmatpush1.bf16.msra.mxu0 0
    %1339 = vmatprep.subr.bf16.mxu0 0
    %1340 = vmatpush1.bf16.msra.mxu0 0
    %1341 = vmatprep.subr.bf16.mxu0 0
    %1342 = vmatpush1.bf16.msra.mxu0 0
    %1343 = vmatprep.subr.bf16.mxu0 0
    %1344 = vmatpush1.bf16.msra.mxu0 0
    %1345 = vmatprep.subr.bf16.mxu0 0
    %1346 = vmatpush1.bf16.msra.mxu0 0
    %1347 = vmatprep.mubr.bf16.mxu0 0
    %1348 = vmatmul.mubr.bf16.gmra.mrb[0].mxu0 %v1310
    %v1349 = vpop.f32.mrb[0].mxu0
    %v1350 = vadd.f32 0.0, %v1349
    %v1351 = vpop.f32.mrb[0].mxu0
    %v1352 = vpop.f32.mrb[0].mxu0
    %v1353 = vpop.f32.mrb[0].mxu0
    %1354 = vdwg.mxu0
    %v1356 = vsel %vm248, %v1306, 0
    %v1359 = vsel %vm376, %v1308, 0
    %1361 = vmatprep.subr.bf16.mxu0 0
    %1362 = vmatpush1.bf16.msra.mxu0 %v1359
    %1363 = vmatprep.subr.bf16.mxu0 0
    %1364 = vmatpush1.bf16.msra.mxu0 0
    %1365 = vmatprep.subr.bf16.mxu0 0
    %1366 = vmatpush1.bf16.msra.mxu0 0
    %1367 = vmatprep.subr.bf16.mxu0 0
    %1368 = vmatpush1.bf16.msra.mxu0 0
    %1369 = vmatprep.subr.bf16.mxu0 0
    %1370 = vmatpush1.bf16.msra.mxu0 0
    %1371 = vmatprep.subr.bf16.mxu0 0
    %1372 = vmatpush1.bf16.msra.mxu0 0
    %1373 = vmatprep.subr.bf16.mxu0 0
    %1374 = vmatpush1.bf16.msra.mxu0 0
    %1375 = vmatprep.subr.bf16.mxu0 0
    %1376 = vmatpush1.bf16.msra.mxu0 0
    %1377 = vmatprep.subr.bf16.mxu0 0
    %1378 = vmatpush1.bf16.msra.mxu0 0
    %1379 = vmatprep.subr.bf16.mxu0 0
    %1380 = vmatpush1.bf16.msra.mxu0 0
    %1381 = vmatprep.subr.bf16.mxu0 0
    %1382 = vmatpush1.bf16.msra.mxu0 0
    %1383 = vmatprep.subr.bf16.mxu0 0
    %1384 = vmatpush1.bf16.msra.mxu0 0
    %1385 = vmatprep.subr.bf16.mxu0 0
    %1386 = vmatpush1.bf16.msra.mxu0 0
    %1387 = vmatprep.subr.bf16.mxu0 0
    %1388 = vmatpush1.bf16.msra.mxu0 0
    %1389 = vmatprep.subr.bf16.mxu0 0
    %1390 = vmatpush1.bf16.msra.mxu0 0
    %1391 = vmatprep.subr.bf16.mxu0 0
    %1392 = vmatpush1.bf16.msra.mxu0 0
    %1393 = vmatprep.mubr.bf16.mxu0 0
    %1394 = vmatmul.mubr.bf16.gmra.mrb[0].mxu0 %v1356
    %v1395 = vpop.f32.mrb[0].mxu0
    %v1396 = vadd.f32 0.0, %v1395
    %v1397 = vpop.f32.mrb[0].mxu0
    %v1398 = vpop.f32.mrb[0].mxu0
    %v1399 = vpop.f32.mrb[0].mxu0
    %1400 = vdwg.mxu0
    %v1401 = vpack.c.bf16 %v1396, %v1350
    %s1402 = scalar_lea.vmem %s3, 8
    %v1403 = vld [vmem:[%s1402] sm:$0xf]
    %v1405 = vsel %vm248, %v1401, 0
    %v1408 = vsel %vm376, %v1403, 0
    %1410 = vmatprep.subr.bf16.mxu0 0
    %1411 = vmatpush1.bf16.msra.mxu0 %v1408
    %1412 = vmatprep.subr.bf16.mxu0 0
    %1413 = vmatpush1.bf16.msra.mxu0 0
    %1414 = vmatprep.subr.bf16.mxu0 0
    %1415 = vmatpush1.bf16.msra.mxu0 0
    %1416 = vmatprep.subr.bf16.mxu0 0
    %1417 = vmatpush1.bf16.msra.mxu0 0
    %1418 = vmatprep.subr.bf16.mxu0 0
    %1419 = vmatpush1.bf16.msra.mxu0 0
    %1420 = vmatprep.subr.bf16.mxu0 0
    %1421 = vmatpush1.bf16.msra.mxu0 0
    %1422 = vmatprep.subr.bf16.mxu0 0
    %1423 = vmatpush1.bf16.msra.mxu0 0
    %1424 = vmatprep.subr.bf16.mxu0 0
    %1425 = vmatpush1.bf16.msra.mxu0 0
    %1426 = vmatprep.subr.bf16.mxu0 0
    %1427 = vmatpush1.bf16.msra.mxu0 0
    %1428 = vmatprep.subr.bf16.mxu0 0
    %1429 = vmatpush1.bf16.msra.mxu0 0
    %1430 = vmatprep.subr.bf16.mxu0 0
    %1431 = vmatpush1.bf16.msra.mxu0 0
    %1432 = vmatprep.subr.bf16.mxu0 0
    %1433 = vmatpush1.bf16.msra.mxu0 0
    %1434 = vmatprep.subr.bf16.mxu0 0
    %1435 = vmatpush1.bf16.msra.mxu0 0
    %1436 = vmatprep.subr.bf16.mxu0 0
    %1437 = vmatpush1.bf16.msra.mxu0 0
    %1438 = vmatprep.subr.bf16.mxu0 0
    %1439 = vmatpush1.bf16.msra.mxu0 0
    %1440 = vmatprep.subr.bf16.mxu0 0
    %1441 = vmatpush1.bf16.msra.mxu0 0
    %1442 = vmatprep.mubr.bf16.mxu0 0
    %1443 = vmatmul.mubr.bf16.gmra.mrb[0].mxu0 %v1405
    %v1444 = vpop.f32.mrb[0].mxu0
    %v1445 = vadd.f32 0.0, %v1444
    %v1446 = vpop.f32.mrb[0].mxu0
    %v1447 = vpop.f32.mrb[0].mxu0
    %v1448 = vadd.f32 0.0, %v1447
    %v1449 = vpop.f32.mrb[0].mxu0
    %1450 = vdwg.mxu0
    %v1451 = vadd.f32 %v977, %v1445
    %v1452 = vadd.f32 %v980, %v1448
    %s1453 = scalar_lea.vmem %s1, 48
    %v1454 = vld [vmem:[%s1453] sm:$0xf]
    %v1455 = vld [vmem:[%s1453 + $0x4] sm:$0xf]
    %v1456 = vld [vmem:[%s1453 + $0x8] sm:$0xf]
    %v1457 = vld [vmem:[%s1453 + $0xc] sm:$0xf]
    %s1458 = scalar_lea.vmem %s2, 3
    %v1459 = vld [vmem:[%s1458] sm:$0x1]
    %v1461 = vlaneseq
    %v1462 = vshrl.u32 %v1461, 7
    %v1463 = vsub.s32 0, %v1462
    %v1464 = vrot.slane %v1459, %v1463
    %v1470 = vunpack.c.l.b16 %v1454
    %v1471 = vunpack.c.l.b16 %v1455
    %v1472 = vunpack.c.l.b16 %v1456
    %v1473 = vunpack.c.l.b16 %v1457
    %v1474 = vpack.c.b16 %v1471, %v1470
    %v1475 = vpack.c.b16 %v1473, %v1472
    %1478 = vmatprep.subr.bf16.mxu0 0
    %1479 = vmatpush1.bf16.msra.mxu0 %v1474
    %1480 = vmatprep.subr.bf16.mxu0 0
    %1481 = vmatpush1.bf16.msra.mxu0 %v1475
    %1482 = vmatprep.subr.bf16.mxu0 0
    %1483 = vmatpush1.bf16.msra.mxu0 0
    %1484 = vmatprep.subr.bf16.mxu0 0
    %1485 = vmatpush1.bf16.msra.mxu0 0
    %1486 = vmatprep.subr.bf16.mxu0 0
    %1487 = vmatpush1.bf16.msra.mxu0 0
    %1488 = vmatprep.subr.bf16.mxu0 0
    %1489 = vmatpush1.bf16.msra.mxu0 0
    %1490 = vmatprep.subr.bf16.mxu0 0
    %1491 = vmatpush1.bf16.msra.mxu0 0
    %1492 = vmatprep.subr.bf16.mxu0 0
    %1493 = vmatpush1.bf16.msra.mxu0 0
    %1494 = vmatprep.subr.bf16.mxu0 0
    %1495 = vmatpush1.bf16.msra.mxu0 0
    %1496 = vmatprep.subr.bf16.mxu0 0
    %1497 = vmatpush1.bf16.msra.mxu0 0
    %1498 = vmatprep.subr.bf16.mxu0 0
    %1499 = vmatpush1.bf16.msra.mxu0 0
    %1500 = vmatprep.subr.bf16.mxu0 0
    %1501 = vmatpush1.bf16.msra.mxu0 0
    %1502 = vmatprep.subr.bf16.mxu0 0
    %1503 = vmatpush1.bf16.msra.mxu0 0
    %1504 = vmatprep.subr.bf16.mxu0 0
    %1505 = vmatpush1.bf16.msra.mxu0 0
    %1506 = vmatprep.subr.bf16.mxu0 0
    %1507 = vmatpush1.bf16.msra.mxu0 0
    %1508 = vmatprep.subr.bf16.mxu0 0
    %1509 = vmatpush1.bf16.msra.mxu0 0
    %1510 = vmatprep.mubr.bf16.mxu0 0
    %1511 = vmatmul.mubr.bf16.gmra.mrb[0].mxu0 %v69
    %v1512 = vpop.f32.mrb[0].mxu0
    %v1513 = vadd.f32 %v1464, %v1512
    %v1514 = vpop.f32.mrb[0].mxu0
    %v1515 = vpop.f32.mrb[0].mxu0
    %v1516 = vadd.f32 %v1464, %v1515
    %v1517 = vpop.f32.mrb[0].mxu0
    %1518 = vdwg.mxu0
    %s1519 = scalar_lea.vmem %s1, 112
    %v1520 = vld [vmem:[%s1519] sm:$0xf]
    %v1521 = vld [vmem:[%s1519 + $0x4] sm:$0xf]
    %v1522 = vld [vmem:[%s1519 + $0x8] sm:$0xf]
    %v1523 = vld [vmem:[%s1519 + $0xc] sm:$0xf]
    %s1524 = scalar_lea.vmem %s2, 7
    %v1525 = vld [vmem:[%s1524] sm:$0x1]
    %v1527 = vlaneseq
    %v1528 = vshrl.u32 %v1527, 7
    %v1529 = vsub.s32 0, %v1528
    %v1530 = vrot.slane %v1525, %v1529
    %v1536 = vunpack.c.l.b16 %v1520
    %v1537 = vunpack.c.l.b16 %v1521
    %v1538 = vunpack.c.l.b16 %v1522
    %v1539 = vunpack.c.l.b16 %v1523
    %v1540 = vpack.c.b16 %v1537, %v1536
    %v1541 = vpack.c.b16 %v1539, %v1538
    %1544 = vmatprep.subr.bf16.mxu0 0
    %1545 = vmatpush1.bf16.msra.mxu0 %v1540
    %1546 = vmatprep.subr.bf16.mxu0 0
    %1547 = vmatpush1.bf16.msra.mxu0 %v1541
    %1548 = vmatprep.subr.bf16.mxu0 0
    %1549 = vmatpush1.bf16.msra.mxu0 0
    %1550 = vmatprep.subr.bf16.mxu0 0
    %1551 = vmatpush1.bf16.msra.mxu0 0
    %1552 = vmatprep.subr.bf16.mxu0 0
    %1553 = vmatpush1.bf16.msra.mxu0 0
    %1554 = vmatprep.subr.bf16.mxu0 0
    %1555 = vmatpush1.bf16.msra.mxu0 0
    %1556 = vmatprep.subr.bf16.mxu0 0
    %1557 = vmatpush1.bf16.msra.mxu0 0
    %1558 = vmatprep.subr.bf16.mxu0 0
    %1559 = vmatpush1.bf16.msra.mxu0 0
    %1560 = vmatprep.subr.bf16.mxu0 0
    %1561 = vmatpush1.bf16.msra.mxu0 0
    %1562 = vmatprep.subr.bf16.mxu0 0
    %1563 = vmatpush1.bf16.msra.mxu0 0
    %1564 = vmatprep.subr.bf16.mxu0 0
    %1565 = vmatpush1.bf16.msra.mxu0 0
    %1566 = vmatprep.subr.bf16.mxu0 0
    %1567 = vmatpush1.bf16.msra.mxu0 0
    %1568 = vmatprep.subr.bf16.mxu0 0
    %1569 = vmatpush1.bf16.msra.mxu0 0
    %1570 = vmatprep.subr.bf16.mxu0 0
    %1571 = vmatpush1.bf16.msra.mxu0 0
    %1572 = vmatprep.subr.bf16.mxu0 0
    %1573 = vmatpush1.bf16.msra.mxu0 0
    %1574 = vmatprep.subr.bf16.mxu0 0
    %1575 = vmatpush1.bf16.msra.mxu0 0
    %1576 = vmatprep.mubr.bf16.mxu0 0
    %1577 = vmatmul.mubr.bf16.gmra.mrb[0].mxu0 %v69
    %v1578 = vpop.f32.mrb[0].mxu0
    %v1579 = vadd.f32 %v1530, %v1578
    %v1580 = vpop.f32.mrb[0].mxu0
    %v1581 = vpop.f32.mrb[0].mxu0
    %v1582 = vadd.f32 %v1530, %v1581
    %v1583 = vpop.f32.mrb[0].mxu0
    %1584 = vdwg.mxu0
    %s1585 = scalar_lea.vmem %s1, 176
    %v1586 = vld [vmem:[%s1585] sm:$0xf]
    %v1587 = vld [vmem:[%s1585 + $0x4] sm:$0xf]
    %v1588 = vld [vmem:[%s1585 + $0x8] sm:$0xf]
    %v1589 = vld [vmem:[%s1585 + $0xc] sm:$0xf]
    %s1590 = scalar_lea.vmem %s2, 11
    %v1591 = vld [vmem:[%s1590] sm:$0x1]
    %v1593 = vlaneseq
    %v1594 = vshrl.u32 %v1593, 7
    %v1595 = vsub.s32 0, %v1594
    %v1596 = vrot.slane %v1591, %v1595
    %v1602 = vunpack.c.l.b16 %v1586
    %v1603 = vunpack.c.l.b16 %v1587
    %v1604 = vunpack.c.l.b16 %v1588
    %v1605 = vunpack.c.l.b16 %v1589
    %v1606 = vpack.c.b16 %v1603, %v1602
    %v1607 = vpack.c.b16 %v1605, %v1604
    %1610 = vmatprep.subr.bf16.mxu0 0
    %1611 = vmatpush1.bf16.msra.mxu0 %v1606
    %1612 = vmatprep.subr.bf16.mxu0 0
    %1613 = vmatpush1.bf16.msra.mxu0 %v1607
    %1614 = vmatprep.subr.bf16.mxu0 0
    %1615 = vmatpush1.bf16.msra.mxu0 0
    %1616 = vmatprep.subr.bf16.mxu0 0
    %1617 = vmatpush1.bf16.msra.mxu0 0
    %1618 = vmatprep.subr.bf16.mxu0 0
    %1619 = vmatpush1.bf16.msra.mxu0 0
    %1620 = vmatprep.subr.bf16.mxu0 0
    %1621 = vmatpush1.bf16.msra.mxu0 0
    %1622 = vmatprep.subr.bf16.mxu0 0
    %1623 = vmatpush1.bf16.msra.mxu0 0
    %1624 = vmatprep.subr.bf16.mxu0 0
    %1625 = vmatpush1.bf16.msra.mxu0 0
    %1626 = vmatprep.subr.bf16.mxu0 0
    %1627 = vmatpush1.bf16.msra.mxu0 0
    %1628 = vmatprep.subr.bf16.mxu0 0
    %1629 = vmatpush1.bf16.msra.mxu0 0
    %1630 = vmatprep.subr.bf16.mxu0 0
    %1631 = vmatpush1.bf16.msra.mxu0 0
    %1632 = vmatprep.subr.bf16.mxu0 0
    %1633 = vmatpush1.bf16.msra.mxu0 0
    %1634 = vmatprep.subr.bf16.mxu0 0
    %1635 = vmatpush1.bf16.msra.mxu0 0
    %1636 = vmatprep.subr.bf16.mxu0 0
    %1637 = vmatpush1.bf16.msra.mxu0 0
    %1638 = vmatprep.subr.bf16.mxu0 0
    %1639 = vmatpush1.bf16.msra.mxu0 0
    %1640 = vmatprep.subr.bf16.mxu0 0
    %1641 = vmatpush1.bf16.msra.mxu0 0
    %1642 = vmatprep.mubr.bf16.mxu0 0
    %1643 = vmatmul.mubr.bf16.gmra.mrb[0].mxu0 %v69
    %v1644 = vpop.f32.mrb[0].mxu0
    %v1645 = vadd.f32 %v1596, %v1644
    %v1646 = vpop.f32.mrb[0].mxu0
    %v1647 = vpop.f32.mrb[0].mxu0
    %v1648 = vadd.f32 %v1596, %v1647
    %v1649 = vpop.f32.mrb[0].mxu0
    %1650 = vdwg.mxu0
    %v1651 = vpack.c.bf16 %v1513, %v1513
    %v1652 = vpack.c.bf16 %v1516, %v1516
    %v1653 = vpack.c.bf16 %v1579, %v1579
    %v1654 = vpack.c.bf16 %v1582, %v1582
    %v1656 = vsel %vm248, %v1651, 0
    %v1659 = vsel %vm248, %v1653, 0
    %1661 = vmatprep.subr.bf16.mxu0 0
    %1662 = vmatpush1.bf16.xpose.msra.mxu0 %v1659
    %1663 = vmatprep.subr.bf16.mxu0 0
    %1664 = vmatpush1.bf16.xpose.msra.mxu0 0
    %1665 = vmatprep.subr.bf16.mxu0 0
    %1666 = vmatpush1.bf16.xpose.msra.mxu0 0
    %1667 = vmatprep.subr.bf16.mxu0 0
    %1668 = vmatpush1.bf16.xpose.msra.mxu0 0
    %1669 = vmatprep.subr.bf16.mxu0 0
    %1670 = vmatpush1.bf16.xpose.msra.mxu0 0
    %1671 = vmatprep.subr.bf16.mxu0 0
    %1672 = vmatpush1.bf16.xpose.msra.mxu0 0
    %1673 = vmatprep.subr.bf16.mxu0 0
    %1674 = vmatpush1.bf16.xpose.msra.mxu0 0
    %1675 = vmatprep.subr.bf16.mxu0 0
    %1676 = vmatpush1.bf16.xpose.msra.mxu0 0
    %1677 = vmatprep.subr.bf16.mxu0 0
    %1678 = vmatpush1.bf16.xpose.msra.mxu0 0
    %1679 = vmatprep.subr.bf16.mxu0 0
    %1680 = vmatpush1.bf16.xpose.msra.mxu0 0
    %1681 = vmatprep.subr.bf16.mxu0 0
    %1682 = vmatpush1.bf16.xpose.msra.mxu0 0
    %1683 = vmatprep.subr.bf16.mxu0 0
    %1684 = vmatpush1.bf16.xpose.msra.mxu0 0
    %1685 = vmatprep.subr.bf16.mxu0 0
    %1686 = vmatpush1.bf16.xpose.msra.mxu0 0
    %1687 = vmatprep.subr.bf16.mxu0 0
    %1688 = vmatpush1.bf16.xpose.msra.mxu0 0
    %1689 = vmatprep.subr.bf16.mxu0 0
    %1690 = vmatpush1.bf16.xpose.msra.mxu0 0
    %1691 = vmatprep.subr.bf16.mxu0 0
    %1692 = vmatpush1.bf16.xpose.msra.mxu0 0
    %1693 = vmatprep.mubr.bf16.mxu0 0
    %1694 = vmatmul.mubr.bf16.gmra.mrb[0].mxu0 %v1656
    %v1695 = vpop.f32.mrb[0].mxu0
    %v1696 = vadd.f32 0.0, %v1695
    %v1697 = vpop.f32.mrb[0].mxu0
    %v1698 = vpop.f32.mrb[0].mxu0
    %v1699 = vpop.f32.mrb[0].mxu0
    %1700 = vdwg.mxu0
    %v1702 = vsel %vm248, %v1652, 0
    %v1705 = vsel %vm248, %v1654, 0
    %1707 = vmatprep.subr.bf16.mxu0 0
    %1708 = vmatpush1.bf16.xpose.msra.mxu0 %v1705
    %1709 = vmatprep.subr.bf16.mxu0 0
    %1710 = vmatpush1.bf16.xpose.msra.mxu0 0
    %1711 = vmatprep.subr.bf16.mxu0 0
    %1712 = vmatpush1.bf16.xpose.msra.mxu0 0
    %1713 = vmatprep.subr.bf16.mxu0 0
    %1714 = vmatpush1.bf16.xpose.msra.mxu0 0
    %1715 = vmatprep.subr.bf16.mxu0 0
    %1716 = vmatpush1.bf16.xpose.msra.mxu0 0
    %1717 = vmatprep.subr.bf16.mxu0 0
    %1718 = vmatpush1.bf16.xpose.msra.mxu0 0
    %1719 = vmatprep.subr.bf16.mxu0 0
    %1720 = vmatpush1.bf16.xpose.msra.mxu0 0
    %1721 = vmatprep.subr.bf16.mxu0 0
    %1722 = vmatpush1.bf16.xpose.msra.mxu0 0
    %1723 = vmatprep.subr.bf16.mxu0 0
    %1724 = vmatpush1.bf16.xpose.msra.mxu0 0
    %1725 = vmatprep.subr.bf16.mxu0 0
    %1726 = vmatpush1.bf16.xpose.msra.mxu0 0
    %1727 = vmatprep.subr.bf16.mxu0 0
    %1728 = vmatpush1.bf16.xpose.msra.mxu0 0
    %1729 = vmatprep.subr.bf16.mxu0 0
    %1730 = vmatpush1.bf16.xpose.msra.mxu0 0
    %1731 = vmatprep.subr.bf16.mxu0 0
    %1732 = vmatpush1.bf16.xpose.msra.mxu0 0
    %1733 = vmatprep.subr.bf16.mxu0 0
    %1734 = vmatpush1.bf16.xpose.msra.mxu0 0
    %1735 = vmatprep.subr.bf16.mxu0 0
    %1736 = vmatpush1.bf16.xpose.msra.mxu0 0
    %1737 = vmatprep.subr.bf16.mxu0 0
    %1738 = vmatpush1.bf16.xpose.msra.mxu0 0
    %1739 = vmatprep.mubr.bf16.mxu0 0
    %1740 = vmatmul.mubr.bf16.gmra.mrb[0].mxu0 %v1702
    %v1741 = vpop.f32.mrb[0].mxu0
    %v1742 = vadd.f32 0.0, %v1741
    %v1743 = vpop.f32.mrb[0].mxu0
    %v1744 = vpop.f32.mrb[0].mxu0
    %v1745 = vpop.f32.mrb[0].mxu0
    %1746 = vdwg.mxu0
    %v1747 = vsel %vm248, %v1696, -inf
    %1748 = vmax.xlane.f32.xlu0 %v1747
    %v1749 = vpop.xlane.xlu0 %1748
    %v1750 = vsel %vm248, %v1742, -inf
    %1751 = vmax.xlane.f32.xlu0 %v1750
    %v1752 = vpop.xlane.xlu0 %1751
    %v1753 = vsub.f32 %v1696, %v1749
    %v1754 = vsub.f32 %v1742, %v1752
    %v1755 = vmul.f32 %v1753, 1.442695
    %v1756 = vpow.pop %v1755
    %v1757 = vmul.f32 %v1754, 1.442695
    %v1758 = vpow.pop %v1757
    %v1759 = vsel %vm248, %v1756, 0.0
    %1760 = vadd.xlane.f32.xlu0 %v1759
    %v1761 = vpop.xlane.xlu0 %1760
    %v1762 = vsel %vm248, %v1758, 0.0
    %1763 = vadd.xlane.f32.xlu0 %v1762
    %v1764 = vpop.xlane.xlu0 %1763
    %v1765 = vrcp.pop %v1761
    %v1766 = vrcp.pop %v1764
    %v1767 = vmul.f32 %v1761, %v1765
    %v1768 = vmul.f32 %v1764, %v1766
    %v1769 = vsub.f32 2.0, %v1767
    %v1770 = vsub.f32 2.0, %v1768
    %v1771 = vmul.f32 %v1765, %v1769
    %v1772 = vmul.f32 %v1766, %v1770
    %v1773 = vmul.f32 %v1756, %v1771
    %v1774 = vmul.f32 %v1758, %v1772
    %v1775 = vpack.c.bf16 %v1773, %v1773
    %v1776 = vpack.c.bf16 %v1774, %v1774
    %v1777 = vpack.c.bf16 %v1645, %v1645
    %v1778 = vpack.c.bf16 %v1648, %v1648
    %v1780 = vsel %vm248, %v1775, 0
    %v1783 = vsel %vm376, %v1777, 0
    %1785 = vmatprep.subr.bf16.mxu0 0
    %1786 = vmatpush1.bf16.msra.mxu0 %v1783
    %1787 = vmatprep.subr.bf16.mxu0 0
    %1788 = vmatpush1.bf16.msra.mxu0 0
    %1789 = vmatprep.subr.bf16.mxu0 0
    %1790 = vmatpush1.bf16.msra.mxu0 0
    %1791 = vmatprep.subr.bf16.mxu0 0
    %1792 = vmatpush1.bf16.msra.mxu0 0
    %1793 = vmatprep.subr.bf16.mxu0 0
    %1794 = vmatpush1.bf16.msra.mxu0 0
    %1795 = vmatprep.subr.bf16.mxu0 0
    %1796 = vmatpush1.bf16.msra.mxu0 0
    %1797 = vmatprep.subr.bf16.mxu0 0
    %1798 = vmatpush1.bf16.msra.mxu0 0
    %1799 = vmatprep.subr.bf16.mxu0 0
    %1800 = vmatpush1.bf16.msra.mxu0 0
    %1801 = vmatprep.subr.bf16.mxu0 0
    %1802 = vmatpush1.bf16.msra.mxu0 0
    %1803 = vmatprep.subr.bf16.mxu0 0
    %1804 = vmatpush1.bf16.msra.mxu0 0
    %1805 = vmatprep.subr.bf16.mxu0 0
    %1806 = vmatpush1.bf16.msra.mxu0 0
    %1807 = vmatprep.subr.bf16.mxu0 0
    %1808 = vmatpush1.bf16.msra.mxu0 0
    %1809 = vmatprep.subr.bf16.mxu0 0
    %1810 = vmatpush1.bf16.msra.mxu0 0
    %1811 = vmatprep.subr.bf16.mxu0 0
    %1812 = vmatpush1.bf16.msra.mxu0 0
    %1813 = vmatprep.subr.bf16.mxu0 0
    %1814 = vmatpush1.bf16.msra.mxu0 0
    %1815 = vmatprep.subr.bf16.mxu0 0
    %1816 = vmatpush1.bf16.msra.mxu0 0
    %1817 = vmatprep.mubr.bf16.mxu0 0
    %1818 = vmatmul.mubr.bf16.gmra.mrb[0].mxu0 %v1780
    %v1819 = vpop.f32.mrb[0].mxu0
    %v1820 = vadd.f32 0.0, %v1819
    %v1821 = vpop.f32.mrb[0].mxu0
    %v1822 = vpop.f32.mrb[0].mxu0
    %v1823 = vpop.f32.mrb[0].mxu0
    %1824 = vdwg.mxu0
    %v1826 = vsel %vm248, %v1776, 0
    %v1829 = vsel %vm376, %v1778, 0
    %1831 = vmatprep.subr.bf16.mxu0 0
    %1832 = vmatpush1.bf16.msra.mxu0 %v1829
    %1833 = vmatprep.subr.bf16.mxu0 0
    %1834 = vmatpush1.bf16.msra.mxu0 0
    %1835 = vmatprep.subr.bf16.mxu0 0
    %1836 = vmatpush1.bf16.msra.mxu0 0
    %1837 = vmatprep.subr.bf16.mxu0 0
    %1838 = vmatpush1.bf16.msra.mxu0 0
    %1839 = vmatprep.subr.bf16.mxu0 0
    %1840 = vmatpush1.bf16.msra.mxu0 0
    %1841 = vmatprep.subr.bf16.mxu0 0
    %1842 = vmatpush1.bf16.msra.mxu0 0
    %1843 = vmatprep.subr.bf16.mxu0 0
    %1844 = vmatpush1.bf16.msra.mxu0 0
    %1845 = vmatprep.subr.bf16.mxu0 0
    %1846 = vmatpush1.bf16.msra.mxu0 0
    %1847 = vmatprep.subr.bf16.mxu0 0
    %1848 = vmatpush1.bf16.msra.mxu0 0
    %1849 = vmatprep.subr.bf16.mxu0 0
    %1850 = vmatpush1.bf16.msra.mxu0 0
    %1851 = vmatprep.subr.bf16.mxu0 0
    %1852 = vmatpush1.bf16.msra.mxu0 0
    %1853 = vmatprep.subr.bf16.mxu0 0
    %1854 = vmatpush1.bf16.msra.mxu0 0
    %1855 = vmatprep.subr.bf16.mxu0 0
    %1856 = vmatpush1.bf16.msra.mxu0 0
    %1857 = vmatprep.subr.bf16.mxu0 0
    %1858 = vmatpush1.bf16.msra.mxu0 0
    %1859 = vmatprep.subr.bf16.mxu0 0
    %1860 = vmatpush1.bf16.msra.mxu0 0
    %1861 = vmatprep.subr.bf16.mxu0 0
    %1862 = vmatpush1.bf16.msra.mxu0 0
    %1863 = vmatprep.mubr.bf16.mxu0 0
    %1864 = vmatmul.mubr.bf16.gmra.mrb[0].mxu0 %v1826
    %v1865 = vpop.f32.mrb[0].mxu0
    %v1866 = vadd.f32 0.0, %v1865
    %v1867 = vpop.f32.mrb[0].mxu0
    %v1868 = vpop.f32.mrb[0].mxu0
    %v1869 = vpop.f32.mrb[0].mxu0
    %1870 = vdwg.mxu0
    %v1871 = vpack.c.bf16 %v1866, %v1820
    %s1872 = scalar_lea.vmem %s3, 12
    %v1873 = vld [vmem:[%s1872] sm:$0xf]
    %v1875 = vsel %vm248, %v1871, 0
    %v1878 = vsel %vm376, %v1873, 0
    %1880 = vmatprep.subr.bf16.mxu0 0
    %1881 = vmatpush1.bf16.msra.mxu0 %v1878
    %1882 = vmatprep.subr.bf16.mxu0 0
    %1883 = vmatpush1.bf16.msra.mxu0 0
    %1884 = vmatprep.subr.bf16.mxu0 0
    %1885 = vmatpush1.bf16.msra.mxu0 0
    %1886 = vmatprep.subr.bf16.mxu0 0
    %1887 = vmatpush1.bf16.msra.mxu0 0
    %1888 = vmatprep.subr.bf16.mxu0 0
    %1889 = vmatpush1.bf16.msra.mxu0 0
    %1890 = vmatprep.subr.bf16.mxu0 0
    %1891 = vmatpush1.bf16.msra.mxu0 0
    %1892 = vmatprep.subr.bf16.mxu0 0
    %1893 = vmatpush1.bf16.msra.mxu0 0
    %1894 = vmatprep.subr.bf16.mxu0 0
    %1895 = vmatpush1.bf16.msra.mxu0 0
    %1896 = vmatprep.subr.bf16.mxu0 0
    %1897 = vmatpush1.bf16.msra.mxu0 0
    %1898 = vmatprep.subr.bf16.mxu0 0
    %1899 = vmatpush1.bf16.msra.mxu0 0
    %1900 = vmatprep.subr.bf16.mxu0 0
    %1901 = vmatpush1.bf16.msra.mxu0 0
    %1902 = vmatprep.subr.bf16.mxu0 0
    %1903 = vmatpush1.bf16.msra.mxu0 0
    %1904 = vmatprep.subr.bf16.mxu0 0
    %1905 = vmatpush1.bf16.msra.mxu0 0
    %1906 = vmatprep.subr.bf16.mxu0 0
    %1907 = vmatpush1.bf16.msra.mxu0 0
    %1908 = vmatprep.subr.bf16.mxu0 0
    %1909 = vmatpush1.bf16.msra.mxu0 0
    %1910 = vmatprep.subr.bf16.mxu0 0
    %1911 = vmatpush1.bf16.msra.mxu0 0
    %1912 = vmatprep.mubr.bf16.mxu0 0
    %1913 = vmatmul.mubr.bf16.gmra.mrb[0].mxu0 %v1875
    %v1914 = vpop.f32.mrb[0].mxu0
    %v1915 = vadd.f32 0.0, %v1914
    %v1916 = vpop.f32.mrb[0].mxu0
    %v1917 = vpop.f32.mrb[0].mxu0
    %v1918 = vadd.f32 0.0, %v1917
    %v1919 = vpop.f32.mrb[0].mxu0
    %1920 = vdwg.mxu0
    %v1921 = vadd.f32 %v1451, %v1915
    %v1922 = vadd.f32 %v1452, %v1918
    %v1923 = vlaneseq
    %v1924 = vshrl.u32 %v1923, 7
    %v1925 = vsub.s32 0, %v1924
    %v1926 = vrot.slane %v42, %v1925
    %v1927 = vadd.f32 %v1921, %v1926
    %v1928 = vadd.f32 %v1922, %v1926
    %v1929 = vadd.f32 %v40, %v1927
    %v1930 = vadd.f32 %v41, %v1928
    %v1931 = vsel %vm67, %v1929, 0.0
    %1932 = vadd.xlane.f32.xlu0 %v1931
    %v1933 = vpop.xlane.xlu0 %1932
    %v1934 = vsel %vm67, %v1930, 0.0
    %1935 = vadd.xlane.f32.xlu0 %v1934
    %v1936 = vpop.xlane.xlu0 %1935
    %v1937 = vrcp.pop 32.0
    %v1938 = vmul.f32 %v1933, %v1937
    %v1939 = vmul.f32 %v1936, %v1937
    %v1940 = vsub.f32 %v1929, %v1938
    %v1941 = vsub.f32 %v1930, %v1939
    %v1942 = vmul.f32 %v1940, %v1940
    %v1943 = vmul.f32 %v1941, %v1941
    %v1944 = vsel %vm67, %v1942, 0.0
    %1945 = vadd.xlane.f32.xlu0 %v1944
    %v1946 = vpop.xlane.xlu0 %1945
    %v1947 = vsel %vm67, %v1943, 0.0
    %1948 = vadd.xlane.f32.xlu0 %v1947
    %v1949 = vpop.xlane.xlu0 %1948
    %v1950 = vmul.f32 %v1946, %v1937
    %v1951 = vmul.f32 %v1949, %v1937
    %v1952 = vadd.f32 %v1950, 1e-05
    %v1953 = vadd.f32 %v1951, 1e-05
    %v1954 = vrsqrt.pop %v1952
    %v1955 = vrsqrt.pop %v1953
    %v1956 = vmul.f32 %v1940, %v1954
    %v1957 = vmul.f32 %v1941, %v1955
    %v1958 = vlaneseq
    %v1959 = vshrl.u32 %v1958, 7
    %v1960 = vsub.s32 1, %v1959
    %v1961 = vrot.slane %v42, %v1960
    %v1962 = vmul.f32 %v1956, %v1961
    %v1963 = vmul.f32 %v1957, %v1961
    %v1964 = vlaneseq
    %v1965 = vshrl.u32 %v1964, 7
    %v1966 = vsub.s32 2, %v1965
    %v1967 = vrot.slane %v42, %v1966
    %v1968 = vadd.f32 %v1962, %v1967
    %v1969 = vadd.f32 %v1963, %v1967
    %v1970 = vpack.c.bf16 %v1969, %v1968
    %v1971 = vld [vmem:[%s4] sm:$0xf]
    %v1972 = vld [vmem:[%s4 + $0x4] sm:$0xf]
    %v1973 = vld [vmem:[%s4 + $0x8] sm:$0xf]
    %v1974 = vld [vmem:[%s4 + $0xc] sm:$0xf]
    %v1975 = vlaneseq
    %v1976 = vshrl.u32 %v1975, 7
    %v1977 = vsub.s32 3, %v1976
    %v1978 = vrot.slane %v42, %v1977
    %v1983 = vunpack.c.l.b16 %v1971
    %v1984 = vunpack.c.l.b16 %v1972
    %v1985 = vunpack.c.l.b16 %v1973
    %v1986 = vunpack.c.l.b16 %v1974
    %v1987 = vpack.c.b16 %v1984, %v1983
    %v1988 = vpack.c.b16 %v1986, %v1985
    %v1992 = vsel %vm67, %v1970, 0
    %1994 = vmatprep.subr.bf16.mxu0 0
    %1995 = vmatpush1.bf16.msra.mxu0 %v1987
    %1996 = vmatprep.subr.bf16.mxu0 0
    %1997 = vmatpush1.bf16.msra.mxu0 %v1988
    %1998 = vmatprep.subr.bf16.mxu0 0
    %1999 = vmatpush1.bf16.msra.mxu0 0
    %2000 = vmatprep.subr.bf16.mxu0 0
    %2001 = vmatpush1.bf16.msra.mxu0 0
    %2002 = vmatprep.subr.bf16.mxu0 0
    %2003 = vmatpush1.bf16.msra.mxu0 0
    %2004 = vmatprep.subr.bf16.mxu0 0
    %2005 = vmatpush1.bf16.msra.mxu0 0
    %2006 = vmatprep.subr.bf16.mxu0 0
    %2007 = vmatpush1.bf16.msra.mxu0 0
    %2008 = vmatprep.subr.bf16.mxu0 0
    %2009 = vmatpush1.bf16.msra.mxu0 0
    %2010 = vmatprep.subr.bf16.mxu0 0
    %2011 = vmatpush1.bf16.msra.mxu0 0
    %2012 = vmatprep.subr.bf16.mxu0 0
    %2013 = vmatpush1.bf16.msra.mxu0 0
    %2014 = vmatprep.subr.bf16.mxu0 0
    %2015 = vmatpush1.bf16.msra.mxu0 0
    %2016 = vmatprep.subr.bf16.mxu0 0
    %2017 = vmatpush1.bf16.msra.mxu0 0
    %2018 = vmatprep.subr.bf16.mxu0 0
    %2019 = vmatpush1.bf16.msra.mxu0 0
    %2020 = vmatprep.subr.bf16.mxu0 0
    %2021 = vmatpush1.bf16.msra.mxu0 0
    %2022 = vmatprep.subr.bf16.mxu0 0
    %2023 = vmatpush1.bf16.msra.mxu0 0
    %2024 = vmatprep.subr.bf16.mxu0 0
    %2025 = vmatpush1.bf16.msra.mxu0 0
    %2026 = vmatprep.mubr.bf16.mxu0 0
    %2027 = vmatmul.mubr.bf16.gmra.mrb[0].mxu0 %v1992
    %v2028 = vpop.f32.mrb[0].mxu0
    %v2029 = vadd.f32 %v1978, %v2028
    %v2030 = vpop.f32.mrb[0].mxu0
    %v2031 = vpop.f32.mrb[0].mxu0
    %v2032 = vadd.f32 %v1978, %v2031
    %v2033 = vpop.f32.mrb[0].mxu0
    %2034 = vdwg.mxu0
    %v2035 = vmax.f32 %v2029, 0.0
    %v2036 = vmax.f32 %v2032, 0.0
    %v2037 = vpack.c.bf16 %v2036, %v2035
    %v2038 = vld [vmem:[%s5] sm:$0xf]
    %v2039 = vld [vmem:[%s5 + $0x4] sm:$0xf]
    %v2040 = vld [vmem:[%s5 + $0x8] sm:$0xf]
    %v2041 = vld [vmem:[%s5 + $0xc] sm:$0xf]
    %v2042 = vlaneseq
    %v2043 = vshrl.u32 %v2042, 7
    %v2044 = vsub.s32 4, %v2043
    %v2045 = vrot.slane %v42, %v2044
    %v2050 = vunpack.c.l.b16 %v2038
    %v2051 = vunpack.c.l.b16 %v2039
    %v2052 = vunpack.c.l.b16 %v2040
    %v2053 = vunpack.c.l.b16 %v2041
    %v2054 = vpack.c.b16 %v2051, %v2050
    %v2055 = vpack.c.b16 %v2053, %v2052
    %v2059 = vsel %vm67, %v2037, 0
    %2061 = vmatprep.subr.bf16.mxu0 0
    %2062 = vmatpush1.bf16.msra.mxu0 %v2054
    %2063 = vmatprep.subr.bf16.mxu0 0
    %2064 = vmatpush1.bf16.msra.mxu0 %v2055
    %2065 = vmatprep.subr.bf16.mxu0 0
    %2066 = vmatpush1.bf16.msra.mxu0 0
    %2067 = vmatprep.subr.bf16.mxu0 0
    %2068 = vmatpush1.bf16.msra.mxu0 0
    %2069 = vmatprep.subr.bf16.mxu0 0
    %2070 = vmatpush1.bf16.msra.mxu0 0
    %2071 = vmatprep.subr.bf16.mxu0 0
    %2072 = vmatpush1.bf16.msra.mxu0 0
    %2073 = vmatprep.subr.bf16.mxu0 0
    %2074 = vmatpush1.bf16.msra.mxu0 0
    %2075 = vmatprep.subr.bf16.mxu0 0
    %2076 = vmatpush1.bf16.msra.mxu0 0
    %2077 = vmatprep.subr.bf16.mxu0 0
    %2078 = vmatpush1.bf16.msra.mxu0 0
    %2079 = vmatprep.subr.bf16.mxu0 0
    %2080 = vmatpush1.bf16.msra.mxu0 0
    %2081 = vmatprep.subr.bf16.mxu0 0
    %2082 = vmatpush1.bf16.msra.mxu0 0
    %2083 = vmatprep.subr.bf16.mxu0 0
    %2084 = vmatpush1.bf16.msra.mxu0 0
    %2085 = vmatprep.subr.bf16.mxu0 0
    %2086 = vmatpush1.bf16.msra.mxu0 0
    %2087 = vmatprep.subr.bf16.mxu0 0
    %2088 = vmatpush1.bf16.msra.mxu0 0
    %2089 = vmatprep.subr.bf16.mxu0 0
    %2090 = vmatpush1.bf16.msra.mxu0 0
    %2091 = vmatprep.subr.bf16.mxu0 0
    %2092 = vmatpush1.bf16.msra.mxu0 0
    %2093 = vmatprep.mubr.bf16.mxu0 0
    %2094 = vmatmul.mubr.bf16.gmra.mrb[0].mxu0 %v2059
    %v2095 = vpop.f32.mrb[0].mxu0
    %v2096 = vadd.f32 %v2045, %v2095
    %v2097 = vpop.f32.mrb[0].mxu0
    %v2098 = vpop.f32.mrb[0].mxu0
    %v2099 = vadd.f32 %v2045, %v2098
    %v2100 = vpop.f32.mrb[0].mxu0
    %2101 = vdwg.mxu0
    %v2102 = vadd.f32 %v1968, %v2096
    %v2103 = vadd.f32 %v1969, %v2099
    %v2104 = vsel %vm67, %v2102, 0.0
    %2105 = vadd.xlane.f32.xlu0 %v2104
    %v2106 = vpop.xlane.xlu0 %2105
    %v2107 = vsel %vm67, %v2103, 0.0
    %2108 = vadd.xlane.f32.xlu0 %v2107
    %v2109 = vpop.xlane.xlu0 %2108
    %v2110 = vmul.f32 %v2106, %v1937
    %v2111 = vmul.f32 %v2109, %v1937
    %v2112 = vsub.f32 %v2102, %v2110
    %v2113 = vsub.f32 %v2103, %v2111
    %v2114 = vmul.f32 %v2112, %v2112
    %v2115 = vmul.f32 %v2113, %v2113
    %v2116 = vsel %vm67, %v2114, 0.0
    %2117 = vadd.xlane.f32.xlu0 %v2116
    %v2118 = vpop.xlane.xlu0 %2117
    %v2119 = vsel %vm67, %v2115, 0.0
    %2120 = vadd.xlane.f32.xlu0 %v2119
    %v2121 = vpop.xlane.xlu0 %2120
    %v2122 = vmul.f32 %v2118, %v1937
    %v2123 = vmul.f32 %v2121, %v1937
    %v2124 = vadd.f32 %v2122, 1e-05
    %v2125 = vadd.f32 %v2123, 1e-05
    %v2126 = vrsqrt.pop %v2124
    %v2127 = vrsqrt.pop %v2125
    %v2128 = vmul.f32 %v2112, %v2126
    %v2129 = vmul.f32 %v2113, %v2127
    %v2130 = vlaneseq
    %v2131 = vshrl.u32 %v2130, 7
    %v2132 = vsub.s32 5, %v2131
    %v2133 = vrot.slane %v42, %v2132
    %v2134 = vmul.f32 %v2128, %v2133
    %v2135 = vmul.f32 %v2129, %v2133
    %v2136 = vlaneseq
    %v2137 = vshrl.u32 %v2136, 7
    %v2138 = vsub.s32 6, %v2137
    %v2139 = vrot.slane %v42, %v2138
    %v2140 = vadd.f32 %v2134, %v2139
    %v2141 = vadd.f32 %v2135, %v2139
    %s2142 = scalar_lea.vmem %s6, 8
    %v2143 = vld [vmem:[%s2142] sm:$0xff]
    %v2144 = vpack.c.bf16 %v2141, %v2140
    %s2145 = scalar_lea.vmem %s1, 192
    %v2146 = vld [vmem:[%s2145] sm:$0xf]
    %v2147 = vld [vmem:[%s2145 + $0x4] sm:$0xf]
    %v2148 = vld [vmem:[%s2145 + $0x8] sm:$0xf]
    %v2149 = vld [vmem:[%s2145 + $0xc] sm:$0xf]
    %s2150 = scalar_lea.vmem %s2, 12
    %v2151 = vld [vmem:[%s2150] sm:$0x1]
    %v2153 = vlaneseq
    %v2154 = vshrl.u32 %v2153, 7
    %v2155 = vsub.s32 0, %v2154
    %v2156 = vrot.slane %v2151, %v2155
    %v2162 = vunpack.c.l.b16 %v2146
    %v2163 = vunpack.c.l.b16 %v2147
    %v2164 = vunpack.c.l.b16 %v2148
    %v2165 = vunpack.c.l.b16 %v2149
    %v2166 = vpack.c.b16 %v2163, %v2162
    %v2167 = vpack.c.b16 %v2165, %v2164
    %v2171 = vsel %vm67, %v2144, 0
    %2173 = vmatprep.subr.bf16.mxu0 0
    %2174 = vmatpush1.bf16.msra.mxu0 %v2166
    %2175 = vmatprep.subr.bf16.mxu0 0
    %2176 = vmatpush1.bf16.msra.mxu0 %v2167
    %2177 = vmatprep.subr.bf16.mxu0 0
    %2178 = vmatpush1.bf16.msra.mxu0 0
    %2179 = vmatprep.subr.bf16.mxu0 0
    %2180 = vmatpush1.bf16.msra.mxu0 0
    %2181 = vmatprep.subr.bf16.mxu0 0
    %2182 = vmatpush1.bf16.msra.mxu0 0
    %2183 = vmatprep.subr.bf16.mxu0 0
    %2184 = vmatpush1.bf16.msra.mxu0 0
    %2185 = vmatprep.subr.bf16.mxu0 0
    %2186 = vmatpush1.bf16.msra.mxu0 0
    %2187 = vmatprep.subr.bf16.mxu0 0
    %2188 = vmatpush1.bf16.msra.mxu0 0
    %2189 = vmatprep.subr.bf16.mxu0 0
    %2190 = vmatpush1.bf16.msra.mxu0 0
    %2191 = vmatprep.subr.bf16.mxu0 0
    %2192 = vmatpush1.bf16.msra.mxu0 0
    %2193 = vmatprep.subr.bf16.mxu0 0
    %2194 = vmatpush1.bf16.msra.mxu0 0
    %2195 = vmatprep.subr.bf16.mxu0 0
    %2196 = vmatpush1.bf16.msra.mxu0 0
    %2197 = vmatprep.subr.bf16.mxu0 0
    %2198 = vmatpush1.bf16.msra.mxu0 0
    %2199 = vmatprep.subr.bf16.mxu0 0
    %2200 = vmatpush1.bf16.msra.mxu0 0
    %2201 = vmatprep.subr.bf16.mxu0 0
    %2202 = vmatpush1.bf16.msra.mxu0 0
    %2203 = vmatprep.subr.bf16.mxu0 0
    %2204 = vmatpush1.bf16.msra.mxu0 0
    %2205 = vmatprep.mubr.bf16.mxu0 0
    %2206 = vmatmul.mubr.bf16.gmra.mrb[0].mxu0 %v2171
    %v2207 = vpop.f32.mrb[0].mxu0
    %v2208 = vadd.f32 %v2156, %v2207
    %v2209 = vpop.f32.mrb[0].mxu0
    %v2210 = vpop.f32.mrb[0].mxu0
    %v2211 = vadd.f32 %v2156, %v2210
    %v2212 = vpop.f32.mrb[0].mxu0
    %2213 = vdwg.mxu0
    %s2214 = scalar_lea.vmem %s1, 256
    %v2215 = vld [vmem:[%s2214] sm:$0xf]
    %v2216 = vld [vmem:[%s2214 + $0x4] sm:$0xf]
    %v2217 = vld [vmem:[%s2214 + $0x8] sm:$0xf]
    %v2218 = vld [vmem:[%s2214 + $0xc] sm:$0xf]
    %s2219 = scalar_lea.vmem %s2, 16
    %v2220 = vld [vmem:[%s2219] sm:$0x1]
    %v2222 = vlaneseq
    %v2223 = vshrl.u32 %v2222, 7
    %v2224 = vsub.s32 0, %v2223
    %v2225 = vrot.slane %v2220, %v2224
    %v2231 = vunpack.c.l.b16 %v2215
    %v2232 = vunpack.c.l.b16 %v2216
    %v2233 = vunpack.c.l.b16 %v2217
    %v2234 = vunpack.c.l.b16 %v2218
    %v2235 = vpack.c.b16 %v2232, %v2231
    %v2236 = vpack.c.b16 %v2234, %v2233
    %2239 = vmatprep.subr.bf16.mxu0 0
    %2240 = vmatpush1.bf16.msra.mxu0 %v2235
    %2241 = vmatprep.subr.bf16.mxu0 0
    %2242 = vmatpush1.bf16.msra.mxu0 %v2236
    %2243 = vmatprep.subr.bf16.mxu0 0
    %2244 = vmatpush1.bf16.msra.mxu0 0
    %2245 = vmatprep.subr.bf16.mxu0 0
    %2246 = vmatpush1.bf16.msra.mxu0 0
    %2247 = vmatprep.subr.bf16.mxu0 0
    %2248 = vmatpush1.bf16.msra.mxu0 0
    %2249 = vmatprep.subr.bf16.mxu0 0
    %2250 = vmatpush1.bf16.msra.mxu0 0
    %2251 = vmatprep.subr.bf16.mxu0 0
    %2252 = vmatpush1.bf16.msra.mxu0 0
    %2253 = vmatprep.subr.bf16.mxu0 0
    %2254 = vmatpush1.bf16.msra.mxu0 0
    %2255 = vmatprep.subr.bf16.mxu0 0
    %2256 = vmatpush1.bf16.msra.mxu0 0
    %2257 = vmatprep.subr.bf16.mxu0 0
    %2258 = vmatpush1.bf16.msra.mxu0 0
    %2259 = vmatprep.subr.bf16.mxu0 0
    %2260 = vmatpush1.bf16.msra.mxu0 0
    %2261 = vmatprep.subr.bf16.mxu0 0
    %2262 = vmatpush1.bf16.msra.mxu0 0
    %2263 = vmatprep.subr.bf16.mxu0 0
    %2264 = vmatpush1.bf16.msra.mxu0 0
    %2265 = vmatprep.subr.bf16.mxu0 0
    %2266 = vmatpush1.bf16.msra.mxu0 0
    %2267 = vmatprep.subr.bf16.mxu0 0
    %2268 = vmatpush1.bf16.msra.mxu0 0
    %2269 = vmatprep.subr.bf16.mxu0 0
    %2270 = vmatpush1.bf16.msra.mxu0 0
    %2271 = vmatprep.mubr.bf16.mxu0 0
    %2272 = vmatmul.mubr.bf16.gmra.mrb[0].mxu0 %v2171
    %v2273 = vpop.f32.mrb[0].mxu0
    %v2274 = vadd.f32 %v2225, %v2273
    %v2275 = vpop.f32.mrb[0].mxu0
    %v2276 = vpop.f32.mrb[0].mxu0
    %v2277 = vadd.f32 %v2225, %v2276
    %v2278 = vpop.f32.mrb[0].mxu0
    %2279 = vdwg.mxu0
    %s2280 = scalar_lea.vmem %s1, 320
    %v2281 = vld [vmem:[%s2280] sm:$0xf]
    %v2282 = vld [vmem:[%s2280 + $0x4] sm:$0xf]
    %v2283 = vld [vmem:[%s2280 + $0x8] sm:$0xf]
    %v2284 = vld [vmem:[%s2280 + $0xc] sm:$0xf]
    %s2285 = scalar_lea.vmem %s2, 20
    %v2286 = vld [vmem:[%s2285] sm:$0x1]
    %v2288 = vlaneseq
    %v2289 = vshrl.u32 %v2288, 7
    %v2290 = vsub.s32 0, %v2289
    %v2291 = vrot.slane %v2286, %v2290
    %v2297 = vunpack.c.l.b16 %v2281
    %v2298 = vunpack.c.l.b16 %v2282
    %v2299 = vunpack.c.l.b16 %v2283
    %v2300 = vunpack.c.l.b16 %v2284
    %v2301 = vpack.c.b16 %v2298, %v2297
    %v2302 = vpack.c.b16 %v2300, %v2299
    %2305 = vmatprep.subr.bf16.mxu0 0
    %2306 = vmatpush1.bf16.msra.mxu0 %v2301
    %2307 = vmatprep.subr.bf16.mxu0 0
    %2308 = vmatpush1.bf16.msra.mxu0 %v2302
    %2309 = vmatprep.subr.bf16.mxu0 0
    %2310 = vmatpush1.bf16.msra.mxu0 0
    %2311 = vmatprep.subr.bf16.mxu0 0
    %2312 = vmatpush1.bf16.msra.mxu0 0
    %2313 = vmatprep.subr.bf16.mxu0 0
    %2314 = vmatpush1.bf16.msra.mxu0 0
    %2315 = vmatprep.subr.bf16.mxu0 0
    %2316 = vmatpush1.bf16.msra.mxu0 0
    %2317 = vmatprep.subr.bf16.mxu0 0
    %2318 = vmatpush1.bf16.msra.mxu0 0
    %2319 = vmatprep.subr.bf16.mxu0 0
    %2320 = vmatpush1.bf16.msra.mxu0 0
    %2321 = vmatprep.subr.bf16.mxu0 0
    %2322 = vmatpush1.bf16.msra.mxu0 0
    %2323 = vmatprep.subr.bf16.mxu0 0
    %2324 = vmatpush1.bf16.msra.mxu0 0
    %2325 = vmatprep.subr.bf16.mxu0 0
    %2326 = vmatpush1.bf16.msra.mxu0 0
    %2327 = vmatprep.subr.bf16.mxu0 0
    %2328 = vmatpush1.bf16.msra.mxu0 0
    %2329 = vmatprep.subr.bf16.mxu0 0
    %2330 = vmatpush1.bf16.msra.mxu0 0
    %2331 = vmatprep.subr.bf16.mxu0 0
    %2332 = vmatpush1.bf16.msra.mxu0 0
    %2333 = vmatprep.subr.bf16.mxu0 0
    %2334 = vmatpush1.bf16.msra.mxu0 0
    %2335 = vmatprep.subr.bf16.mxu0 0
    %2336 = vmatpush1.bf16.msra.mxu0 0
    %2337 = vmatprep.mubr.bf16.mxu0 0
    %2338 = vmatmul.mubr.bf16.gmra.mrb[0].mxu0 %v2171
    %v2339 = vpop.f32.mrb[0].mxu0
    %v2340 = vadd.f32 %v2291, %v2339
    %v2341 = vpop.f32.mrb[0].mxu0
    %v2342 = vpop.f32.mrb[0].mxu0
    %v2343 = vadd.f32 %v2291, %v2342
    %v2344 = vpop.f32.mrb[0].mxu0
    %2345 = vdwg.mxu0
    %v2346 = vpack.c.bf16 %v2208, %v2208
    %v2347 = vpack.c.bf16 %v2211, %v2211
    %v2348 = vpack.c.bf16 %v2274, %v2274
    %v2349 = vpack.c.bf16 %v2277, %v2277
    %v2351 = vsel %vm248, %v2346, 0
    %v2354 = vsel %vm248, %v2348, 0
    %2356 = vmatprep.subr.bf16.mxu0 0
    %2357 = vmatpush1.bf16.xpose.msra.mxu0 %v2354
    %2358 = vmatprep.subr.bf16.mxu0 0
    %2359 = vmatpush1.bf16.xpose.msra.mxu0 0
    %2360 = vmatprep.subr.bf16.mxu0 0
    %2361 = vmatpush1.bf16.xpose.msra.mxu0 0
    %2362 = vmatprep.subr.bf16.mxu0 0
    %2363 = vmatpush1.bf16.xpose.msra.mxu0 0
    %2364 = vmatprep.subr.bf16.mxu0 0
    %2365 = vmatpush1.bf16.xpose.msra.mxu0 0
    %2366 = vmatprep.subr.bf16.mxu0 0
    %2367 = vmatpush1.bf16.xpose.msra.mxu0 0
    %2368 = vmatprep.subr.bf16.mxu0 0
    %2369 = vmatpush1.bf16.xpose.msra.mxu0 0
    %2370 = vmatprep.subr.bf16.mxu0 0
    %2371 = vmatpush1.bf16.xpose.msra.mxu0 0
    %2372 = vmatprep.subr.bf16.mxu0 0
    %2373 = vmatpush1.bf16.xpose.msra.mxu0 0
    %2374 = vmatprep.subr.bf16.mxu0 0
    %2375 = vmatpush1.bf16.xpose.msra.mxu0 0
    %2376 = vmatprep.subr.bf16.mxu0 0
    %2377 = vmatpush1.bf16.xpose.msra.mxu0 0
    %2378 = vmatprep.subr.bf16.mxu0 0
    %2379 = vmatpush1.bf16.xpose.msra.mxu0 0
    %2380 = vmatprep.subr.bf16.mxu0 0
    %2381 = vmatpush1.bf16.xpose.msra.mxu0 0
    %2382 = vmatprep.subr.bf16.mxu0 0
    %2383 = vmatpush1.bf16.xpose.msra.mxu0 0
    %2384 = vmatprep.subr.bf16.mxu0 0
    %2385 = vmatpush1.bf16.xpose.msra.mxu0 0
    %2386 = vmatprep.subr.bf16.mxu0 0
    %2387 = vmatpush1.bf16.xpose.msra.mxu0 0
    %2388 = vmatprep.mubr.bf16.mxu0 0
    %2389 = vmatmul.mubr.bf16.gmra.mrb[0].mxu0 %v2351
    %v2390 = vpop.f32.mrb[0].mxu0
    %v2391 = vadd.f32 0.0, %v2390
    %v2392 = vpop.f32.mrb[0].mxu0
    %v2393 = vpop.f32.mrb[0].mxu0
    %v2394 = vpop.f32.mrb[0].mxu0
    %2395 = vdwg.mxu0
    %v2397 = vsel %vm248, %v2347, 0
    %v2400 = vsel %vm248, %v2349, 0
    %2402 = vmatprep.subr.bf16.mxu0 0
    %2403 = vmatpush1.bf16.xpose.msra.mxu0 %v2400
    %2404 = vmatprep.subr.bf16.mxu0 0
    %2405 = vmatpush1.bf16.xpose.msra.mxu0 0
    %2406 = vmatprep.subr.bf16.mxu0 0
    %2407 = vmatpush1.bf16.xpose.msra.mxu0 0
    %2408 = vmatprep.subr.bf16.mxu0 0
    %2409 = vmatpush1.bf16.xpose.msra.mxu0 0
    %2410 = vmatprep.subr.bf16.mxu0 0
    %2411 = vmatpush1.bf16.xpose.msra.mxu0 0
    %2412 = vmatprep.subr.bf16.mxu0 0
    %2413 = vmatpush1.bf16.xpose.msra.mxu0 0
    %2414 = vmatprep.subr.bf16.mxu0 0
    %2415 = vmatpush1.bf16.xpose.msra.mxu0 0
    %2416 = vmatprep.subr.bf16.mxu0 0
    %2417 = vmatpush1.bf16.xpose.msra.mxu0 0
    %2418 = vmatprep.subr.bf16.mxu0 0
    %2419 = vmatpush1.bf16.xpose.msra.mxu0 0
    %2420 = vmatprep.subr.bf16.mxu0 0
    %2421 = vmatpush1.bf16.xpose.msra.mxu0 0
    %2422 = vmatprep.subr.bf16.mxu0 0
    %2423 = vmatpush1.bf16.xpose.msra.mxu0 0
    %2424 = vmatprep.subr.bf16.mxu0 0
    %2425 = vmatpush1.bf16.xpose.msra.mxu0 0
    %2426 = vmatprep.subr.bf16.mxu0 0
    %2427 = vmatpush1.bf16.xpose.msra.mxu0 0
    %2428 = vmatprep.subr.bf16.mxu0 0
    %2429 = vmatpush1.bf16.xpose.msra.mxu0 0
    %2430 = vmatprep.subr.bf16.mxu0 0
    %2431 = vmatpush1.bf16.xpose.msra.mxu0 0
    %2432 = vmatprep.subr.bf16.mxu0 0
    %2433 = vmatpush1.bf16.xpose.msra.mxu0 0
    %2434 = vmatprep.mubr.bf16.mxu0 0
    %2435 = vmatmul.mubr.bf16.gmra.mrb[0].mxu0 %v2397
    %v2436 = vpop.f32.mrb[0].mxu0
    %v2437 = vadd.f32 0.0, %v2436
    %v2438 = vpop.f32.mrb[0].mxu0
    %v2439 = vpop.f32.mrb[0].mxu0
    %v2440 = vpop.f32.mrb[0].mxu0
    %2441 = vdwg.mxu0
    %v2442 = vsel %vm248, %v2391, -inf
    %2443 = vmax.xlane.f32.xlu0 %v2442
    %v2444 = vpop.xlane.xlu0 %2443
    %v2445 = vsel %vm248, %v2437, -inf
    %2446 = vmax.xlane.f32.xlu0 %v2445
    %v2447 = vpop.xlane.xlu0 %2446
    %v2448 = vsub.f32 %v2391, %v2444
    %v2449 = vsub.f32 %v2437, %v2447
    %v2450 = vmul.f32 %v2448, 1.442695
    %v2451 = vpow.pop %v2450
    %v2452 = vmul.f32 %v2449, 1.442695
    %v2453 = vpow.pop %v2452
    %v2454 = vsel %vm248, %v2451, 0.0
    %2455 = vadd.xlane.f32.xlu0 %v2454
    %v2456 = vpop.xlane.xlu0 %2455
    %v2457 = vsel %vm248, %v2453, 0.0
    %2458 = vadd.xlane.f32.xlu0 %v2457
    %v2459 = vpop.xlane.xlu0 %2458
    %v2460 = vrcp.pop %v2456
    %v2461 = vrcp.pop %v2459
    %v2462 = vmul.f32 %v2456, %v2460
    %v2463 = vmul.f32 %v2459, %v2461
    %v2464 = vsub.f32 2.0, %v2462
    %v2465 = vsub.f32 2.0, %v2463
    %v2466 = vmul.f32 %v2460, %v2464
    %v2467 = vmul.f32 %v2461, %v2465
    %v2468 = vmul.f32 %v2451, %v2466
    %v2469 = vmul.f32 %v2453, %v2467
    %v2470 = vpack.c.bf16 %v2468, %v2468
    %v2471 = vpack.c.bf16 %v2469, %v2469
    %v2472 = vpack.c.bf16 %v2340, %v2340
    %v2473 = vpack.c.bf16 %v2343, %v2343
    %v2475 = vsel %vm248, %v2470, 0
    %v2478 = vsel %vm376, %v2472, 0
    %2480 = vmatprep.subr.bf16.mxu0 0
    %2481 = vmatpush1.bf16.msra.mxu0 %v2478
    %2482 = vmatprep.subr.bf16.mxu0 0
    %2483 = vmatpush1.bf16.msra.mxu0 0
    %2484 = vmatprep.subr.bf16.mxu0 0
    %2485 = vmatpush1.bf16.msra.mxu0 0
    %2486 = vmatprep.subr.bf16.mxu0 0
    %2487 = vmatpush1.bf16.msra.mxu0 0
    %2488 = vmatprep.subr.bf16.mxu0 0
    %2489 = vmatpush1.bf16.msra.mxu0 0
    %2490 = vmatprep.subr.bf16.mxu0 0
    %2491 = vmatpush1.bf16.msra.mxu0 0
    %2492 = vmatprep.subr.bf16.mxu0 0
    %2493 = vmatpush1.bf16.msra.mxu0 0
    %2494 = vmatprep.subr.bf16.mxu0 0
    %2495 = vmatpush1.bf16.msra.mxu0 0
    %2496 = vmatprep.subr.bf16.mxu0 0
    %2497 = vmatpush1.bf16.msra.mxu0 0
    %2498 = vmatprep.subr.bf16.mxu0 0
    %2499 = vmatpush1.bf16.msra.mxu0 0
    %2500 = vmatprep.subr.bf16.mxu0 0
    %2501 = vmatpush1.bf16.msra.mxu0 0
    %2502 = vmatprep.subr.bf16.mxu0 0
    %2503 = vmatpush1.bf16.msra.mxu0 0
    %2504 = vmatprep.subr.bf16.mxu0 0
    %2505 = vmatpush1.bf16.msra.mxu0 0
    %2506 = vmatprep.subr.bf16.mxu0 0
    %2507 = vmatpush1.bf16.msra.mxu0 0
    %2508 = vmatprep.subr.bf16.mxu0 0
    %2509 = vmatpush1.bf16.msra.mxu0 0
    %2510 = vmatprep.subr.bf16.mxu0 0
    %2511 = vmatpush1.bf16.msra.mxu0 0
    %2512 = vmatprep.mubr.bf16.mxu0 0
    %2513 = vmatmul.mubr.bf16.gmra.mrb[0].mxu0 %v2475
    %v2514 = vpop.f32.mrb[0].mxu0
    %v2515 = vadd.f32 0.0, %v2514
    %v2516 = vpop.f32.mrb[0].mxu0
    %v2517 = vpop.f32.mrb[0].mxu0
    %v2518 = vpop.f32.mrb[0].mxu0
    %2519 = vdwg.mxu0
    %v2521 = vsel %vm248, %v2471, 0
    %v2524 = vsel %vm376, %v2473, 0
    %2526 = vmatprep.subr.bf16.mxu0 0
    %2527 = vmatpush1.bf16.msra.mxu0 %v2524
    %2528 = vmatprep.subr.bf16.mxu0 0
    %2529 = vmatpush1.bf16.msra.mxu0 0
    %2530 = vmatprep.subr.bf16.mxu0 0
    %2531 = vmatpush1.bf16.msra.mxu0 0
    %2532 = vmatprep.subr.bf16.mxu0 0
    %2533 = vmatpush1.bf16.msra.mxu0 0
    %2534 = vmatprep.subr.bf16.mxu0 0
    %2535 = vmatpush1.bf16.msra.mxu0 0
    %2536 = vmatprep.subr.bf16.mxu0 0
    %2537 = vmatpush1.bf16.msra.mxu0 0
    %2538 = vmatprep.subr.bf16.mxu0 0
    %2539 = vmatpush1.bf16.msra.mxu0 0
    %2540 = vmatprep.subr.bf16.mxu0 0
    %2541 = vmatpush1.bf16.msra.mxu0 0
    %2542 = vmatprep.subr.bf16.mxu0 0
    %2543 = vmatpush1.bf16.msra.mxu0 0
    %2544 = vmatprep.subr.bf16.mxu0 0
    %2545 = vmatpush1.bf16.msra.mxu0 0
    %2546 = vmatprep.subr.bf16.mxu0 0
    %2547 = vmatpush1.bf16.msra.mxu0 0
    %2548 = vmatprep.subr.bf16.mxu0 0
    %2549 = vmatpush1.bf16.msra.mxu0 0
    %2550 = vmatprep.subr.bf16.mxu0 0
    %2551 = vmatpush1.bf16.msra.mxu0 0
    %2552 = vmatprep.subr.bf16.mxu0 0
    %2553 = vmatpush1.bf16.msra.mxu0 0
    %2554 = vmatprep.subr.bf16.mxu0 0
    %2555 = vmatpush1.bf16.msra.mxu0 0
    %2556 = vmatprep.subr.bf16.mxu0 0
    %2557 = vmatpush1.bf16.msra.mxu0 0
    %2558 = vmatprep.mubr.bf16.mxu0 0
    %2559 = vmatmul.mubr.bf16.gmra.mrb[0].mxu0 %v2521
    %v2560 = vpop.f32.mrb[0].mxu0
    %v2561 = vadd.f32 0.0, %v2560
    %v2562 = vpop.f32.mrb[0].mxu0
    %v2563 = vpop.f32.mrb[0].mxu0
    %v2564 = vpop.f32.mrb[0].mxu0
    %2565 = vdwg.mxu0
    %v2566 = vpack.c.bf16 %v2561, %v2515
    %s2567 = scalar_lea.vmem %s3, 16
    %v2568 = vld [vmem:[%s2567] sm:$0xf]
    %s2569 = scalar_lea.vmem %s1, 208
    %v2570 = vld [vmem:[%s2569] sm:$0xf]
    %v2571 = vld [vmem:[%s2569 + $0x4] sm:$0xf]
    %v2572 = vld [vmem:[%s2569 + $0x8] sm:$0xf]
    %v2573 = vld [vmem:[%s2569 + $0xc] sm:$0xf]
    %s2574 = scalar_lea.vmem %s2, 13
    %v2575 = vld [vmem:[%s2574] sm:$0x1]
    %v2577 = vlaneseq
    %v2578 = vshrl.u32 %v2577, 7
    %v2579 = vsub.s32 0, %v2578
    %v2580 = vrot.slane %v2575, %v2579
    %v2586 = vunpack.c.l.b16 %v2570
    %v2587 = vunpack.c.l.b16 %v2571
    %v2588 = vunpack.c.l.b16 %v2572
    %v2589 = vunpack.c.l.b16 %v2573
    %v2590 = vpack.c.b16 %v2587, %v2586
    %v2591 = vpack.c.b16 %v2589, %v2588
    %2594 = vmatprep.subr.bf16.mxu0 0
    %2595 = vmatpush1.bf16.msra.mxu0 %v2590
    %2596 = vmatprep.subr.bf16.mxu0 0
    %2597 = vmatpush1.bf16.msra.mxu0 %v2591
    %2598 = vmatprep.subr.bf16.mxu0 0
    %2599 = vmatpush1.bf16.msra.mxu0 0
    %2600 = vmatprep.subr.bf16.mxu0 0
    %2601 = vmatpush1.bf16.msra.mxu0 0
    %2602 = vmatprep.subr.bf16.mxu0 0
    %2603 = vmatpush1.bf16.msra.mxu0 0
    %2604 = vmatprep.subr.bf16.mxu0 0
    %2605 = vmatpush1.bf16.msra.mxu0 0
    %2606 = vmatprep.subr.bf16.mxu0 0
    %2607 = vmatpush1.bf16.msra.mxu0 0
    %2608 = vmatprep.subr.bf16.mxu0 0
    %2609 = vmatpush1.bf16.msra.mxu0 0
    %2610 = vmatprep.subr.bf16.mxu0 0
    %2611 = vmatpush1.bf16.msra.mxu0 0
    %2612 = vmatprep.subr.bf16.mxu0 0
    %2613 = vmatpush1.bf16.msra.mxu0 0
    %2614 = vmatprep.subr.bf16.mxu0 0
    %2615 = vmatpush1.bf16.msra.mxu0 0
    %2616 = vmatprep.subr.bf16.mxu0 0
    %2617 = vmatpush1.bf16.msra.mxu0 0
    %2618 = vmatprep.subr.bf16.mxu0 0
    %2619 = vmatpush1.bf16.msra.mxu0 0
    %2620 = vmatprep.subr.bf16.mxu0 0
    %2621 = vmatpush1.bf16.msra.mxu0 0
    %2622 = vmatprep.subr.bf16.mxu0 0
    %2623 = vmatpush1.bf16.msra.mxu0 0
    %2624 = vmatprep.subr.bf16.mxu0 0
    %2625 = vmatpush1.bf16.msra.mxu0 0
    %2626 = vmatprep.mubr.bf16.mxu0 0
    %2627 = vmatmul.mubr.bf16.gmra.mrb[0].mxu0 %v2171
    %v2628 = vpop.f32.mrb[0].mxu0
    %v2629 = vadd.f32 %v2580, %v2628
    %v2630 = vpop.f32.mrb[0].mxu0
    %v2631 = vpop.f32.mrb[0].mxu0
    %v2632 = vadd.f32 %v2580, %v2631
    %v2633 = vpop.f32.mrb[0].mxu0
    %2634 = vdwg.mxu0
    %s2635 = scalar_lea.vmem %s1, 272
    %v2636 = vld [vmem:[%s2635] sm:$0xf]
    %v2637 = vld [vmem:[%s2635 + $0x4] sm:$0xf]
    %v2638 = vld [vmem:[%s2635 + $0x8] sm:$0xf]
    %v2639 = vld [vmem:[%s2635 + $0xc] sm:$0xf]
    %s2640 = scalar_lea.vmem %s2, 17
    %v2641 = vld [vmem:[%s2640] sm:$0x1]
    %v2643 = vlaneseq
    %v2644 = vshrl.u32 %v2643, 7
    %v2645 = vsub.s32 0, %v2644
    %v2646 = vrot.slane %v2641, %v2645
    %v2652 = vunpack.c.l.b16 %v2636
    %v2653 = vunpack.c.l.b16 %v2637
    %v2654 = vunpack.c.l.b16 %v2638
    %v2655 = vunpack.c.l.b16 %v2639
    %v2656 = vpack.c.b16 %v2653, %v2652
    %v2657 = vpack.c.b16 %v2655, %v2654
    %2660 = vmatprep.subr.bf16.mxu0 0
    %2661 = vmatpush1.bf16.msra.mxu0 %v2656
    %2662 = vmatprep.subr.bf16.mxu0 0
    %2663 = vmatpush1.bf16.msra.mxu0 %v2657
    %2664 = vmatprep.subr.bf16.mxu0 0
    %2665 = vmatpush1.bf16.msra.mxu0 0
    %2666 = vmatprep.subr.bf16.mxu0 0
    %2667 = vmatpush1.bf16.msra.mxu0 0
    %2668 = vmatprep.subr.bf16.mxu0 0
    %2669 = vmatpush1.bf16.msra.mxu0 0
    %2670 = vmatprep.subr.bf16.mxu0 0
    %2671 = vmatpush1.bf16.msra.mxu0 0
    %2672 = vmatprep.subr.bf16.mxu0 0
    %2673 = vmatpush1.bf16.msra.mxu0 0
    %2674 = vmatprep.subr.bf16.mxu0 0
    %2675 = vmatpush1.bf16.msra.mxu0 0
    %2676 = vmatprep.subr.bf16.mxu0 0
    %2677 = vmatpush1.bf16.msra.mxu0 0
    %2678 = vmatprep.subr.bf16.mxu0 0
    %2679 = vmatpush1.bf16.msra.mxu0 0
    %2680 = vmatprep.subr.bf16.mxu0 0
    %2681 = vmatpush1.bf16.msra.mxu0 0
    %2682 = vmatprep.subr.bf16.mxu0 0
    %2683 = vmatpush1.bf16.msra.mxu0 0
    %2684 = vmatprep.subr.bf16.mxu0 0
    %2685 = vmatpush1.bf16.msra.mxu0 0
    %2686 = vmatprep.subr.bf16.mxu0 0
    %2687 = vmatpush1.bf16.msra.mxu0 0
    %2688 = vmatprep.subr.bf16.mxu0 0
    %2689 = vmatpush1.bf16.msra.mxu0 0
    %2690 = vmatprep.subr.bf16.mxu0 0
    %2691 = vmatpush1.bf16.msra.mxu0 0
    %2692 = vmatprep.mubr.bf16.mxu0 0
    %2693 = vmatmul.mubr.bf16.gmra.mrb[0].mxu0 %v2171
    %v2694 = vpop.f32.mrb[0].mxu0
    %v2695 = vadd.f32 %v2646, %v2694
    %v2696 = vpop.f32.mrb[0].mxu0
    %v2697 = vpop.f32.mrb[0].mxu0
    %v2698 = vadd.f32 %v2646, %v2697
    %v2699 = vpop.f32.mrb[0].mxu0
    %2700 = vdwg.mxu0
    %s2701 = scalar_lea.vmem %s1, 336
    %v2702 = vld [vmem:[%s2701] sm:$0xf]
    %v2703 = vld [vmem:[%s2701 + $0x4] sm:$0xf]
    %v2704 = vld [vmem:[%s2701 + $0x8] sm:$0xf]
    %v2705 = vld [vmem:[%s2701 + $0xc] sm:$0xf]
    %s2706 = scalar_lea.vmem %s2, 21
    %v2707 = vld [vmem:[%s2706] sm:$0x1]
    %v2709 = vlaneseq
    %v2710 = vshrl.u32 %v2709, 7
    %v2711 = vsub.s32 0, %v2710
    %v2712 = vrot.slane %v2707, %v2711
    %v2718 = vunpack.c.l.b16 %v2702
    %v2719 = vunpack.c.l.b16 %v2703
    %v2720 = vunpack.c.l.b16 %v2704
    %v2721 = vunpack.c.l.b16 %v2705
    %v2722 = vpack.c.b16 %v2719, %v2718
    %v2723 = vpack.c.b16 %v2721, %v2720
    %2726 = vmatprep.subr.bf16.mxu0 0
    %2727 = vmatpush1.bf16.msra.mxu0 %v2722
    %2728 = vmatprep.subr.bf16.mxu0 0
    %2729 = vmatpush1.bf16.msra.mxu0 %v2723
    %2730 = vmatprep.subr.bf16.mxu0 0
    %2731 = vmatpush1.bf16.msra.mxu0 0
    %2732 = vmatprep.subr.bf16.mxu0 0
    %2733 = vmatpush1.bf16.msra.mxu0 0
    %2734 = vmatprep.subr.bf16.mxu0 0
    %2735 = vmatpush1.bf16.msra.mxu0 0
    %2736 = vmatprep.subr.bf16.mxu0 0
    %2737 = vmatpush1.bf16.msra.mxu0 0
    %2738 = vmatprep.subr.bf16.mxu0 0
    %2739 = vmatpush1.bf16.msra.mxu0 0
    %2740 = vmatprep.subr.bf16.mxu0 0
    %2741 = vmatpush1.bf16.msra.mxu0 0
    %2742 = vmatprep.subr.bf16.mxu0 0
    %2743 = vmatpush1.bf16.msra.mxu0 0
    %2744 = vmatprep.subr.bf16.mxu0 0
    %2745 = vmatpush1.bf16.msra.mxu0 0
    %2746 = vmatprep.subr.bf16.mxu0 0
    %2747 = vmatpush1.bf16.msra.mxu0 0
    %2748 = vmatprep.subr.bf16.mxu0 0
    %2749 = vmatpush1.bf16.msra.mxu0 0
    %2750 = vmatprep.subr.bf16.mxu0 0
    %2751 = vmatpush1.bf16.msra.mxu0 0
    %2752 = vmatprep.subr.bf16.mxu0 0
    %2753 = vmatpush1.bf16.msra.mxu0 0
    %2754 = vmatprep.subr.bf16.mxu0 0
    %2755 = vmatpush1.bf16.msra.mxu0 0
    %2756 = vmatprep.subr.bf16.mxu0 0
    %2757 = vmatpush1.bf16.msra.mxu0 0
    %2758 = vmatprep.mubr.bf16.mxu0 0
    %2759 = vmatmul.mubr.bf16.gmra.mrb[0].mxu0 %v2171
    %v2760 = vpop.f32.mrb[0].mxu0
    %v2761 = vadd.f32 %v2712, %v2760
    %v2762 = vpop.f32.mrb[0].mxu0
    %v2763 = vpop.f32.mrb[0].mxu0
    %v2764 = vadd.f32 %v2712, %v2763
    %v2765 = vpop.f32.mrb[0].mxu0
    %2766 = vdwg.mxu0
    %v2767 = vpack.c.bf16 %v2629, %v2629
    %v2768 = vpack.c.bf16 %v2632, %v2632
    %v2769 = vpack.c.bf16 %v2695, %v2695
    %v2770 = vpack.c.bf16 %v2698, %v2698
    %v2772 = vsel %vm248, %v2767, 0
    %v2775 = vsel %vm248, %v2769, 0
    %2777 = vmatprep.subr.bf16.mxu0 0
    %2778 = vmatpush1.bf16.xpose.msra.mxu0 %v2775
    %2779 = vmatprep.subr.bf16.mxu0 0
    %2780 = vmatpush1.bf16.xpose.msra.mxu0 0
    %2781 = vmatprep.subr.bf16.mxu0 0
    %2782 = vmatpush1.bf16.xpose.msra.mxu0 0
    %2783 = vmatprep.subr.bf16.mxu0 0
    %2784 = vmatpush1.bf16.xpose.msra.mxu0 0
    %2785 = vmatprep.subr.bf16.mxu0 0
    %2786 = vmatpush1.bf16.xpose.msra.mxu0 0
    %2787 = vmatprep.subr.bf16.mxu0 0
    %2788 = vmatpush1.bf16.xpose.msra.mxu0 0
    %2789 = vmatprep.subr.bf16.mxu0 0
    %2790 = vmatpush1.bf16.xpose.msra.mxu0 0
    %2791 = vmatprep.subr.bf16.mxu0 0
    %2792 = vmatpush1.bf16.xpose.msra.mxu0 0
    %2793 = vmatprep.subr.bf16.mxu0 0
    %2794 = vmatpush1.bf16.xpose.msra.mxu0 0
    %2795 = vmatprep.subr.bf16.mxu0 0
    %2796 = vmatpush1.bf16.xpose.msra.mxu0 0
    %2797 = vmatprep.subr.bf16.mxu0 0
    %2798 = vmatpush1.bf16.xpose.msra.mxu0 0
    %2799 = vmatprep.subr.bf16.mxu0 0
    %2800 = vmatpush1.bf16.xpose.msra.mxu0 0
    %2801 = vmatprep.subr.bf16.mxu0 0
    %2802 = vmatpush1.bf16.xpose.msra.mxu0 0
    %2803 = vmatprep.subr.bf16.mxu0 0
    %2804 = vmatpush1.bf16.xpose.msra.mxu0 0
    %2805 = vmatprep.subr.bf16.mxu0 0
    %2806 = vmatpush1.bf16.xpose.msra.mxu0 0
    %2807 = vmatprep.subr.bf16.mxu0 0
    %2808 = vmatpush1.bf16.xpose.msra.mxu0 0
    %2809 = vmatprep.mubr.bf16.mxu0 0
    %2810 = vmatmul.mubr.bf16.gmra.mrb[0].mxu0 %v2772
    %v2811 = vpop.f32.mrb[0].mxu0
    %v2812 = vadd.f32 0.0, %v2811
    %v2813 = vpop.f32.mrb[0].mxu0
    %v2814 = vpop.f32.mrb[0].mxu0
    %v2815 = vpop.f32.mrb[0].mxu0
    %2816 = vdwg.mxu0
    %v2818 = vsel %vm248, %v2768, 0
    %v2821 = vsel %vm248, %v2770, 0
    %2823 = vmatprep.subr.bf16.mxu0 0
    %2824 = vmatpush1.bf16.xpose.msra.mxu0 %v2821
    %2825 = vmatprep.subr.bf16.mxu0 0
    %2826 = vmatpush1.bf16.xpose.msra.mxu0 0
    %2827 = vmatprep.subr.bf16.mxu0 0
    %2828 = vmatpush1.bf16.xpose.msra.mxu0 0
    %2829 = vmatprep.subr.bf16.mxu0 0
    %2830 = vmatpush1.bf16.xpose.msra.mxu0 0
    %2831 = vmatprep.subr.bf16.mxu0 0
    %2832 = vmatpush1.bf16.xpose.msra.mxu0 0
    %2833 = vmatprep.subr.bf16.mxu0 0
    %2834 = vmatpush1.bf16.xpose.msra.mxu0 0
    %2835 = vmatprep.subr.bf16.mxu0 0
    %2836 = vmatpush1.bf16.xpose.msra.mxu0 0
    %2837 = vmatprep.subr.bf16.mxu0 0
    %2838 = vmatpush1.bf16.xpose.msra.mxu0 0
    %2839 = vmatprep.subr.bf16.mxu0 0
    %2840 = vmatpush1.bf16.xpose.msra.mxu0 0
    %2841 = vmatprep.subr.bf16.mxu0 0
    %2842 = vmatpush1.bf16.xpose.msra.mxu0 0
    %2843 = vmatprep.subr.bf16.mxu0 0
    %2844 = vmatpush1.bf16.xpose.msra.mxu0 0
    %2845 = vmatprep.subr.bf16.mxu0 0
    %2846 = vmatpush1.bf16.xpose.msra.mxu0 0
    %2847 = vmatprep.subr.bf16.mxu0 0
    %2848 = vmatpush1.bf16.xpose.msra.mxu0 0
    %2849 = vmatprep.subr.bf16.mxu0 0
    %2850 = vmatpush1.bf16.xpose.msra.mxu0 0
    %2851 = vmatprep.subr.bf16.mxu0 0
    %2852 = vmatpush1.bf16.xpose.msra.mxu0 0
    %2853 = vmatprep.subr.bf16.mxu0 0
    %2854 = vmatpush1.bf16.xpose.msra.mxu0 0
    %2855 = vmatprep.mubr.bf16.mxu0 0
    %2856 = vmatmul.mubr.bf16.gmra.mrb[0].mxu0 %v2818
    %v2857 = vpop.f32.mrb[0].mxu0
    %v2858 = vadd.f32 0.0, %v2857
    %v2859 = vpop.f32.mrb[0].mxu0
    %v2860 = vpop.f32.mrb[0].mxu0
    %v2861 = vpop.f32.mrb[0].mxu0
    %2862 = vdwg.mxu0
    %v2863 = vsel %vm248, %v2812, -inf
    %2864 = vmax.xlane.f32.xlu0 %v2863
    %v2865 = vpop.xlane.xlu0 %2864
    %v2866 = vsel %vm248, %v2858, -inf
    %2867 = vmax.xlane.f32.xlu0 %v2866
    %v2868 = vpop.xlane.xlu0 %2867
    %v2869 = vsub.f32 %v2812, %v2865
    %v2870 = vsub.f32 %v2858, %v2868
    %v2871 = vmul.f32 %v2869, 1.442695
    %v2872 = vpow.pop %v2871
    %v2873 = vmul.f32 %v2870, 1.442695
    %v2874 = vpow.pop %v2873
    %v2875 = vsel %vm248, %v2872, 0.0
    %2876 = vadd.xlane.f32.xlu0 %v2875
    %v2877 = vpop.xlane.xlu0 %2876
    %v2878 = vsel %vm248, %v2874, 0.0
    %2879 = vadd.xlane.f32.xlu0 %v2878
    %v2880 = vpop.xlane.xlu0 %2879
    %v2881 = vrcp.pop %v2877
    %v2882 = vrcp.pop %v2880
    %v2883 = vmul.f32 %v2877, %v2881
    %v2884 = vmul.f32 %v2880, %v2882
    %v2885 = vsub.f32 2.0, %v2883
    %v2886 = vsub.f32 2.0, %v2884
    %v2887 = vmul.f32 %v2881, %v2885
    %v2888 = vmul.f32 %v2882, %v2886
    %v2889 = vmul.f32 %v2872, %v2887
    %v2890 = vmul.f32 %v2874, %v2888
    %v2891 = vpack.c.bf16 %v2889, %v2889
    %v2892 = vpack.c.bf16 %v2890, %v2890
    %v2893 = vpack.c.bf16 %v2761, %v2761
    %v2894 = vpack.c.bf16 %v2764, %v2764
    %v2896 = vsel %vm248, %v2891, 0
    %v2899 = vsel %vm376, %v2893, 0
    %2901 = vmatprep.subr.bf16.mxu0 0
    %2902 = vmatpush1.bf16.msra.mxu0 %v2899
    %2903 = vmatprep.subr.bf16.mxu0 0
    %2904 = vmatpush1.bf16.msra.mxu0 0
    %2905 = vmatprep.subr.bf16.mxu0 0
    %2906 = vmatpush1.bf16.msra.mxu0 0
    %2907 = vmatprep.subr.bf16.mxu0 0
    %2908 = vmatpush1.bf16.msra.mxu0 0
    %2909 = vmatprep.subr.bf16.mxu0 0
    %2910 = vmatpush1.bf16.msra.mxu0 0
    %2911 = vmatprep.subr.bf16.mxu0 0
    %2912 = vmatpush1.bf16.msra.mxu0 0
    %2913 = vmatprep.subr.bf16.mxu0 0
    %2914 = vmatpush1.bf16.msra.mxu0 0
    %2915 = vmatprep.subr.bf16.mxu0 0
    %2916 = vmatpush1.bf16.msra.mxu0 0
    %2917 = vmatprep.subr.bf16.mxu0 0
    %2918 = vmatpush1.bf16.msra.mxu0 0
    %2919 = vmatprep.subr.bf16.mxu0 0
    %2920 = vmatpush1.bf16.msra.mxu0 0
    %2921 = vmatprep.subr.bf16.mxu0 0
    %2922 = vmatpush1.bf16.msra.mxu0 0
    %2923 = vmatprep.subr.bf16.mxu0 0
    %2924 = vmatpush1.bf16.msra.mxu0 0
    %2925 = vmatprep.subr.bf16.mxu0 0
    %2926 = vmatpush1.bf16.msra.mxu0 0
    %2927 = vmatprep.subr.bf16.mxu0 0
    %2928 = vmatpush1.bf16.msra.mxu0 0
    %2929 = vmatprep.subr.bf16.mxu0 0
    %2930 = vmatpush1.bf16.msra.mxu0 0
    %2931 = vmatprep.subr.bf16.mxu0 0
    %2932 = vmatpush1.bf16.msra.mxu0 0
    %2933 = vmatprep.mubr.bf16.mxu0 0
    %2934 = vmatmul.mubr.bf16.gmra.mrb[0].mxu0 %v2896
    %v2935 = vpop.f32.mrb[0].mxu0
    %v2936 = vadd.f32 0.0, %v2935
    %v2937 = vpop.f32.mrb[0].mxu0
    %v2938 = vpop.f32.mrb[0].mxu0
    %v2939 = vpop.f32.mrb[0].mxu0
    %2940 = vdwg.mxu0
    %v2942 = vsel %vm248, %v2892, 0
    %v2945 = vsel %vm376, %v2894, 0
    %2947 = vmatprep.subr.bf16.mxu0 0
    %2948 = vmatpush1.bf16.msra.mxu0 %v2945
    %2949 = vmatprep.subr.bf16.mxu0 0
    %2950 = vmatpush1.bf16.msra.mxu0 0
    %2951 = vmatprep.subr.bf16.mxu0 0
    %2952 = vmatpush1.bf16.msra.mxu0 0
    %2953 = vmatprep.subr.bf16.mxu0 0
    %2954 = vmatpush1.bf16.msra.mxu0 0
    %2955 = vmatprep.subr.bf16.mxu0 0
    %2956 = vmatpush1.bf16.msra.mxu0 0
    %2957 = vmatprep.subr.bf16.mxu0 0
    %2958 = vmatpush1.bf16.msra.mxu0 0
    %2959 = vmatprep.subr.bf16.mxu0 0
    %2960 = vmatpush1.bf16.msra.mxu0 0
    %2961 = vmatprep.subr.bf16.mxu0 0
    %2962 = vmatpush1.bf16.msra.mxu0 0
    %2963 = vmatprep.subr.bf16.mxu0 0
    %2964 = vmatpush1.bf16.msra.mxu0 0
    %2965 = vmatprep.subr.bf16.mxu0 0
    %2966 = vmatpush1.bf16.msra.mxu0 0
    %2967 = vmatprep.subr.bf16.mxu0 0
    %2968 = vmatpush1.bf16.msra.mxu0 0
    %2969 = vmatprep.subr.bf16.mxu0 0
    %2970 = vmatpush1.bf16.msra.mxu0 0
    %2971 = vmatprep.subr.bf16.mxu0 0
    %2972 = vmatpush1.bf16.msra.mxu0 0
    %2973 = vmatprep.subr.bf16.mxu0 0
    %2974 = vmatpush1.bf16.msra.mxu0 0
    %2975 = vmatprep.subr.bf16.mxu0 0
    %2976 = vmatpush1.bf16.msra.mxu0 0
    %2977 = vmatprep.subr.bf16.mxu0 0
    %2978 = vmatpush1.bf16.msra.mxu0 0
    %2979 = vmatprep.mubr.bf16.mxu0 0
    %2980 = vmatmul.mubr.bf16.gmra.mrb[0].mxu0 %v2942
    %v2981 = vpop.f32.mrb[0].mxu0
    %v2982 = vadd.f32 0.0, %v2981
    %v2983 = vpop.f32.mrb[0].mxu0
    %v2984 = vpop.f32.mrb[0].mxu0
    %v2985 = vpop.f32.mrb[0].mxu0
    %2986 = vdwg.mxu0
    %v2987 = vpack.c.bf16 %v2982, %v2936
    %s2988 = scalar_lea.vmem %s3, 20
    %v2989 = vld [vmem:[%s2988] sm:$0xf]
    %v2991 = vsel %vm248, %v2987, 0
    %v2994 = vsel %vm376, %v2989, 0
    %2996 = vmatprep.subr.bf16.mxu0 0
    %2997 = vmatpush1.bf16.msra.mxu0 %v2994
    %2998 = vmatprep.subr.bf16.mxu0 0
    %2999 = vmatpush1.bf16.msra.mxu0 0
    %3000 = vmatprep.subr.bf16.mxu0 0
    %3001 = vmatpush1.bf16.msra.mxu0 0
    %3002 = vmatprep.subr.bf16.mxu0 0
    %3003 = vmatpush1.bf16.msra.mxu0 0
    %3004 = vmatprep.subr.bf16.mxu0 0
    %3005 = vmatpush1.bf16.msra.mxu0 0
    %3006 = vmatprep.subr.bf16.mxu0 0
    %3007 = vmatpush1.bf16.msra.mxu0 0
    %3008 = vmatprep.subr.bf16.mxu0 0
    %3009 = vmatpush1.bf16.msra.mxu0 0
    %3010 = vmatprep.subr.bf16.mxu0 0
    %3011 = vmatpush1.bf16.msra.mxu0 0
    %3012 = vmatprep.subr.bf16.mxu0 0
    %3013 = vmatpush1.bf16.msra.mxu0 0
    %3014 = vmatprep.subr.bf16.mxu0 0
    %3015 = vmatpush1.bf16.msra.mxu0 0
    %3016 = vmatprep.subr.bf16.mxu0 0
    %3017 = vmatpush1.bf16.msra.mxu0 0
    %3018 = vmatprep.subr.bf16.mxu0 0
    %3019 = vmatpush1.bf16.msra.mxu0 0
    %3020 = vmatprep.subr.bf16.mxu0 0
    %3021 = vmatpush1.bf16.msra.mxu0 0
    %3022 = vmatprep.subr.bf16.mxu0 0
    %3023 = vmatpush1.bf16.msra.mxu0 0
    %3024 = vmatprep.subr.bf16.mxu0 0
    %3025 = vmatpush1.bf16.msra.mxu0 0
    %3026 = vmatprep.subr.bf16.mxu0 0
    %3027 = vmatpush1.bf16.msra.mxu0 0
    %3028 = vmatprep.mubr.bf16.mxu0 0
    %3029 = vmatmul.mubr.bf16.gmra.mrb[0].mxu0 %v2991
    %v3030 = vpop.f32.mrb[0].mxu0
    %v3031 = vadd.f32 0.0, %v3030
    %v3032 = vpop.f32.mrb[0].mxu0
    %v3033 = vpop.f32.mrb[0].mxu0
    %v3034 = vadd.f32 0.0, %v3033
    %v3035 = vpop.f32.mrb[0].mxu0
    %3036 = vdwg.mxu0
    %v3038 = vsel %vm248, %v2566, 0
    %v3041 = vsel %vm376, %v2568, 0
    %3043 = vmatprep.subr.bf16.mxu0 0
    %3044 = vmatpush1.bf16.msra.mxu0 %v3041
    %3045 = vmatprep.subr.bf16.mxu0 0
    %3046 = vmatpush1.bf16.msra.mxu0 0
    %3047 = vmatprep.subr.bf16.mxu0 0
    %3048 = vmatpush1.bf16.msra.mxu0 0
    %3049 = vmatprep.subr.bf16.mxu0 0
    %3050 = vmatpush1.bf16.msra.mxu0 0
    %3051 = vmatprep.subr.bf16.mxu0 0
    %3052 = vmatpush1.bf16.msra.mxu0 0
    %3053 = vmatprep.subr.bf16.mxu0 0
    %3054 = vmatpush1.bf16.msra.mxu0 0
    %3055 = vmatprep.subr.bf16.mxu0 0
    %3056 = vmatpush1.bf16.msra.mxu0 0
    %3057 = vmatprep.subr.bf16.mxu0 0
    %3058 = vmatpush1.bf16.msra.mxu0 0
    %3059 = vmatprep.subr.bf16.mxu0 0
    %3060 = vmatpush1.bf16.msra.mxu0 0
    %3061 = vmatprep.subr.bf16.mxu0 0
    %3062 = vmatpush1.bf16.msra.mxu0 0
    %3063 = vmatprep.subr.bf16.mxu0 0
    %3064 = vmatpush1.bf16.msra.mxu0 0
    %3065 = vmatprep.subr.bf16.mxu0 0
    %3066 = vmatpush1.bf16.msra.mxu0 0
    %3067 = vmatprep.subr.bf16.mxu0 0
    %3068 = vmatpush1.bf16.msra.mxu0 0
    %3069 = vmatprep.subr.bf16.mxu0 0
    %3070 = vmatpush1.bf16.msra.mxu0 0
    %3071 = vmatprep.subr.bf16.mxu0 0
    %3072 = vmatpush1.bf16.msra.mxu0 0
    %3073 = vmatprep.subr.bf16.mxu0 0
    %3074 = vmatpush1.bf16.msra.mxu0 0
    %3075 = vmatprep.mubr.bf16.mxu0 0
    %3076 = vmatmul.mubr.bf16.gmra.mrb[0].mxu0 %v3038
    %v3077 = vpop.f32.mrb[0].mxu0
    %v3078 = vadd.f32 %v3031, %v3077
    %v3079 = vpop.f32.mrb[0].mxu0
    %v3080 = vpop.f32.mrb[0].mxu0
    %v3081 = vadd.f32 %v3034, %v3080
    %v3082 = vpop.f32.mrb[0].mxu0
    %3083 = vdwg.mxu0
    %s3084 = scalar_lea.vmem %s1, 224
    %v3085 = vld [vmem:[%s3084] sm:$0xf]
    %v3086 = vld [vmem:[%s3084 + $0x4] sm:$0xf]
    %v3087 = vld [vmem:[%s3084 + $0x8] sm:$0xf]
    %v3088 = vld [vmem:[%s3084 + $0xc] sm:$0xf]
    %s3089 = scalar_lea.vmem %s2, 14
    %v3090 = vld [vmem:[%s3089] sm:$0x1]
    %v3092 = vlaneseq
    %v3093 = vshrl.u32 %v3092, 7
    %v3094 = vsub.s32 0, %v3093
    %v3095 = vrot.slane %v3090, %v3094
    %v3101 = vunpack.c.l.b16 %v3085
    %v3102 = vunpack.c.l.b16 %v3086
    %v3103 = vunpack.c.l.b16 %v3087
    %v3104 = vunpack.c.l.b16 %v3088
    %v3105 = vpack.c.b16 %v3102, %v3101
    %v3106 = vpack.c.b16 %v3104, %v3103
    %3109 = vmatprep.subr.bf16.mxu0 0
    %3110 = vmatpush1.bf16.msra.mxu0 %v3105
    %3111 = vmatprep.subr.bf16.mxu0 0
    %3112 = vmatpush1.bf16.msra.mxu0 %v3106
    %3113 = vmatprep.subr.bf16.mxu0 0
    %3114 = vmatpush1.bf16.msra.mxu0 0
    %3115 = vmatprep.subr.bf16.mxu0 0
    %3116 = vmatpush1.bf16.msra.mxu0 0
    %3117 = vmatprep.subr.bf16.mxu0 0
    %3118 = vmatpush1.bf16.msra.mxu0 0
    %3119 = vmatprep.subr.bf16.mxu0 0
    %3120 = vmatpush1.bf16.msra.mxu0 0
    %3121 = vmatprep.subr.bf16.mxu0 0
    %3122 = vmatpush1.bf16.msra.mxu0 0
    %3123 = vmatprep.subr.bf16.mxu0 0
    %3124 = vmatpush1.bf16.msra.mxu0 0
    %3125 = vmatprep.subr.bf16.mxu0 0
    %3126 = vmatpush1.bf16.msra.mxu0 0
    %3127 = vmatprep.subr.bf16.mxu0 0
    %3128 = vmatpush1.bf16.msra.mxu0 0
    %3129 = vmatprep.subr.bf16.mxu0 0
    %3130 = vmatpush1.bf16.msra.mxu0 0
    %3131 = vmatprep.subr.bf16.mxu0 0
    %3132 = vmatpush1.bf16.msra.mxu0 0
    %3133 = vmatprep.subr.bf16.mxu0 0
    %3134 = vmatpush1.bf16.msra.mxu0 0
    %3135 = vmatprep.subr.bf16.mxu0 0
    %3136 = vmatpush1.bf16.msra.mxu0 0
    %3137 = vmatprep.subr.bf16.mxu0 0
    %3138 = vmatpush1.bf16.msra.mxu0 0
    %3139 = vmatprep.subr.bf16.mxu0 0
    %3140 = vmatpush1.bf16.msra.mxu0 0
    %3141 = vmatprep.mubr.bf16.mxu0 0
    %3142 = vmatmul.mubr.bf16.gmra.mrb[0].mxu0 %v2171
    %v3143 = vpop.f32.mrb[0].mxu0
    %v3144 = vadd.f32 %v3095, %v3143
    %v3145 = vpop.f32.mrb[0].mxu0
    %v3146 = vpop.f32.mrb[0].mxu0
    %v3147 = vadd.f32 %v3095, %v3146
    %v3148 = vpop.f32.mrb[0].mxu0
    %3149 = vdwg.mxu0
    %s3150 = scalar_lea.vmem %s1, 288
    %v3151 = vld [vmem:[%s3150] sm:$0xf]
    %v3152 = vld [vmem:[%s3150 + $0x4] sm:$0xf]
    %v3153 = vld [vmem:[%s3150 + $0x8] sm:$0xf]
    %v3154 = vld [vmem:[%s3150 + $0xc] sm:$0xf]
    %s3155 = scalar_lea.vmem %s2, 18
    %v3156 = vld [vmem:[%s3155] sm:$0x1]
    %v3158 = vlaneseq
    %v3159 = vshrl.u32 %v3158, 7
    %v3160 = vsub.s32 0, %v3159
    %v3161 = vrot.slane %v3156, %v3160
    %v3167 = vunpack.c.l.b16 %v3151
    %v3168 = vunpack.c.l.b16 %v3152
    %v3169 = vunpack.c.l.b16 %v3153
    %v3170 = vunpack.c.l.b16 %v3154
    %v3171 = vpack.c.b16 %v3168, %v3167
    %v3172 = vpack.c.b16 %v3170, %v3169
    %3175 = vmatprep.subr.bf16.mxu0 0
    %3176 = vmatpush1.bf16.msra.mxu0 %v3171
    %3177 = vmatprep.subr.bf16.mxu0 0
    %3178 = vmatpush1.bf16.msra.mxu0 %v3172
    %3179 = vmatprep.subr.bf16.mxu0 0
    %3180 = vmatpush1.bf16.msra.mxu0 0
    %3181 = vmatprep.subr.bf16.mxu0 0
    %3182 = vmatpush1.bf16.msra.mxu0 0
    %3183 = vmatprep.subr.bf16.mxu0 0
    %3184 = vmatpush1.bf16.msra.mxu0 0
    %3185 = vmatprep.subr.bf16.mxu0 0
    %3186 = vmatpush1.bf16.msra.mxu0 0
    %3187 = vmatprep.subr.bf16.mxu0 0
    %3188 = vmatpush1.bf16.msra.mxu0 0
    %3189 = vmatprep.subr.bf16.mxu0 0
    %3190 = vmatpush1.bf16.msra.mxu0 0
    %3191 = vmatprep.subr.bf16.mxu0 0
    %3192 = vmatpush1.bf16.msra.mxu0 0
    %3193 = vmatprep.subr.bf16.mxu0 0
    %3194 = vmatpush1.bf16.msra.mxu0 0
    %3195 = vmatprep.subr.bf16.mxu0 0
    %3196 = vmatpush1.bf16.msra.mxu0 0
    %3197 = vmatprep.subr.bf16.mxu0 0
    %3198 = vmatpush1.bf16.msra.mxu0 0
    %3199 = vmatprep.subr.bf16.mxu0 0
    %3200 = vmatpush1.bf16.msra.mxu0 0
    %3201 = vmatprep.subr.bf16.mxu0 0
    %3202 = vmatpush1.bf16.msra.mxu0 0
    %3203 = vmatprep.subr.bf16.mxu0 0
    %3204 = vmatpush1.bf16.msra.mxu0 0
    %3205 = vmatprep.subr.bf16.mxu0 0
    %3206 = vmatpush1.bf16.msra.mxu0 0
    %3207 = vmatprep.mubr.bf16.mxu0 0
    %3208 = vmatmul.mubr.bf16.gmra.mrb[0].mxu0 %v2171
    %v3209 = vpop.f32.mrb[0].mxu0
    %v3210 = vadd.f32 %v3161, %v3209
    %v3211 = vpop.f32.mrb[0].mxu0
    %v3212 = vpop.f32.mrb[0].mxu0
    %v3213 = vadd.f32 %v3161, %v3212
    %v3214 = vpop.f32.mrb[0].mxu0
    %3215 = vdwg.mxu0
    %s3216 = scalar_lea.vmem %s1, 352
    %v3217 = vld [vmem:[%s3216] sm:$0xf]
    %v3218 = vld [vmem:[%s3216 + $0x4] sm:$0xf]
    %v3219 = vld [vmem:[%s3216 + $0x8] sm:$0xf]
    %v3220 = vld [vmem:[%s3216 + $0xc] sm:$0xf]
    %s3221 = scalar_lea.vmem %s2, 22
    %v3222 = vld [vmem:[%s3221] sm:$0x1]
    %v3224 = vlaneseq
    %v3225 = vshrl.u32 %v3224, 7
    %v3226 = vsub.s32 0, %v3225
    %v3227 = vrot.slane %v3222, %v3226
    %v3233 = vunpack.c.l.b16 %v3217
    %v3234 = vunpack.c.l.b16 %v3218
    %v3235 = vunpack.c.l.b16 %v3219
    %v3236 = vunpack.c.l.b16 %v3220
    %v3237 = vpack.c.b16 %v3234, %v3233
    %v3238 = vpack.c.b16 %v3236, %v3235
    %3241 = vmatprep.subr.bf16.mxu0 0
    %3242 = vmatpush1.bf16.msra.mxu0 %v3237
    %3243 = vmatprep.subr.bf16.mxu0 0
    %3244 = vmatpush1.bf16.msra.mxu0 %v3238
    %3245 = vmatprep.subr.bf16.mxu0 0
    %3246 = vmatpush1.bf16.msra.mxu0 0
    %3247 = vmatprep.subr.bf16.mxu0 0
    %3248 = vmatpush1.bf16.msra.mxu0 0
    %3249 = vmatprep.subr.bf16.mxu0 0
    %3250 = vmatpush1.bf16.msra.mxu0 0
    %3251 = vmatprep.subr.bf16.mxu0 0
    %3252 = vmatpush1.bf16.msra.mxu0 0
    %3253 = vmatprep.subr.bf16.mxu0 0
    %3254 = vmatpush1.bf16.msra.mxu0 0
    %3255 = vmatprep.subr.bf16.mxu0 0
    %3256 = vmatpush1.bf16.msra.mxu0 0
    %3257 = vmatprep.subr.bf16.mxu0 0
    %3258 = vmatpush1.bf16.msra.mxu0 0
    %3259 = vmatprep.subr.bf16.mxu0 0
    %3260 = vmatpush1.bf16.msra.mxu0 0
    %3261 = vmatprep.subr.bf16.mxu0 0
    %3262 = vmatpush1.bf16.msra.mxu0 0
    %3263 = vmatprep.subr.bf16.mxu0 0
    %3264 = vmatpush1.bf16.msra.mxu0 0
    %3265 = vmatprep.subr.bf16.mxu0 0
    %3266 = vmatpush1.bf16.msra.mxu0 0
    %3267 = vmatprep.subr.bf16.mxu0 0
    %3268 = vmatpush1.bf16.msra.mxu0 0
    %3269 = vmatprep.subr.bf16.mxu0 0
    %3270 = vmatpush1.bf16.msra.mxu0 0
    %3271 = vmatprep.subr.bf16.mxu0 0
    %3272 = vmatpush1.bf16.msra.mxu0 0
    %3273 = vmatprep.mubr.bf16.mxu0 0
    %3274 = vmatmul.mubr.bf16.gmra.mrb[0].mxu0 %v2171
    %v3275 = vpop.f32.mrb[0].mxu0
    %v3276 = vadd.f32 %v3227, %v3275
    %v3277 = vpop.f32.mrb[0].mxu0
    %v3278 = vpop.f32.mrb[0].mxu0
    %v3279 = vadd.f32 %v3227, %v3278
    %v3280 = vpop.f32.mrb[0].mxu0
    %3281 = vdwg.mxu0
    %v3282 = vpack.c.bf16 %v3144, %v3144
    %v3283 = vpack.c.bf16 %v3147, %v3147
    %v3284 = vpack.c.bf16 %v3210, %v3210
    %v3285 = vpack.c.bf16 %v3213, %v3213
    %v3287 = vsel %vm248, %v3282, 0
    %v3290 = vsel %vm248, %v3284, 0
    %3292 = vmatprep.subr.bf16.mxu0 0
    %3293 = vmatpush1.bf16.xpose.msra.mxu0 %v3290
    %3294 = vmatprep.subr.bf16.mxu0 0
    %3295 = vmatpush1.bf16.xpose.msra.mxu0 0
    %3296 = vmatprep.subr.bf16.mxu0 0
    %3297 = vmatpush1.bf16.xpose.msra.mxu0 0
    %3298 = vmatprep.subr.bf16.mxu0 0
    %3299 = vmatpush1.bf16.xpose.msra.mxu0 0
    %3300 = vmatprep.subr.bf16.mxu0 0
    %3301 = vmatpush1.bf16.xpose.msra.mxu0 0
    %3302 = vmatprep.subr.bf16.mxu0 0
    %3303 = vmatpush1.bf16.xpose.msra.mxu0 0
    %3304 = vmatprep.subr.bf16.mxu0 0
    %3305 = vmatpush1.bf16.xpose.msra.mxu0 0
    %3306 = vmatprep.subr.bf16.mxu0 0
    %3307 = vmatpush1.bf16.xpose.msra.mxu0 0
    %3308 = vmatprep.subr.bf16.mxu0 0
    %3309 = vmatpush1.bf16.xpose.msra.mxu0 0
    %3310 = vmatprep.subr.bf16.mxu0 0
    %3311 = vmatpush1.bf16.xpose.msra.mxu0 0
    %3312 = vmatprep.subr.bf16.mxu0 0
    %3313 = vmatpush1.bf16.xpose.msra.mxu0 0
    %3314 = vmatprep.subr.bf16.mxu0 0
    %3315 = vmatpush1.bf16.xpose.msra.mxu0 0
    %3316 = vmatprep.subr.bf16.mxu0 0
    %3317 = vmatpush1.bf16.xpose.msra.mxu0 0
    %3318 = vmatprep.subr.bf16.mxu0 0
    %3319 = vmatpush1.bf16.xpose.msra.mxu0 0
    %3320 = vmatprep.subr.bf16.mxu0 0
    %3321 = vmatpush1.bf16.xpose.msra.mxu0 0
    %3322 = vmatprep.subr.bf16.mxu0 0
    %3323 = vmatpush1.bf16.xpose.msra.mxu0 0
    %3324 = vmatprep.mubr.bf16.mxu0 0
    %3325 = vmatmul.mubr.bf16.gmra.mrb[0].mxu0 %v3287
    %v3326 = vpop.f32.mrb[0].mxu0
    %v3327 = vadd.f32 0.0, %v3326
    %v3328 = vpop.f32.mrb[0].mxu0
    %v3329 = vpop.f32.mrb[0].mxu0
    %v3330 = vpop.f32.mrb[0].mxu0
    %3331 = vdwg.mxu0
    %v3333 = vsel %vm248, %v3283, 0
    %v3336 = vsel %vm248, %v3285, 0
    %3338 = vmatprep.subr.bf16.mxu0 0
    %3339 = vmatpush1.bf16.xpose.msra.mxu0 %v3336
    %3340 = vmatprep.subr.bf16.mxu0 0
    %3341 = vmatpush1.bf16.xpose.msra.mxu0 0
    %3342 = vmatprep.subr.bf16.mxu0 0
    %3343 = vmatpush1.bf16.xpose.msra.mxu0 0
    %3344 = vmatprep.subr.bf16.mxu0 0
    %3345 = vmatpush1.bf16.xpose.msra.mxu0 0
    %3346 = vmatprep.subr.bf16.mxu0 0
    %3347 = vmatpush1.bf16.xpose.msra.mxu0 0
    %3348 = vmatprep.subr.bf16.mxu0 0
    %3349 = vmatpush1.bf16.xpose.msra.mxu0 0
    %3350 = vmatprep.subr.bf16.mxu0 0
    %3351 = vmatpush1.bf16.xpose.msra.mxu0 0
    %3352 = vmatprep.subr.bf16.mxu0 0
    %3353 = vmatpush1.bf16.xpose.msra.mxu0 0
    %3354 = vmatprep.subr.bf16.mxu0 0
    %3355 = vmatpush1.bf16.xpose.msra.mxu0 0
    %3356 = vmatprep.subr.bf16.mxu0 0
    %3357 = vmatpush1.bf16.xpose.msra.mxu0 0
    %3358 = vmatprep.subr.bf16.mxu0 0
    %3359 = vmatpush1.bf16.xpose.msra.mxu0 0
    %3360 = vmatprep.subr.bf16.mxu0 0
    %3361 = vmatpush1.bf16.xpose.msra.mxu0 0
    %3362 = vmatprep.subr.bf16.mxu0 0
    %3363 = vmatpush1.bf16.xpose.msra.mxu0 0
    %3364 = vmatprep.subr.bf16.mxu0 0
    %3365 = vmatpush1.bf16.xpose.msra.mxu0 0
    %3366 = vmatprep.subr.bf16.mxu0 0
    %3367 = vmatpush1.bf16.xpose.msra.mxu0 0
    %3368 = vmatprep.subr.bf16.mxu0 0
    %3369 = vmatpush1.bf16.xpose.msra.mxu0 0
    %3370 = vmatprep.mubr.bf16.mxu0 0
    %3371 = vmatmul.mubr.bf16.gmra.mrb[0].mxu0 %v3333
    %v3372 = vpop.f32.mrb[0].mxu0
    %v3373 = vadd.f32 0.0, %v3372
    %v3374 = vpop.f32.mrb[0].mxu0
    %v3375 = vpop.f32.mrb[0].mxu0
    %v3376 = vpop.f32.mrb[0].mxu0
    %3377 = vdwg.mxu0
    %v3378 = vsel %vm248, %v3327, -inf
    %3379 = vmax.xlane.f32.xlu0 %v3378
    %v3380 = vpop.xlane.xlu0 %3379
    %v3381 = vsel %vm248, %v3373, -inf
    %3382 = vmax.xlane.f32.xlu0 %v3381
    %v3383 = vpop.xlane.xlu0 %3382
    %v3384 = vsub.f32 %v3327, %v3380
    %v3385 = vsub.f32 %v3373, %v3383
    %v3386 = vmul.f32 %v3384, 1.442695
    %v3387 = vpow.pop %v3386
    %v3388 = vmul.f32 %v3385, 1.442695
    %v3389 = vpow.pop %v3388
    %v3390 = vsel %vm248, %v3387, 0.0
    %3391 = vadd.xlane.f32.xlu0 %v3390
    %v3392 = vpop.xlane.xlu0 %3391
    %v3393 = vsel %vm248, %v3389, 0.0
    %3394 = vadd.xlane.f32.xlu0 %v3393
    %v3395 = vpop.xlane.xlu0 %3394
    %v3396 = vrcp.pop %v3392
    %v3397 = vrcp.pop %v3395
    %v3398 = vmul.f32 %v3392, %v3396
    %v3399 = vmul.f32 %v3395, %v3397
    %v3400 = vsub.f32 2.0, %v3398
    %v3401 = vsub.f32 2.0, %v3399
    %v3402 = vmul.f32 %v3396, %v3400
    %v3403 = vmul.f32 %v3397, %v3401
    %v3404 = vmul.f32 %v3387, %v3402
    %v3405 = vmul.f32 %v3389, %v3403
    %v3406 = vpack.c.bf16 %v3404, %v3404
    %v3407 = vpack.c.bf16 %v3405, %v3405
    %v3408 = vpack.c.bf16 %v3276, %v3276
    %v3409 = vpack.c.bf16 %v3279, %v3279
    %v3411 = vsel %vm248, %v3406, 0
    %v3414 = vsel %vm376, %v3408, 0
    %3416 = vmatprep.subr.bf16.mxu0 0
    %3417 = vmatpush1.bf16.msra.mxu0 %v3414
    %3418 = vmatprep.subr.bf16.mxu0 0
    %3419 = vmatpush1.bf16.msra.mxu0 0
    %3420 = vmatprep.subr.bf16.mxu0 0
    %3421 = vmatpush1.bf16.msra.mxu0 0
    %3422 = vmatprep.subr.bf16.mxu0 0
    %3423 = vmatpush1.bf16.msra.mxu0 0
    %3424 = vmatprep.subr.bf16.mxu0 0
    %3425 = vmatpush1.bf16.msra.mxu0 0
    %3426 = vmatprep.subr.bf16.mxu0 0
    %3427 = vmatpush1.bf16.msra.mxu0 0
    %3428 = vmatprep.subr.bf16.mxu0 0
    %3429 = vmatpush1.bf16.msra.mxu0 0
    %3430 = vmatprep.subr.bf16.mxu0 0
    %3431 = vmatpush1.bf16.msra.mxu0 0
    %3432 = vmatprep.subr.bf16.mxu0 0
    %3433 = vmatpush1.bf16.msra.mxu0 0
    %3434 = vmatprep.subr.bf16.mxu0 0
    %3435 = vmatpush1.bf16.msra.mxu0 0
    %3436 = vmatprep.subr.bf16.mxu0 0
    %3437 = vmatpush1.bf16.msra.mxu0 0
    %3438 = vmatprep.subr.bf16.mxu0 0
    %3439 = vmatpush1.bf16.msra.mxu0 0
    %3440 = vmatprep.subr.bf16.mxu0 0
    %3441 = vmatpush1.bf16.msra.mxu0 0
    %3442 = vmatprep.subr.bf16.mxu0 0
    %3443 = vmatpush1.bf16.msra.mxu0 0
    %3444 = vmatprep.subr.bf16.mxu0 0
    %3445 = vmatpush1.bf16.msra.mxu0 0
    %3446 = vmatprep.subr.bf16.mxu0 0
    %3447 = vmatpush1.bf16.msra.mxu0 0
    %3448 = vmatprep.mubr.bf16.mxu0 0
    %3449 = vmatmul.mubr.bf16.gmra.mrb[0].mxu0 %v3411
    %v3450 = vpop.f32.mrb[0].mxu0
    %v3451 = vadd.f32 0.0, %v3450
    %v3452 = vpop.f32.mrb[0].mxu0
    %v3453 = vpop.f32.mrb[0].mxu0
    %v3454 = vpop.f32.mrb[0].mxu0
    %3455 = vdwg.mxu0
    %v3457 = vsel %vm248, %v3407, 0
    %v3460 = vsel %vm376, %v3409, 0
    %3462 = vmatprep.subr.bf16.mxu0 0
    %3463 = vmatpush1.bf16.msra.mxu0 %v3460
    %3464 = vmatprep.subr.bf16.mxu0 0
    %3465 = vmatpush1.bf16.msra.mxu0 0
    %3466 = vmatprep.subr.bf16.mxu0 0
    %3467 = vmatpush1.bf16.msra.mxu0 0
    %3468 = vmatprep.subr.bf16.mxu0 0
    %3469 = vmatpush1.bf16.msra.mxu0 0
    %3470 = vmatprep.subr.bf16.mxu0 0
    %3471 = vmatpush1.bf16.msra.mxu0 0
    %3472 = vmatprep.subr.bf16.mxu0 0
    %3473 = vmatpush1.bf16.msra.mxu0 0
    %3474 = vmatprep.subr.bf16.mxu0 0
    %3475 = vmatpush1.bf16.msra.mxu0 0
    %3476 = vmatprep.subr.bf16.mxu0 0
    %3477 = vmatpush1.bf16.msra.mxu0 0
    %3478 = vmatprep.subr.bf16.mxu0 0
    %3479 = vmatpush1.bf16.msra.mxu0 0
    %3480 = vmatprep.subr.bf16.mxu0 0
    %3481 = vmatpush1.bf16.msra.mxu0 0
    %3482 = vmatprep.subr.bf16.mxu0 0
    %3483 = vmatpush1.bf16.msra.mxu0 0
    %3484 = vmatprep.subr.bf16.mxu0 0
    %3485 = vmatpush1.bf16.msra.mxu0 0
    %3486 = vmatprep.subr.bf16.mxu0 0
    %3487 = vmatpush1.bf16.msra.mxu0 0
    %3488 = vmatprep.subr.bf16.mxu0 0
    %3489 = vmatpush1.bf16.msra.mxu0 0
    %3490 = vmatprep.subr.bf16.mxu0 0
    %3491 = vmatpush1.bf16.msra.mxu0 0
    %3492 = vmatprep.subr.bf16.mxu0 0
    %3493 = vmatpush1.bf16.msra.mxu0 0
    %3494 = vmatprep.mubr.bf16.mxu0 0
    %3495 = vmatmul.mubr.bf16.gmra.mrb[0].mxu0 %v3457
    %v3496 = vpop.f32.mrb[0].mxu0
    %v3497 = vadd.f32 0.0, %v3496
    %v3498 = vpop.f32.mrb[0].mxu0
    %v3499 = vpop.f32.mrb[0].mxu0
    %v3500 = vpop.f32.mrb[0].mxu0
    %3501 = vdwg.mxu0
    %v3502 = vpack.c.bf16 %v3497, %v3451
    %s3503 = scalar_lea.vmem %s3, 24
    %v3504 = vld [vmem:[%s3503] sm:$0xf]
    %v3506 = vsel %vm248, %v3502, 0
    %v3509 = vsel %vm376, %v3504, 0
    %3511 = vmatprep.subr.bf16.mxu0 0
    %3512 = vmatpush1.bf16.msra.mxu0 %v3509
    %3513 = vmatprep.subr.bf16.mxu0 0
    %3514 = vmatpush1.bf16.msra.mxu0 0
    %3515 = vmatprep.subr.bf16.mxu0 0
    %3516 = vmatpush1.bf16.msra.mxu0 0
    %3517 = vmatprep.subr.bf16.mxu0 0
    %3518 = vmatpush1.bf16.msra.mxu0 0
    %3519 = vmatprep.subr.bf16.mxu0 0
    %3520 = vmatpush1.bf16.msra.mxu0 0
    %3521 = vmatprep.subr.bf16.mxu0 0
    %3522 = vmatpush1.bf16.msra.mxu0 0
    %3523 = vmatprep.subr.bf16.mxu0 0
    %3524 = vmatpush1.bf16.msra.mxu0 0
    %3525 = vmatprep.subr.bf16.mxu0 0
    %3526 = vmatpush1.bf16.msra.mxu0 0
    %3527 = vmatprep.subr.bf16.mxu0 0
    %3528 = vmatpush1.bf16.msra.mxu0 0
    %3529 = vmatprep.subr.bf16.mxu0 0
    %3530 = vmatpush1.bf16.msra.mxu0 0
    %3531 = vmatprep.subr.bf16.mxu0 0
    %3532 = vmatpush1.bf16.msra.mxu0 0
    %3533 = vmatprep.subr.bf16.mxu0 0
    %3534 = vmatpush1.bf16.msra.mxu0 0
    %3535 = vmatprep.subr.bf16.mxu0 0
    %3536 = vmatpush1.bf16.msra.mxu0 0
    %3537 = vmatprep.subr.bf16.mxu0 0
    %3538 = vmatpush1.bf16.msra.mxu0 0
    %3539 = vmatprep.subr.bf16.mxu0 0
    %3540 = vmatpush1.bf16.msra.mxu0 0
    %3541 = vmatprep.subr.bf16.mxu0 0
    %3542 = vmatpush1.bf16.msra.mxu0 0
    %3543 = vmatprep.mubr.bf16.mxu0 0
    %3544 = vmatmul.mubr.bf16.gmra.mrb[0].mxu0 %v3506
    %v3545 = vpop.f32.mrb[0].mxu0
    %v3546 = vadd.f32 0.0, %v3545
    %v3547 = vpop.f32.mrb[0].mxu0
    %v3548 = vpop.f32.mrb[0].mxu0
    %v3549 = vadd.f32 0.0, %v3548
    %v3550 = vpop.f32.mrb[0].mxu0
    %3551 = vdwg.mxu0
    %v3552 = vadd.f32 %v3078, %v3546
    %v3553 = vadd.f32 %v3081, %v3549
    %s3554 = scalar_lea.vmem %s1, 240
    %v3555 = vld [vmem:[%s3554] sm:$0xf]
    %v3556 = vld [vmem:[%s3554 + $0x4] sm:$0xf]
    %v3557 = vld [vmem:[%s3554 + $0x8] sm:$0xf]
    %v3558 = vld [vmem:[%s3554 + $0xc] sm:$0xf]
    %s3559 = scalar_lea.vmem %s2, 15
    %v3560 = vld [vmem:[%s3559] sm:$0x1]
    %v3562 = vlaneseq
    %v3563 = vshrl.u32 %v3562, 7
    %v3564 = vsub.s32 0, %v3563
    %v3565 = vrot.slane %v3560, %v3564
    %v3571 = vunpack.c.l.b16 %v3555
    %v3572 = vunpack.c.l.b16 %v3556
    %v3573 = vunpack.c.l.b16 %v3557
    %v3574 = vunpack.c.l.b16 %v3558
    %v3575 = vpack.c.b16 %v3572, %v3571
    %v3576 = vpack.c.b16 %v3574, %v3573
    %3579 = vmatprep.subr.bf16.mxu0 0
    %3580 = vmatpush1.bf16.msra.mxu0 %v3575
    %3581 = vmatprep.subr.bf16.mxu0 0
    %3582 = vmatpush1.bf16.msra.mxu0 %v3576
    %3583 = vmatprep.subr.bf16.mxu0 0
    %3584 = vmatpush1.bf16.msra.mxu0 0
    %3585 = vmatprep.subr.bf16.mxu0 0
    %3586 = vmatpush1.bf16.msra.mxu0 0
    %3587 = vmatprep.subr.bf16.mxu0 0
    %3588 = vmatpush1.bf16.msra.mxu0 0
    %3589 = vmatprep.subr.bf16.mxu0 0
    %3590 = vmatpush1.bf16.msra.mxu0 0
    %3591 = vmatprep.subr.bf16.mxu0 0
    %3592 = vmatpush1.bf16.msra.mxu0 0
    %3593 = vmatprep.subr.bf16.mxu0 0
    %3594 = vmatpush1.bf16.msra.mxu0 0
    %3595 = vmatprep.subr.bf16.mxu0 0
    %3596 = vmatpush1.bf16.msra.mxu0 0
    %3597 = vmatprep.subr.bf16.mxu0 0
    %3598 = vmatpush1.bf16.msra.mxu0 0
    %3599 = vmatprep.subr.bf16.mxu0 0
    %3600 = vmatpush1.bf16.msra.mxu0 0
    %3601 = vmatprep.subr.bf16.mxu0 0
    %3602 = vmatpush1.bf16.msra.mxu0 0
    %3603 = vmatprep.subr.bf16.mxu0 0
    %3604 = vmatpush1.bf16.msra.mxu0 0
    %3605 = vmatprep.subr.bf16.mxu0 0
    %3606 = vmatpush1.bf16.msra.mxu0 0
    %3607 = vmatprep.subr.bf16.mxu0 0
    %3608 = vmatpush1.bf16.msra.mxu0 0
    %3609 = vmatprep.subr.bf16.mxu0 0
    %3610 = vmatpush1.bf16.msra.mxu0 0
    %3611 = vmatprep.mubr.bf16.mxu0 0
    %3612 = vmatmul.mubr.bf16.gmra.mrb[0].mxu0 %v2171
    %v3613 = vpop.f32.mrb[0].mxu0
    %v3614 = vadd.f32 %v3565, %v3613
    %v3615 = vpop.f32.mrb[0].mxu0
    %v3616 = vpop.f32.mrb[0].mxu0
    %v3617 = vadd.f32 %v3565, %v3616
    %v3618 = vpop.f32.mrb[0].mxu0
    %3619 = vdwg.mxu0
    %s3620 = scalar_lea.vmem %s1, 304
    %v3621 = vld [vmem:[%s3620] sm:$0xf]
    %v3622 = vld [vmem:[%s3620 + $0x4] sm:$0xf]
    %v3623 = vld [vmem:[%s3620 + $0x8] sm:$0xf]
    %v3624 = vld [vmem:[%s3620 + $0xc] sm:$0xf]
    %s3625 = scalar_lea.vmem %s2, 19
    %v3626 = vld [vmem:[%s3625] sm:$0x1]
    %v3628 = vlaneseq
    %v3629 = vshrl.u32 %v3628, 7
    %v3630 = vsub.s32 0, %v3629
    %v3631 = vrot.slane %v3626, %v3630
    %v3637 = vunpack.c.l.b16 %v3621
    %v3638 = vunpack.c.l.b16 %v3622
    %v3639 = vunpack.c.l.b16 %v3623
    %v3640 = vunpack.c.l.b16 %v3624
    %v3641 = vpack.c.b16 %v3638, %v3637
    %v3642 = vpack.c.b16 %v3640, %v3639
    %3645 = vmatprep.subr.bf16.mxu0 0
    %3646 = vmatpush1.bf16.msra.mxu0 %v3641
    %3647 = vmatprep.subr.bf16.mxu0 0
    %3648 = vmatpush1.bf16.msra.mxu0 %v3642
    %3649 = vmatprep.subr.bf16.mxu0 0
    %3650 = vmatpush1.bf16.msra.mxu0 0
    %3651 = vmatprep.subr.bf16.mxu0 0
    %3652 = vmatpush1.bf16.msra.mxu0 0
    %3653 = vmatprep.subr.bf16.mxu0 0
    %3654 = vmatpush1.bf16.msra.mxu0 0
    %3655 = vmatprep.subr.bf16.mxu0 0
    %3656 = vmatpush1.bf16.msra.mxu0 0
    %3657 = vmatprep.subr.bf16.mxu0 0
    %3658 = vmatpush1.bf16.msra.mxu0 0
    %3659 = vmatprep.subr.bf16.mxu0 0
    %3660 = vmatpush1.bf16.msra.mxu0 0
    %3661 = vmatprep.subr.bf16.mxu0 0
    %3662 = vmatpush1.bf16.msra.mxu0 0
    %3663 = vmatprep.subr.bf16.mxu0 0
    %3664 = vmatpush1.bf16.msra.mxu0 0
    %3665 = vmatprep.subr.bf16.mxu0 0
    %3666 = vmatpush1.bf16.msra.mxu0 0
    %3667 = vmatprep.subr.bf16.mxu0 0
    %3668 = vmatpush1.bf16.msra.mxu0 0
    %3669 = vmatprep.subr.bf16.mxu0 0
    %3670 = vmatpush1.bf16.msra.mxu0 0
    %3671 = vmatprep.subr.bf16.mxu0 0
    %3672 = vmatpush1.bf16.msra.mxu0 0
    %3673 = vmatprep.subr.bf16.mxu0 0
    %3674 = vmatpush1.bf16.msra.mxu0 0
    %3675 = vmatprep.subr.bf16.mxu0 0
    %3676 = vmatpush1.bf16.msra.mxu0 0
    %3677 = vmatprep.mubr.bf16.mxu0 0
    %3678 = vmatmul.mubr.bf16.gmra.mrb[0].mxu0 %v2171
    %v3679 = vpop.f32.mrb[0].mxu0
    %v3680 = vadd.f32 %v3631, %v3679
    %v3681 = vpop.f32.mrb[0].mxu0
    %v3682 = vpop.f32.mrb[0].mxu0
    %v3683 = vadd.f32 %v3631, %v3682
    %v3684 = vpop.f32.mrb[0].mxu0
    %3685 = vdwg.mxu0
    %s3686 = scalar_lea.vmem %s1, 368
    %v3687 = vld [vmem:[%s3686] sm:$0xf]
    %v3688 = vld [vmem:[%s3686 + $0x4] sm:$0xf]
    %v3689 = vld [vmem:[%s3686 + $0x8] sm:$0xf]
    %v3690 = vld [vmem:[%s3686 + $0xc] sm:$0xf]
    %s3691 = scalar_lea.vmem %s2, 23
    %v3692 = vld [vmem:[%s3691] sm:$0x1]
    %v3694 = vlaneseq
    %v3695 = vshrl.u32 %v3694, 7
    %v3696 = vsub.s32 0, %v3695
    %v3697 = vrot.slane %v3692, %v3696
    %v3703 = vunpack.c.l.b16 %v3687
    %v3704 = vunpack.c.l.b16 %v3688
    %v3705 = vunpack.c.l.b16 %v3689
    %v3706 = vunpack.c.l.b16 %v3690
    %v3707 = vpack.c.b16 %v3704, %v3703
    %v3708 = vpack.c.b16 %v3706, %v3705
    %3711 = vmatprep.subr.bf16.mxu0 0
    %3712 = vmatpush1.bf16.msra.mxu0 %v3707
    %3713 = vmatprep.subr.bf16.mxu0 0
    %3714 = vmatpush1.bf16.msra.mxu0 %v3708
    %3715 = vmatprep.subr.bf16.mxu0 0
    %3716 = vmatpush1.bf16.msra.mxu0 0
    %3717 = vmatprep.subr.bf16.mxu0 0
    %3718 = vmatpush1.bf16.msra.mxu0 0
    %3719 = vmatprep.subr.bf16.mxu0 0
    %3720 = vmatpush1.bf16.msra.mxu0 0
    %3721 = vmatprep.subr.bf16.mxu0 0
    %3722 = vmatpush1.bf16.msra.mxu0 0
    %3723 = vmatprep.subr.bf16.mxu0 0
    %3724 = vmatpush1.bf16.msra.mxu0 0
    %3725 = vmatprep.subr.bf16.mxu0 0
    %3726 = vmatpush1.bf16.msra.mxu0 0
    %3727 = vmatprep.subr.bf16.mxu0 0
    %3728 = vmatpush1.bf16.msra.mxu0 0
    %3729 = vmatprep.subr.bf16.mxu0 0
    %3730 = vmatpush1.bf16.msra.mxu0 0
    %3731 = vmatprep.subr.bf16.mxu0 0
    %3732 = vmatpush1.bf16.msra.mxu0 0
    %3733 = vmatprep.subr.bf16.mxu0 0
    %3734 = vmatpush1.bf16.msra.mxu0 0
    %3735 = vmatprep.subr.bf16.mxu0 0
    %3736 = vmatpush1.bf16.msra.mxu0 0
    %3737 = vmatprep.subr.bf16.mxu0 0
    %3738 = vmatpush1.bf16.msra.mxu0 0
    %3739 = vmatprep.subr.bf16.mxu0 0
    %3740 = vmatpush1.bf16.msra.mxu0 0
    %3741 = vmatprep.subr.bf16.mxu0 0
    %3742 = vmatpush1.bf16.msra.mxu0 0
    %3743 = vmatprep.mubr.bf16.mxu0 0
    %3744 = vmatmul.mubr.bf16.gmra.mrb[0].mxu0 %v2171
    %v3745 = vpop.f32.mrb[0].mxu0
    %v3746 = vadd.f32 %v3697, %v3745
    %v3747 = vpop.f32.mrb[0].mxu0
    %v3748 = vpop.f32.mrb[0].mxu0
    %v3749 = vadd.f32 %v3697, %v3748
    %v3750 = vpop.f32.mrb[0].mxu0
    %3751 = vdwg.mxu0
    %v3752 = vpack.c.bf16 %v3614, %v3614
    %v3753 = vpack.c.bf16 %v3617, %v3617
    %v3754 = vpack.c.bf16 %v3680, %v3680
    %v3755 = vpack.c.bf16 %v3683, %v3683
    %v3757 = vsel %vm248, %v3752, 0
    %v3760 = vsel %vm248, %v3754, 0
    %3762 = vmatprep.subr.bf16.mxu0 0
    %3763 = vmatpush1.bf16.xpose.msra.mxu0 %v3760
    %3764 = vmatprep.subr.bf16.mxu0 0
    %3765 = vmatpush1.bf16.xpose.msra.mxu0 0
    %3766 = vmatprep.subr.bf16.mxu0 0
    %3767 = vmatpush1.bf16.xpose.msra.mxu0 0
    %3768 = vmatprep.subr.bf16.mxu0 0
    %3769 = vmatpush1.bf16.xpose.msra.mxu0 0
    %3770 = vmatprep.subr.bf16.mxu0 0
    %3771 = vmatpush1.bf16.xpose.msra.mxu0 0
    %3772 = vmatprep.subr.bf16.mxu0 0
    %3773 = vmatpush1.bf16.xpose.msra.mxu0 0
    %3774 = vmatprep.subr.bf16.mxu0 0
    %3775 = vmatpush1.bf16.xpose.msra.mxu0 0
    %3776 = vmatprep.subr.bf16.mxu0 0
    %3777 = vmatpush1.bf16.xpose.msra.mxu0 0
    %3778 = vmatprep.subr.bf16.mxu0 0
    %3779 = vmatpush1.bf16.xpose.msra.mxu0 0
    %3780 = vmatprep.subr.bf16.mxu0 0
    %3781 = vmatpush1.bf16.xpose.msra.mxu0 0
    %3782 = vmatprep.subr.bf16.mxu0 0
    %3783 = vmatpush1.bf16.xpose.msra.mxu0 0
    %3784 = vmatprep.subr.bf16.mxu0 0
    %3785 = vmatpush1.bf16.xpose.msra.mxu0 0
    %3786 = vmatprep.subr.bf16.mxu0 0
    %3787 = vmatpush1.bf16.xpose.msra.mxu0 0
    %3788 = vmatprep.subr.bf16.mxu0 0
    %3789 = vmatpush1.bf16.xpose.msra.mxu0 0
    %3790 = vmatprep.subr.bf16.mxu0 0
    %3791 = vmatpush1.bf16.xpose.msra.mxu0 0
    %3792 = vmatprep.subr.bf16.mxu0 0
    %3793 = vmatpush1.bf16.xpose.msra.mxu0 0
    %3794 = vmatprep.mubr.bf16.mxu0 0
    %3795 = vmatmul.mubr.bf16.gmra.mrb[0].mxu0 %v3757
    %v3796 = vpop.f32.mrb[0].mxu0
    %v3797 = vadd.f32 0.0, %v3796
    %v3798 = vpop.f32.mrb[0].mxu0
    %v3799 = vpop.f32.mrb[0].mxu0
    %v3800 = vpop.f32.mrb[0].mxu0
    %3801 = vdwg.mxu0
    %v3803 = vsel %vm248, %v3753, 0
    %v3806 = vsel %vm248, %v3755, 0
    %3808 = vmatprep.subr.bf16.mxu0 0
    %3809 = vmatpush1.bf16.xpose.msra.mxu0 %v3806
    %3810 = vmatprep.subr.bf16.mxu0 0
    %3811 = vmatpush1.bf16.xpose.msra.mxu0 0
    %3812 = vmatprep.subr.bf16.mxu0 0
    %3813 = vmatpush1.bf16.xpose.msra.mxu0 0
    %3814 = vmatprep.subr.bf16.mxu0 0
    %3815 = vmatpush1.bf16.xpose.msra.mxu0 0
    %3816 = vmatprep.subr.bf16.mxu0 0
    %3817 = vmatpush1.bf16.xpose.msra.mxu0 0
    %3818 = vmatprep.subr.bf16.mxu0 0
    %3819 = vmatpush1.bf16.xpose.msra.mxu0 0
    %3820 = vmatprep.subr.bf16.mxu0 0
    %3821 = vmatpush1.bf16.xpose.msra.mxu0 0
    %3822 = vmatprep.subr.bf16.mxu0 0
    %3823 = vmatpush1.bf16.xpose.msra.mxu0 0
    %3824 = vmatprep.subr.bf16.mxu0 0
    %3825 = vmatpush1.bf16.xpose.msra.mxu0 0
    %3826 = vmatprep.subr.bf16.mxu0 0
    %3827 = vmatpush1.bf16.xpose.msra.mxu0 0
    %3828 = vmatprep.subr.bf16.mxu0 0
    %3829 = vmatpush1.bf16.xpose.msra.mxu0 0
    %3830 = vmatprep.subr.bf16.mxu0 0
    %3831 = vmatpush1.bf16.xpose.msra.mxu0 0
    %3832 = vmatprep.subr.bf16.mxu0 0
    %3833 = vmatpush1.bf16.xpose.msra.mxu0 0
    %3834 = vmatprep.subr.bf16.mxu0 0
    %3835 = vmatpush1.bf16.xpose.msra.mxu0 0
    %3836 = vmatprep.subr.bf16.mxu0 0
    %3837 = vmatpush1.bf16.xpose.msra.mxu0 0
    %3838 = vmatprep.subr.bf16.mxu0 0
    %3839 = vmatpush1.bf16.xpose.msra.mxu0 0
    %3840 = vmatprep.mubr.bf16.mxu0 0
    %3841 = vmatmul.mubr.bf16.gmra.mrb[0].mxu0 %v3803
    %v3842 = vpop.f32.mrb[0].mxu0
    %v3843 = vadd.f32 0.0, %v3842
    %v3844 = vpop.f32.mrb[0].mxu0
    %v3845 = vpop.f32.mrb[0].mxu0
    %v3846 = vpop.f32.mrb[0].mxu0
    %3847 = vdwg.mxu0
    %v3848 = vsel %vm248, %v3797, -inf
    %3849 = vmax.xlane.f32.xlu0 %v3848
    %v3850 = vpop.xlane.xlu0 %3849
    %v3851 = vsel %vm248, %v3843, -inf
    %3852 = vmax.xlane.f32.xlu0 %v3851
    %v3853 = vpop.xlane.xlu0 %3852
    %v3854 = vsub.f32 %v3797, %v3850
    %v3855 = vsub.f32 %v3843, %v3853
    %v3856 = vmul.f32 %v3854, 1.442695
    %v3857 = vpow.pop %v3856
    %v3858 = vmul.f32 %v3855, 1.442695
    %v3859 = vpow.pop %v3858
    %v3860 = vsel %vm248, %v3857, 0.0
    %3861 = vadd.xlane.f32.xlu0 %v3860
    %v3862 = vpop.xlane.xlu0 %3861
    %v3863 = vsel %vm248, %v3859, 0.0
    %3864 = vadd.xlane.f32.xlu0 %v3863
    %v3865 = vpop.xlane.xlu0 %3864
    %v3866 = vrcp.pop %v3862
    %v3867 = vrcp.pop %v3865
    %v3868 = vmul.f32 %v3862, %v3866
    %v3869 = vmul.f32 %v3865, %v3867
    %v3870 = vsub.f32 2.0, %v3868
    %v3871 = vsub.f32 2.0, %v3869
    %v3872 = vmul.f32 %v3866, %v3870
    %v3873 = vmul.f32 %v3867, %v3871
    %v3874 = vmul.f32 %v3857, %v3872
    %v3875 = vmul.f32 %v3859, %v3873
    %v3876 = vpack.c.bf16 %v3874, %v3874
    %v3877 = vpack.c.bf16 %v3875, %v3875
    %v3878 = vpack.c.bf16 %v3746, %v3746
    %v3879 = vpack.c.bf16 %v3749, %v3749
    %v3881 = vsel %vm248, %v3876, 0
    %v3884 = vsel %vm376, %v3878, 0
    %3886 = vmatprep.subr.bf16.mxu0 0
    %3887 = vmatpush1.bf16.msra.mxu0 %v3884
    %3888 = vmatprep.subr.bf16.mxu0 0
    %3889 = vmatpush1.bf16.msra.mxu0 0
    %3890 = vmatprep.subr.bf16.mxu0 0
    %3891 = vmatpush1.bf16.msra.mxu0 0
    %3892 = vmatprep.subr.bf16.mxu0 0
    %3893 = vmatpush1.bf16.msra.mxu0 0
    %3894 = vmatprep.subr.bf16.mxu0 0
    %3895 = vmatpush1.bf16.msra.mxu0 0
    %3896 = vmatprep.subr.bf16.mxu0 0
    %3897 = vmatpush1.bf16.msra.mxu0 0
    %3898 = vmatprep.subr.bf16.mxu0 0
    %3899 = vmatpush1.bf16.msra.mxu0 0
    %3900 = vmatprep.subr.bf16.mxu0 0
    %3901 = vmatpush1.bf16.msra.mxu0 0
    %3902 = vmatprep.subr.bf16.mxu0 0
    %3903 = vmatpush1.bf16.msra.mxu0 0
    %3904 = vmatprep.subr.bf16.mxu0 0
    %3905 = vmatpush1.bf16.msra.mxu0 0
    %3906 = vmatprep.subr.bf16.mxu0 0
    %3907 = vmatpush1.bf16.msra.mxu0 0
    %3908 = vmatprep.subr.bf16.mxu0 0
    %3909 = vmatpush1.bf16.msra.mxu0 0
    %3910 = vmatprep.subr.bf16.mxu0 0
    %3911 = vmatpush1.bf16.msra.mxu0 0
    %3912 = vmatprep.subr.bf16.mxu0 0
    %3913 = vmatpush1.bf16.msra.mxu0 0
    %3914 = vmatprep.subr.bf16.mxu0 0
    %3915 = vmatpush1.bf16.msra.mxu0 0
    %3916 = vmatprep.subr.bf16.mxu0 0
    %3917 = vmatpush1.bf16.msra.mxu0 0
    %3918 = vmatprep.mubr.bf16.mxu0 0
    %3919 = vmatmul.mubr.bf16.gmra.mrb[0].mxu0 %v3881
    %v3920 = vpop.f32.mrb[0].mxu0
    %v3921 = vadd.f32 0.0, %v3920
    %v3922 = vpop.f32.mrb[0].mxu0
    %v3923 = vpop.f32.mrb[0].mxu0
    %v3924 = vpop.f32.mrb[0].mxu0
    %3925 = vdwg.mxu0
    %v3927 = vsel %vm248, %v3877, 0
    %v3930 = vsel %vm376, %v3879, 0
    %3932 = vmatprep.subr.bf16.mxu0 0
    %3933 = vmatpush1.bf16.msra.mxu0 %v3930
    %3934 = vmatprep.subr.bf16.mxu0 0
    %3935 = vmatpush1.bf16.msra.mxu0 0
    %3936 = vmatprep.subr.bf16.mxu0 0
    %3937 = vmatpush1.bf16.msra.mxu0 0
    %3938 = vmatprep.subr.bf16.mxu0 0
    %3939 = vmatpush1.bf16.msra.mxu0 0
    %3940 = vmatprep.subr.bf16.mxu0 0
    %3941 = vmatpush1.bf16.msra.mxu0 0
    %3942 = vmatprep.subr.bf16.mxu0 0
    %3943 = vmatpush1.bf16.msra.mxu0 0
    %3944 = vmatprep.subr.bf16.mxu0 0
    %3945 = vmatpush1.bf16.msra.mxu0 0
    %3946 = vmatprep.subr.bf16.mxu0 0
    %3947 = vmatpush1.bf16.msra.mxu0 0
    %3948 = vmatprep.subr.bf16.mxu0 0
    %3949 = vmatpush1.bf16.msra.mxu0 0
    %3950 = vmatprep.subr.bf16.mxu0 0
    %3951 = vmatpush1.bf16.msra.mxu0 0
    %3952 = vmatprep.subr.bf16.mxu0 0
    %3953 = vmatpush1.bf16.msra.mxu0 0
    %3954 = vmatprep.subr.bf16.mxu0 0
    %3955 = vmatpush1.bf16.msra.mxu0 0
    %3956 = vmatprep.subr.bf16.mxu0 0
    %3957 = vmatpush1.bf16.msra.mxu0 0
    %3958 = vmatprep.subr.bf16.mxu0 0
    %3959 = vmatpush1.bf16.msra.mxu0 0
    %3960 = vmatprep.subr.bf16.mxu0 0
    %3961 = vmatpush1.bf16.msra.mxu0 0
    %3962 = vmatprep.subr.bf16.mxu0 0
    %3963 = vmatpush1.bf16.msra.mxu0 0
    %3964 = vmatprep.mubr.bf16.mxu0 0
    %3965 = vmatmul.mubr.bf16.gmra.mrb[0].mxu0 %v3927
    %v3966 = vpop.f32.mrb[0].mxu0
    %v3967 = vadd.f32 0.0, %v3966
    %v3968 = vpop.f32.mrb[0].mxu0
    %v3969 = vpop.f32.mrb[0].mxu0
    %v3970 = vpop.f32.mrb[0].mxu0
    %3971 = vdwg.mxu0
    %v3972 = vpack.c.bf16 %v3967, %v3921
    %s3973 = scalar_lea.vmem %s3, 28
    %v3974 = vld [vmem:[%s3973] sm:$0xf]
    %v3976 = vsel %vm248, %v3972, 0
    %v3979 = vsel %vm376, %v3974, 0
    %3981 = vmatprep.subr.bf16.mxu0 0
    %3982 = vmatpush1.bf16.msra.mxu0 %v3979
    %3983 = vmatprep.subr.bf16.mxu0 0
    %3984 = vmatpush1.bf16.msra.mxu0 0
    %3985 = vmatprep.subr.bf16.mxu0 0
    %3986 = vmatpush1.bf16.msra.mxu0 0
    %3987 = vmatprep.subr.bf16.mxu0 0
    %3988 = vmatpush1.bf16.msra.mxu0 0
    %3989 = vmatprep.subr.bf16.mxu0 0
    %3990 = vmatpush1.bf16.msra.mxu0 0
    %3991 = vmatprep.subr.bf16.mxu0 0
    %3992 = vmatpush1.bf16.msra.mxu0 0
    %3993 = vmatprep.subr.bf16.mxu0 0
    %3994 = vmatpush1.bf16.msra.mxu0 0
    %3995 = vmatprep.subr.bf16.mxu0 0
    %3996 = vmatpush1.bf16.msra.mxu0 0
    %3997 = vmatprep.subr.bf16.mxu0 0
    %3998 = vmatpush1.bf16.msra.mxu0 0
    %3999 = vmatprep.subr.bf16.mxu0 0
    %4000 = vmatpush1.bf16.msra.mxu0 0
    %4001 = vmatprep.subr.bf16.mxu0 0
    %4002 = vmatpush1.bf16.msra.mxu0 0
    %4003 = vmatprep.subr.bf16.mxu0 0
    %4004 = vmatpush1.bf16.msra.mxu0 0
    %4005 = vmatprep.subr.bf16.mxu0 0
    %4006 = vmatpush1.bf16.msra.mxu0 0
    %4007 = vmatprep.subr.bf16.mxu0 0
    %4008 = vmatpush1.bf16.msra.mxu0 0
    %4009 = vmatprep.subr.bf16.mxu0 0
    %4010 = vmatpush1.bf16.msra.mxu0 0
    %4011 = vmatprep.subr.bf16.mxu0 0
    %4012 = vmatpush1.bf16.msra.mxu0 0
    %4013 = vmatprep.mubr.bf16.mxu0 0
    %4014 = vmatmul.mubr.bf16.gmra.mrb[0].mxu0 %v3976
    %v4015 = vpop.f32.mrb[0].mxu0
    %v4016 = vadd.f32 0.0, %v4015
    %v4017 = vpop.f32.mrb[0].mxu0
    %v4018 = vpop.f32.mrb[0].mxu0
    %v4019 = vadd.f32 0.0, %v4018
    %v4020 = vpop.f32.mrb[0].mxu0
    %4021 = vdwg.mxu0
    %v4022 = vadd.f32 %v3552, %v4016
    %v4023 = vadd.f32 %v3553, %v4019
    %v4024 = vlaneseq
    %v4025 = vshrl.u32 %v4024, 7
    %v4026 = vsub.s32 0, %v4025
    %v4027 = vrot.slane %v2143, %v4026
    %v4028 = vadd.f32 %v4022, %v4027
    %v4029 = vadd.f32 %v4023, %v4027
    %v4030 = vadd.f32 %v2140, %v4028
    %v4031 = vadd.f32 %v2141, %v4029
    %v4032 = vsel %vm67, %v4030, 0.0
    %4033 = vadd.xlane.f32.xlu0 %v4032
    %v4034 = vpop.xlane.xlu0 %4033
    %v4035 = vsel %vm67, %v4031, 0.0
    %4036 = vadd.xlane.f32.xlu0 %v4035
    %v4037 = vpop.xlane.xlu0 %4036
    %v4038 = vmul.f32 %v4034, %v1937
    %v4039 = vmul.f32 %v4037, %v1937
    %v4040 = vsub.f32 %v4030, %v4038
    %v4041 = vsub.f32 %v4031, %v4039
    %v4042 = vmul.f32 %v4040, %v4040
    %v4043 = vmul.f32 %v4041, %v4041
    %v4044 = vsel %vm67, %v4042, 0.0
    %4045 = vadd.xlane.f32.xlu0 %v4044
    %v4046 = vpop.xlane.xlu0 %4045
    %v4047 = vsel %vm67, %v4043, 0.0
    %4048 = vadd.xlane.f32.xlu0 %v4047
    %v4049 = vpop.xlane.xlu0 %4048
    %v4050 = vmul.f32 %v4046, %v1937
    %v4051 = vmul.f32 %v4049, %v1937
    %v4052 = vadd.f32 %v4050, 1e-05
    %v4053 = vadd.f32 %v4051, 1e-05
    %v4054 = vrsqrt.pop %v4052
    %v4055 = vrsqrt.pop %v4053
    %v4056 = vmul.f32 %v4040, %v4054
    %v4057 = vmul.f32 %v4041, %v4055
    %v4058 = vlaneseq
    %v4059 = vshrl.u32 %v4058, 7
    %v4060 = vsub.s32 1, %v4059
    %v4061 = vrot.slane %v2143, %v4060
    %v4062 = vmul.f32 %v4056, %v4061
    %v4063 = vmul.f32 %v4057, %v4061
    %v4064 = vlaneseq
    %v4065 = vshrl.u32 %v4064, 7
    %v4066 = vsub.s32 2, %v4065
    %v4067 = vrot.slane %v2143, %v4066
    %v4068 = vadd.f32 %v4062, %v4067
    %v4069 = vadd.f32 %v4063, %v4067
    %v4070 = vpack.c.bf16 %v4069, %v4068
    %s4071 = scalar_lea.vmem %s4, 16
    %v4072 = vld [vmem:[%s4071] sm:$0xf]
    %v4073 = vld [vmem:[%s4071 + $0x4] sm:$0xf]
    %v4074 = vld [vmem:[%s4071 + $0x8] sm:$0xf]
    %v4075 = vld [vmem:[%s4071 + $0xc] sm:$0xf]
    %v4076 = vlaneseq
    %v4077 = vshrl.u32 %v4076, 7
    %v4078 = vsub.s32 3, %v4077
    %v4079 = vrot.slane %v2143, %v4078
    %v4084 = vunpack.c.l.b16 %v4072
    %v4085 = vunpack.c.l.b16 %v4073
    %v4086 = vunpack.c.l.b16 %v4074
    %v4087 = vunpack.c.l.b16 %v4075
    %v4088 = vpack.c.b16 %v4085, %v4084
    %v4089 = vpack.c.b16 %v4087, %v4086
    %v4093 = vsel %vm67, %v4070, 0
    %4095 = vmatprep.subr.bf16.mxu0 0
    %4096 = vmatpush1.bf16.msra.mxu0 %v4088
    %4097 = vmatprep.subr.bf16.mxu0 0
    %4098 = vmatpush1.bf16.msra.mxu0 %v4089
    %4099 = vmatprep.subr.bf16.mxu0 0
    %4100 = vmatpush1.bf16.msra.mxu0 0
    %4101 = vmatprep.subr.bf16.mxu0 0
    %4102 = vmatpush1.bf16.msra.mxu0 0
    %4103 = vmatprep.subr.bf16.mxu0 0
    %4104 = vmatpush1.bf16.msra.mxu0 0
    %4105 = vmatprep.subr.bf16.mxu0 0
    %4106 = vmatpush1.bf16.msra.mxu0 0
    %4107 = vmatprep.subr.bf16.mxu0 0
    %4108 = vmatpush1.bf16.msra.mxu0 0
    %4109 = vmatprep.subr.bf16.mxu0 0
    %4110 = vmatpush1.bf16.msra.mxu0 0
    %4111 = vmatprep.subr.bf16.mxu0 0
    %4112 = vmatpush1.bf16.msra.mxu0 0
    %4113 = vmatprep.subr.bf16.mxu0 0
    %4114 = vmatpush1.bf16.msra.mxu0 0
    %4115 = vmatprep.subr.bf16.mxu0 0
    %4116 = vmatpush1.bf16.msra.mxu0 0
    %4117 = vmatprep.subr.bf16.mxu0 0
    %4118 = vmatpush1.bf16.msra.mxu0 0
    %4119 = vmatprep.subr.bf16.mxu0 0
    %4120 = vmatpush1.bf16.msra.mxu0 0
    %4121 = vmatprep.subr.bf16.mxu0 0
    %4122 = vmatpush1.bf16.msra.mxu0 0
    %4123 = vmatprep.subr.bf16.mxu0 0
    %4124 = vmatpush1.bf16.msra.mxu0 0
    %4125 = vmatprep.subr.bf16.mxu0 0
    %4126 = vmatpush1.bf16.msra.mxu0 0
    %4127 = vmatprep.mubr.bf16.mxu0 0
    %4128 = vmatmul.mubr.bf16.gmra.mrb[0].mxu0 %v4093
    %v4129 = vpop.f32.mrb[0].mxu0
    %v4130 = vadd.f32 %v4079, %v4129
    %v4131 = vpop.f32.mrb[0].mxu0
    %v4132 = vpop.f32.mrb[0].mxu0
    %v4133 = vadd.f32 %v4079, %v4132
    %v4134 = vpop.f32.mrb[0].mxu0
    %4135 = vdwg.mxu0
    %v4136 = vmax.f32 %v4130, 0.0
    %v4137 = vmax.f32 %v4133, 0.0
    %v4138 = vpack.c.bf16 %v4137, %v4136
    %s4139 = scalar_lea.vmem %s5, 16
    %v4140 = vld [vmem:[%s4139] sm:$0xf]
    %v4141 = vld [vmem:[%s4139 + $0x4] sm:$0xf]
    %v4142 = vld [vmem:[%s4139 + $0x8] sm:$0xf]
    %v4143 = vld [vmem:[%s4139 + $0xc] sm:$0xf]
    %v4144 = vlaneseq
    %v4145 = vshrl.u32 %v4144, 7
    %v4146 = vsub.s32 4, %v4145
    %v4147 = vrot.slane %v2143, %v4146
    %v4152 = vunpack.c.l.b16 %v4140
    %v4153 = vunpack.c.l.b16 %v4141
    %v4154 = vunpack.c.l.b16 %v4142
    %v4155 = vunpack.c.l.b16 %v4143
    %v4156 = vpack.c.b16 %v4153, %v4152
    %v4157 = vpack.c.b16 %v4155, %v4154
    %v4161 = vsel %vm67, %v4138, 0
    %4163 = vmatprep.subr.bf16.mxu0 0
    %4164 = vmatpush1.bf16.msra.mxu0 %v4156
    %4165 = vmatprep.subr.bf16.mxu0 0
    %4166 = vmatpush1.bf16.msra.mxu0 %v4157
    %4167 = vmatprep.subr.bf16.mxu0 0
    %4168 = vmatpush1.bf16.msra.mxu0 0
    %4169 = vmatprep.subr.bf16.mxu0 0
    %4170 = vmatpush1.bf16.msra.mxu0 0
    %4171 = vmatprep.subr.bf16.mxu0 0
    %4172 = vmatpush1.bf16.msra.mxu0 0
    %4173 = vmatprep.subr.bf16.mxu0 0
    %4174 = vmatpush1.bf16.msra.mxu0 0
    %4175 = vmatprep.subr.bf16.mxu0 0
    %4176 = vmatpush1.bf16.msra.mxu0 0
    %4177 = vmatprep.subr.bf16.mxu0 0
    %4178 = vmatpush1.bf16.msra.mxu0 0
    %4179 = vmatprep.subr.bf16.mxu0 0
    %4180 = vmatpush1.bf16.msra.mxu0 0
    %4181 = vmatprep.subr.bf16.mxu0 0
    %4182 = vmatpush1.bf16.msra.mxu0 0
    %4183 = vmatprep.subr.bf16.mxu0 0
    %4184 = vmatpush1.bf16.msra.mxu0 0
    %4185 = vmatprep.subr.bf16.mxu0 0
    %4186 = vmatpush1.bf16.msra.mxu0 0
    %4187 = vmatprep.subr.bf16.mxu0 0
    %4188 = vmatpush1.bf16.msra.mxu0 0
    %4189 = vmatprep.subr.bf16.mxu0 0
    %4190 = vmatpush1.bf16.msra.mxu0 0
    %4191 = vmatprep.subr.bf16.mxu0 0
    %4192 = vmatpush1.bf16.msra.mxu0 0
    %4193 = vmatprep.subr.bf16.mxu0 0
    %4194 = vmatpush1.bf16.msra.mxu0 0
    %4195 = vmatprep.mubr.bf16.mxu0 0
    %4196 = vmatmul.mubr.bf16.gmra.mrb[0].mxu0 %v4161
    %v4197 = vpop.f32.mrb[0].mxu0
    %v4198 = vadd.f32 %v4147, %v4197
    %v4199 = vpop.f32.mrb[0].mxu0
    %v4200 = vpop.f32.mrb[0].mxu0
    %v4201 = vadd.f32 %v4147, %v4200
    %v4202 = vpop.f32.mrb[0].mxu0
    %4203 = vdwg.mxu0
    %v4204 = vadd.f32 %v4068, %v4198
    %v4205 = vadd.f32 %v4069, %v4201
    %v4206 = vsel %vm67, %v4204, 0.0
    %4207 = vadd.xlane.f32.xlu0 %v4206
    %v4208 = vpop.xlane.xlu0 %4207
    %v4209 = vsel %vm67, %v4205, 0.0
    %4210 = vadd.xlane.f32.xlu0 %v4209
    %v4211 = vpop.xlane.xlu0 %4210
    %v4212 = vmul.f32 %v4208, %v1937
    %v4213 = vmul.f32 %v4211, %v1937
    %v4214 = vsub.f32 %v4204, %v4212
    %v4215 = vsub.f32 %v4205, %v4213
    %v4216 = vmul.f32 %v4214, %v4214
    %v4217 = vmul.f32 %v4215, %v4215
    %v4218 = vsel %vm67, %v4216, 0.0
    %4219 = vadd.xlane.f32.xlu0 %v4218
    %v4220 = vpop.xlane.xlu0 %4219
    %v4221 = vsel %vm67, %v4217, 0.0
    %4222 = vadd.xlane.f32.xlu0 %v4221
    %v4223 = vpop.xlane.xlu0 %4222
    %v4224 = vmul.f32 %v4220, %v1937
    %v4225 = vmul.f32 %v4223, %v1937
    %v4226 = vadd.f32 %v4224, 1e-05
    %v4227 = vadd.f32 %v4225, 1e-05
    %v4228 = vrsqrt.pop %v4226
    %v4229 = vrsqrt.pop %v4227
    %v4230 = vmul.f32 %v4214, %v4228
    %v4231 = vmul.f32 %v4215, %v4229
    %v4232 = vlaneseq
    %v4233 = vshrl.u32 %v4232, 7
    %v4234 = vsub.s32 5, %v4233
    %v4235 = vrot.slane %v2143, %v4234
    %v4236 = vmul.f32 %v4230, %v4235
    %v4237 = vmul.f32 %v4231, %v4235
    %v4238 = vlaneseq
    %v4239 = vshrl.u32 %v4238, 7
    %v4240 = vsub.s32 6, %v4239
    %v4241 = vrot.slane %v2143, %v4240
    %v4242 = vadd.f32 %v4236, %v4241
    %v4243 = vadd.f32 %v4237, %v4241
    %v4244 = vsel %vm67, %v4242, 0.0
    %v4245 = vrot.slane %v4244, 4
    %v4246 = vadd.f32 %v4244, %v4245
    %v4247 = vrot.slane %v4246, 2
    %v4248 = vadd.f32 %v4246, %v4247
    %v4249 = vrot.slane %v4248, 1
    %v4250 = vadd.f32 %v4248, %v4249
    %v4251 = vsel %vm67, %v4243, 0.0
    %v4252 = vrot.slane %v4251, 4
    %v4253 = vadd.f32 %v4251, %v4252
    %v4254 = vrot.slane %v4253, 2
    %v4255 = vadd.f32 %v4253, %v4254
    %v4256 = vrot.slane %v4255, 1
    %v4257 = vadd.f32 %v4255, %v4256
    %v4258 = vld [vmem:[%s8] sm:$0xff]
    %v4259 = vpack.c.bf16 %v4250, %v4250
    %v4260 = vpack.c.bf16 %v4257, %v4257
    %v4261 = vld [vmem:[%s7] sm:$0xf]
    %v4262 = vld [vmem:[%s7 + $0x4] sm:$0xf]
    %v4263 = vld [vmem:[%s7 + $0x8] sm:$0xf]
    %v4264 = vld [vmem:[%s7 + $0xc] sm:$0xf]
    %v4265 = vlaneseq
    %v4266 = vshrl.u32 %v4265, 7
    %v4267 = vsub.s32 0, %v4266
    %v4268 = vrot.slane %v4258, %v4267
    %v4271 = vunpack.c.l.b16 %v4259
    %v4272 = vunpack.c.l.b16 %v4260
    %vm4273 = vcmask 1041409
    %v4274 = vsel %vm4273, %v4272, %v4271
    %v4275 = vpack.c.b16 %v4274, %v4274
    %v4280 = vunpack.c.l.b16 %v4261
    %v4281 = vunpack.c.l.b16 %v4262
    %v4282 = vunpack.c.l.b16 %v4263
    %v4283 = vunpack.c.l.b16 %v4264
    %v4284 = vpack.c.b16 %v4281, %v4280
    %v4285 = vpack.c.b16 %v4283, %v4282
    %v4289 = vsel %vm67, %v4275, 0
    %4291 = vmatprep.subr.bf16.mxu0 0
    %4292 = vmatpush1.bf16.msra.mxu0 %v4284
    %4293 = vmatprep.subr.bf16.mxu0 0
    %4294 = vmatpush1.bf16.msra.mxu0 %v4285
    %4295 = vmatprep.subr.bf16.mxu0 0
    %4296 = vmatpush1.bf16.msra.mxu0 0
    %4297 = vmatprep.subr.bf16.mxu0 0
    %4298 = vmatpush1.bf16.msra.mxu0 0
    %4299 = vmatprep.subr.bf16.mxu0 0
    %4300 = vmatpush1.bf16.msra.mxu0 0
    %4301 = vmatprep.subr.bf16.mxu0 0
    %4302 = vmatpush1.bf16.msra.mxu0 0
    %4303 = vmatprep.subr.bf16.mxu0 0
    %4304 = vmatpush1.bf16.msra.mxu0 0
    %4305 = vmatprep.subr.bf16.mxu0 0
    %4306 = vmatpush1.bf16.msra.mxu0 0
    %4307 = vmatprep.subr.bf16.mxu0 0
    %4308 = vmatpush1.bf16.msra.mxu0 0
    %4309 = vmatprep.subr.bf16.mxu0 0
    %4310 = vmatpush1.bf16.msra.mxu0 0
    %4311 = vmatprep.subr.bf16.mxu0 0
    %4312 = vmatpush1.bf16.msra.mxu0 0
    %4313 = vmatprep.subr.bf16.mxu0 0
    %4314 = vmatpush1.bf16.msra.mxu0 0
    %4315 = vmatprep.subr.bf16.mxu0 0
    %4316 = vmatpush1.bf16.msra.mxu0 0
    %4317 = vmatprep.subr.bf16.mxu0 0
    %4318 = vmatpush1.bf16.msra.mxu0 0
    %4319 = vmatprep.subr.bf16.mxu0 0
    %4320 = vmatpush1.bf16.msra.mxu0 0
    %4321 = vmatprep.subr.bf16.mxu0 0
    %4322 = vmatpush1.bf16.msra.mxu0 0
    %4323 = vmatprep.mubr.bf16.mxu0 0
    %4324 = vmatmul.mubr.bf16.gmra.mrb[0].mxu0 %v4289
    %v4325 = vpop.f32.mrb[0].mxu0
    %v4326 = vadd.f32 %v4268, %v4325
    %v4327 = vpop.f32.mrb[0].mxu0
    %v4328 = vpop.f32.mrb[0].mxu0
    %v4329 = vpop.f32.mrb[0].mxu0
    %4330 = vdwg.mxu0
    %v4331 = vmax.f32 %v4326, 0.0
    %vm4332 = vcmask 254976
    %v4333 = vsel %vm4332, %v4331, 0.0
    %4334 = vadd.xlane.f32.xlu0 %v4333
    %v4335 = vpop.xlane.xlu0 %4334
    %v4336 = vmul.f32 %v4335, %v1937
    %v4337 = vsub.f32 %v4331, %v4336
    %v4338 = vmul.f32 %v4337, %v4337
    %v4339 = vsel %vm4332, %v4338, 0.0
    %4340 = vadd.xlane.f32.xlu0 %v4339
    %v4341 = vpop.xlane.xlu0 %4340
    %v4342 = vmul.f32 %v4341, %v1937
    %v4343 = vadd.f32 %v4342, 1e-05
    %v4344 = vrsqrt.pop %v4343
    %v4345 = vmul.f32 %v4337, %v4344
    %v4346 = vlaneseq
    %v4347 = vshrl.u32 %v4346, 7
    %v4348 = vsub.s32 1, %v4347
    %v4349 = vrot.slane %v4258, %v4348
    %v4350 = vmul.f32 %v4345, %v4349
    %v4351 = vlaneseq
    %v4352 = vshrl.u32 %v4351, 7
    %v4353 = vsub.s32 2, %v4352
    %v4354 = vrot.slane %v4258, %v4353
    %v4355 = vadd.f32 %v4350, %v4354
    %v4356 = vpack.c.bf16 %v4355, %v4355
    %v4357 = vld [vmem:[%s9] sm:$0xf]
    %v4358 = vld [vmem:[%s9 + $0x4] sm:$0xf]
    %v4359 = vld [vmem:[%s9 + $0x8] sm:$0xf]
    %v4360 = vld [vmem:[%s9 + $0xc] sm:$0xf]
    %v4361 = vld [vmem:[%s10] sm:$0x1]
    %v4363 = vlaneseq
    %v4364 = vshrl.u32 %v4363, 7
    %v4365 = vsub.s32 0, %v4364
    %v4366 = vrot.slane %v4361, %v4365
    %v4372 = vunpack.c.l.b16 %v4357
    %v4373 = vunpack.c.l.b16 %v4358
    %v4374 = vunpack.c.l.b16 %v4359
    %v4375 = vunpack.c.l.b16 %v4360
    %v4376 = vpack.c.b16 %v4373, %v4372
    %v4377 = vpack.c.b16 %v4375, %v4374
    %v4381 = vsel %vm67, %v4356, 0
    %4383 = vmatprep.subr.bf16.mxu0 0
    %4384 = vmatpush1.bf16.msra.mxu0 %v4376
    %4385 = vmatprep.subr.bf16.mxu0 0
    %4386 = vmatpush1.bf16.msra.mxu0 %v4377
    %4387 = vmatprep.subr.bf16.mxu0 0
    %4388 = vmatpush1.bf16.msra.mxu0 0
    %4389 = vmatprep.subr.bf16.mxu0 0
    %4390 = vmatpush1.bf16.msra.mxu0 0
    %4391 = vmatprep.subr.bf16.mxu0 0
    %4392 = vmatpush1.bf16.msra.mxu0 0
    %4393 = vmatprep.subr.bf16.mxu0 0
    %4394 = vmatpush1.bf16.msra.mxu0 0
    %4395 = vmatprep.subr.bf16.mxu0 0
    %4396 = vmatpush1.bf16.msra.mxu0 0
    %4397 = vmatprep.subr.bf16.mxu0 0
    %4398 = vmatpush1.bf16.msra.mxu0 0
    %4399 = vmatprep.subr.bf16.mxu0 0
    %4400 = vmatpush1.bf16.msra.mxu0 0
    %4401 = vmatprep.subr.bf16.mxu0 0
    %4402 = vmatpush1.bf16.msra.mxu0 0
    %4403 = vmatprep.subr.bf16.mxu0 0
    %4404 = vmatpush1.bf16.msra.mxu0 0
    %4405 = vmatprep.subr.bf16.mxu0 0
    %4406 = vmatpush1.bf16.msra.mxu0 0
    %4407 = vmatprep.subr.bf16.mxu0 0
    %4408 = vmatpush1.bf16.msra.mxu0 0
    %4409 = vmatprep.subr.bf16.mxu0 0
    %4410 = vmatpush1.bf16.msra.mxu0 0
    %4411 = vmatprep.subr.bf16.mxu0 0
    %4412 = vmatpush1.bf16.msra.mxu0 0
    %4413 = vmatprep.subr.bf16.mxu0 0
    %4414 = vmatpush1.bf16.msra.mxu0 0
    %4415 = vmatprep.mubr.bf16.mxu0 0
    %4416 = vmatmul.mubr.bf16.gmra.mrb[0].mxu0 %v4381
    %v4417 = vpop.f32.mrb[0].mxu0
    %v4418 = vadd.f32 %v4366, %v4417
    %v4419 = vpop.f32.mrb[0].mxu0
    %v4420 = vpop.f32.mrb[0].mxu0
    %v4421 = vpop.f32.mrb[0].mxu0
    %4422 = vdwg.mxu0
    %4423 = vst [vmem:[#allocation2] sm:$0x3] %v4418
    // Predicated region
    $region46: #{tpu_custom_call.1} parent=1 // pred_check
      _
    $region47: #{tpu_custom_call.1} parent=1 // pred_check_branch
      %4425 = sbr.rel (0) target = $region49
    $region48: #{tpu_custom_call.1} parent=1 // pred_region
      %s4427 = ssub.s32 32, 32
      %4428 = vsyncadd [#allocation3], %s4427
      %s4430 = sshll.u32 [#allocation2], 4
      %s4431 = int_to_ptr.vmem [resolvable:$true] %s4430
      %4433 = dma.vmem_to_hbm [thread:$0]  %s4431, 32, %s11, [#allocation3]
    $region49: #{tpu_custom_call.1} parent=1 // pred_fallthru
      _
    // Predicated region
    $region50: #{tpu_custom_call.1} parent=1 // pred_check
      _
    $region51: #{tpu_custom_call.1} parent=1 // pred_check_branch
      %4435 = sbr.rel (0) target = $region53
    $region52: #{tpu_custom_call.1} parent=1 // pred_region
      %4436 = dma.done [#allocation3], 32
    $region53: #{tpu_custom_call.1} parent=1 // pred_fallthru
      _
    %4437 = vsyncpa [#allocation3], 1

</llo_original>
